<compile_context>
chip_gen: v5e
topology: v5e:2x2
jax: 0.10.0
libtpu: 0.0.40
codegen_flags: <defaults>
</compile_context>

<pallas_src>
import functools

import jax
import jax.numpy as jnp
from jax import lax
from jax.experimental import pallas as pl
from jax.experimental.pallas import tpu as pltpu


def _round_up(x, m):
    return ((x + m - 1) // m) * m


def _td_conv_kernel(a_ref, b_ref, w_ref, bias_ref, o_ref, patches_ref):
    """Conv3d(k=3, stride=2, pad=1) for DB output depth slices per grid step.

    a_ref      : (1, DB, 2, Ho+1, 2, Wo+1, 2*Cin)  super-depths [DB*d, DB*d+DB), both D-parities
    b_ref      : (1, 1, 1, Ho+1, 2, Wo+1, 2*Cin)   super-depth DB*(d+1), D-parity 0 (depth halo)
    w_ref      : (9*Gpad, Cpad)                    tap-group-major weights (zero rows in the pad)
    bias_ref   : (1, Cpad)                         f32 bias, zero-padded to 128 lanes
    o_ref      : (1, DB, Ho*Wo, Cpad)              lane-dense output block (compute_dtype)
    patches_ref: (NSLOT, Mc, 9*Gpad)               ping-pong im2col scratch (VMEM)
    """
    _, db, _, hop1, _, wop1, c2 = a_ref.shape
    cin = c2 // 2
    ho, wo = hop1 - 1, wop1 - 1
    nslot, mc, kpad = patches_ref.shape
    gpad = kpad // 9
    hc = mc // wo              # output heights per chunk
    nhc = ho // hc             # H-chunks per depth slice
    zw = gpad - 3 * cin        # zero-fill columns per (kd, kh) tap group

    bvec = bias_ref[...]       # (1, Cpad) f32
    zfill = jnp.zeros((mc, zw), patches_ref.dtype) if zw > 0 else None

    chunk = 0
    for ld in range(db):                       # local output depth slice
        for hcix in range(nhc):                # H-chunk within the slice
            slot = chunk % nslot
            h0 = hcix * hc
            # ---- build this chunk's (Mc, Kpad) im2col slab: 9 aligned full-width stores ----
            for kd in range(3):
                if kd < 2:
                    src, ds, dp = a_ref, ld, kd          # padded depth 2*do + kd
                elif ld + 1 < db:
                    src, ds, dp = a_ref, ld + 1, 0       # next slice's parity-0 plane
                else:
                    src, ds, dp = b_ref, 0, 0            # depth halo block
                for kh in range(3):
                    g = 3 * kd + kh
                    hs0 = h0 + (kh // 2)                 # H super-index start (2h+kh = 2(h+kh//2)+kh%2)
                    hp = kh % 2                          # H parity
                    # taps kw=0,1: packed (w-parity, channel) pairs at super-col w
                    a01 = src[0, ds, dp, hs0:hs0 + hc, hp, 0:wo, :].reshape(mc, 2 * cin)
                    # tap  kw=2 : channel slice at super-col w+1, parity 0
                    a2 = src[0, ds, dp, hs0:hs0 + hc, hp, 1:wo + 1, 0:cin].reshape(mc, cin)
                    pieces = [a01, a2] if zfill is None else [a01, a2, zfill]
                    patches_ref[slot, :, g * gpad:(g + 1) * gpad] = jnp.concatenate(
                        pieces, axis=-1)
            # ---- one big-K MXU matmul for the chunk; overlaps with the next chunk's build ----
            acc = jnp.dot(patches_ref[slot], w_ref[...],
                          preferred_element_type=jnp.float32)
            acc = acc + bvec
            o_ref[0, ld, h0 * wo:h0 * wo + mc, :] = acc.astype(o_ref.dtype)
            chunk += 1


def _vmem_budget_bytes(DB, Ho, Wo, Cin, Cpad, M, Mc, Kpad, nslot,
                       compute_dtype, out_dtype):
    """Rough per-step VMEM footprint including 128-lane / 8-sublane padding."""
    cb = jnp.dtype(compute_dtype).itemsize
    ob = jnp.dtype(out_dtype).itemsize
    lane = _round_up(2 * Cin, 128)
    sub = _round_up(Wo + 1, 8)
    a_blk = DB * 2 * (Ho + 1) * sub * lane * cb
    b_blk = (Ho + 1) * sub * lane * cb
    o_blk = DB * _round_up(M, 8) * Cpad * ob
    w_blk = Kpad * Cpad * cb + Cpad * 4
    patches = nslot * _round_up(Mc, 8) * Kpad * cb
    need = 2 * (a_blk + b_blk + o_blk + w_blk) + patches + (1 << 20)
    need = (need * 5) // 4                                  # headroom
    return int(min(max(need, 32 * 1024 * 1024), 64 * 1024 * 1024))


def td_forward(x_ndhwc, weight, bias, *, compute_dtype=jnp.bfloat16,
               out_dtype=jnp.bfloat16, depth_block=2):
    """Forward of TD: Conv3d(Cin, Cout, kernel=3, stride=2, padding=1).

    x_ndhwc : (N, D, H, W, Cin)
    weight  : (Cout, Cin, 3, 3, 3)   (PyTorch Conv3d layout)
    bias    : (Cout,)
    returns : (N, Do, Ho, Wo, Cout) in out_dtype
    """
    N, D, H, W, Cin = x_ndhwc.shape
    Cout, cin_w, kd_, kh_, kw_ = weight.shape
    assert (cin_w, kd_, kh_, kw_) == (Cin, 3, 3, 3), "unexpected weight shape"

    Do = (D - 1) // 2 + 1
    Ho = (H - 1) // 2 + 1
    Wo = (W - 1) // 2 + 1
    M = Ho * Wo
    Cpad = max(128, _round_up(Cout, 128))        # lane-dense output channels
    Gpad = _round_up(3 * Cin, 128)               # 128-aligned per-(kd,kh) column group
    Kpad = 9 * Gpad

    # Depth slices per grid step (halo re-read 1.5x -> 1.25x when DB=2).
    DB = depth_block if (depth_block and depth_block > 0 and Do % depth_block == 0) else 1
    # Chunking for build/matmul overlap: depth slices already give >=2 chunks when DB>1,
    # otherwise split H in two.
    NHC = 1 if DB > 1 else (2 if (Ho >= 2 and Ho % 2 == 0) else 1)
    Hc = Ho // NHC
    Mc = Hc * Wo
    NSLOT = 2 if DB * NHC > 1 else 1

    # Zero halo sized so the (super, parity) reshapes of D/H/W are exact.
    Dp, Hp, Wp = 2 * (Do + 1), 2 * (Ho + 1), 2 * (Wo + 1)
    xp = jnp.pad(x_ndhwc.astype(compute_dtype),
                 ((0, 0), (1, Dp - 1 - D), (1, Hp - 1 - H), (1, Wp - 1 - W), (0, 0)))
    # depth -> (super, parity); H -> (super, parity); (W, Cin) -> (super, parity*Cin + ci)
    xr = xp.reshape(N, Do + 1, 2, Ho + 1, 2, Wo + 1, 2 * Cin)

    # weights (Cout, Cin, kd, kh, kw) -> (kd, kh, kw, Cin, Cout), grouped by (kd,kh),
    # each group zero-padded from 3*Cin to Gpad rows, Cout padded to Cpad lanes.
    w6 = jnp.transpose(weight, (2, 3, 4, 1, 0)).reshape(9, 3 * Cin, Cout)
    w6 = jnp.pad(w6, ((0, 0), (0, Gpad - 3 * Cin), (0, Cpad - Cout)))
    w_mat = w6.reshape(Kpad, Cpad).astype(compute_dtype)
    b_mat = jnp.pad(bias, (0, Cpad - Cout)).reshape(1, Cpad).astype(jnp.float32)

    vmem_limit = _vmem_budget_bytes(DB, Ho, Wo, Cin, Cpad, M, Mc, Kpad, NSLOT,
                                    compute_dtype, out_dtype)

    out = pl.pallas_call(
        _td_conv_kernel,
        out_shape=jax.ShapeDtypeStruct((N, Do, M, Cpad), out_dtype),
        grid_spec=pltpu.PrefetchScalarGridSpec(
            num_scalar_prefetch=0,
            grid=(N, Do // DB),
            in_specs=[
                # DB super-depths (taps kd=0,1 and kd=2 for all but the last local slice)
                pl.BlockSpec((1, DB, 2, Ho + 1, 2, Wo + 1, 2 * Cin),
                             lambda n, d: (n, d, 0, 0, 0, 0, 0)),
                # depth halo: super-depth DB*(d+1), parity 0 (tap kd=2 of the last local slice)
                pl.BlockSpec((1, 1, 1, Ho + 1, 2, Wo + 1, 2 * Cin),
                             lambda n, d, DB=DB: (n, DB * (d + 1), 0, 0, 0, 0, 0)),
                pl.BlockSpec((Kpad, Cpad), lambda n, d: (0, 0)),   # weights (constant)
                pl.BlockSpec((1, Cpad), lambda n, d: (0, 0)),      # bias   (constant)
            ],
            out_specs=pl.BlockSpec((1, DB, M, Cpad), lambda n, d: (n, d, 0, 0)),
            scratch_shapes=[pltpu.VMEM((NSLOT, Mc, Kpad), compute_dtype)],
        ),
        compiler_params=pltpu.CompilerParams(
            dimension_semantics=("parallel", "parallel"),
            vmem_limit_bytes=vmem_limit),
    )(xr, xr, w_mat, b_mat)

    out = out.reshape(N, Do, Ho, Wo, Cpad)[..., :Cout]
    return out


def td_forward_ncdhw(x_ncdhw, weight, bias, *, compute_dtype=jnp.bfloat16,
                     out_dtype=jnp.bfloat16, depth_block=2):
    """PyTorch-convention entry point: NCDHW in, NCDHW out."""
    x_ndhwc = jnp.transpose(x_ncdhw, (0, 2, 3, 4, 1))
    y = td_forward(x_ndhwc, weight, bias, compute_dtype=compute_dtype,
                   out_dtype=out_dtype, depth_block=depth_block)
    return jnp.transpose(y, (0, 4, 1, 2, 3))


if __name__ == "__main__":
    # Shapes consistent with ResUNet (k=16): TD1 = Conv3d(16, 32, 3, stride=2, padding=1).
    N, Cin, Cout = 2, 16, 32
    D = H = W = 16

    key = jax.random.PRNGKey(0)
    kx, kw, kb = jax.random.split(key, 3)

    x_ncdhw = jax.random.normal(kx, (N, Cin, D, H, W), dtype=jnp.float32)

    # Deterministic Conv3d-style init (uniform, PyTorch-like bound).
    fan_in = Cin * 27
    bound = 1.0 / (fan_in ** 0.5)
    weight = jax.random.uniform(kw, (Cout, Cin, 3, 3, 3), dtype=jnp.float32,
                                minval=-bound, maxval=bound)
    bias = jax.random.uniform(kb, (Cout,), dtype=jnp.float32,
                              minval=-bound, maxval=bound)

    # Reference: XLA conv with the same semantics as nn.Conv3d(3, stride=2, padding=1).
    x_ndhwc = jnp.transpose(x_ncdhw, (0, 2, 3, 4, 1))
    ref = lax.conv_general_dilated(
        x_ndhwc, jnp.transpose(weight, (2, 3, 4, 1, 0)),
        window_strides=(2, 2, 2), padding=[(1, 1)] * 3,
        dimension_numbers=("NDHWC", "DHWIO", "NDHWC"),
        precision=lax.Precision.HIGHEST) + bias
    ref = jnp.transpose(ref, (0, 4, 1, 2, 3))

    run = jax.jit(functools.partial(td_forward_ncdhw,
                                    compute_dtype=jnp.bfloat16,
                                    out_dtype=jnp.bfloat16,
                                    depth_block=2))
    y = jax.block_until_ready(run(x_ncdhw, weight, bias))

    assert y.shape == (N, Cout, D // 2, H // 2, W // 2), y.shape
    # bf16 operands / bf16 output, f32 accumulation -> loosened tolerance vs f32 reference.
    y32 = y.astype(jnp.float32)
    assert jnp.allclose(y32, ref, atol=5e-2, rtol=5e-2), "mismatch vs reference conv"

    print("KERNEL_OK")
</pallas_src>

<mosaic_0001>
module attributes {stable_mosaic.version = 11 : i64} {
  func.func @_td_conv_kernel(%arg0: i32, %arg1: i32, %arg2: memref<1x2x2x9x2x9x32xbf16, #tpu.memory_space<vmem>>, %arg3: memref<1x1x1x9x2x9x32xbf16, #tpu.memory_space<vmem>>, %arg4: memref<1152x128xbf16, #tpu.memory_space<vmem>>, %arg5: memref<1x128xf32, #tpu.memory_space<vmem>>, %arg6: memref<1x2x64x128xbf16, #tpu.memory_space<vmem>>, %arg7: memref<2x64x1152xbf16, #tpu.memory_space<vmem>>) attributes {dimension_semantics = [#tpu.dimension_semantics<parallel>, #tpu.dimension_semantics<parallel>], iteration_bounds = array<i64: 2, 4>, scalar_prefetch = 0 : i64, scratch_operands = 1 : i64, tpu.core_type = #tpu.core_type<tc>, window_params = [{transform_indices = @transform_0, window_bounds = array<i64: 1, 2, 2, 9, 2, 9, 32>}, {transform_indices = @transform_1, window_bounds = array<i64: 1, 1, 1, 9, 2, 9, 32>}, {pipeline_mode = #tpu.pipeline_mode<synchronous>, transform_indices = @transform_2, window_bounds = array<i64: 1152, 128>}, {pipeline_mode = #tpu.pipeline_mode<synchronous>, transform_indices = @transform_3, window_bounds = array<i64: 1, 128>}, {transform_indices = @transform_4, window_bounds = array<i64: 1, 2, 64, 128>}]} {
    %c0 = arith.constant 0 : index
    %c0_0 = arith.constant 0 : index
    %0 = vector.load %arg5[%c0, %c0_0] : memref<1x128xf32, #tpu.memory_space<vmem>>, vector<1x128xf32>
    %cst = arith.constant 0.000000e+00 : bf16
    %1 = vector.broadcast %cst : bf16 to vector<64x80xbf16>
    %c0_1 = arith.constant 0 : index
    %c0_2 = arith.constant 0 : index
    %c0_3 = arith.constant 0 : index
    %c0_4 = arith.constant 0 : index
    %c0_5 = arith.constant 0 : index
    %c0_6 = arith.constant 0 : index
    %c0_7 = arith.constant 0 : index
    %2 = vector.load %arg2[%c0_1, %c0_2, %c0_3, %c0_4, %c0_5, %c0_6, %c0_7] : memref<1x2x2x9x2x9x32xbf16, #tpu.memory_space<vmem>>, vector<1x1x1x8x1x8x32xbf16>
    %3 = vector.shape_cast %2 : vector<1x1x1x8x1x8x32xbf16> to vector<8x8x32xbf16>
    %4 = vector.shape_cast %3 : vector<8x8x32xbf16> to vector<64x32xbf16>
    %c0_8 = arith.constant 0 : index
    %c0_9 = arith.constant 0 : index
    %c0_10 = arith.constant 0 : index
    %c0_11 = arith.constant 0 : index
    %c0_12 = arith.constant 0 : index
    %c1 = arith.constant 1 : index
    %c0_13 = arith.constant 0 : index
    %5 = vector.load %arg2[%c0_8, %c0_9, %c0_10, %c0_11, %c0_12, %c1, %c0_13] : memref<1x2x2x9x2x9x32xbf16, #tpu.memory_space<vmem>>, vector<1x1x1x8x1x8x16xbf16>
    %6 = vector.shape_cast %5 : vector<1x1x1x8x1x8x16xbf16> to vector<8x8x16xbf16>
    %7 = vector.shape_cast %6 : vector<8x8x16xbf16> to vector<64x16xbf16>
    %8 = tpu.concatenate %4, %7, %1 in 1 : vector<64x32xbf16>, vector<64x16xbf16>, vector<64x80xbf16> -> vector<64x128xbf16>
    %c0_14 = arith.constant 0 : index
    %c0_15 = arith.constant 0 : index
    %c0_16 = arith.constant 0 : index
    %9 = vector.load %arg7[%c0_14, %c0_15, %c0_16] : memref<2x64x1152xbf16, #tpu.memory_space<vmem>>, vector<1x64x128xbf16>
    %10 = vector.shape_cast %9 : vector<1x64x128xbf16> to vector<64x128xbf16>
    %11 = vector.shape_cast %8 : vector<64x128xbf16> to vector<1x64x128xbf16>
    tpu.vector_store %arg7[%c0_14, %c0_15, %c0_16], %11 {strides = array<i32>} : memref<2x64x1152xbf16, #tpu.memory_space<vmem>>, vector<1x64x128xbf16>,
    %c0_17 = arith.constant 0 : index
    %c0_18 = arith.constant 0 : index
    %c0_19 = arith.constant 0 : index
    %c0_20 = arith.constant 0 : index
    %c1_21 = arith.constant 1 : index
    %c0_22 = arith.constant 0 : index
    %c0_23 = arith.constant 0 : index
    %12 = vector.load %arg2[%c0_17, %c0_18, %c0_19, %c0_20, %c1_21, %c0_22, %c0_23] : memref<1x2x2x9x2x9x32xbf16, #tpu.memory_space<vmem>>, vector<1x1x1x8x1x8x32xbf16>
    %13 = vector.shape_cast %12 : vector<1x1x1x8x1x8x32xbf16> to vector<8x8x32xbf16>
    %14 = vector.shape_cast %13 : vector<8x8x32xbf16> to vector<64x32xbf16>
    %c0_24 = arith.constant 0 : index
    %c0_25 = arith.constant 0 : index
    %c0_26 = arith.constant 0 : index
    %c0_27 = arith.constant 0 : index
    %c1_28 = arith.constant 1 : index
    %c1_29 = arith.constant 1 : index
    %c0_30 = arith.constant 0 : index
    %15 = vector.load %arg2[%c0_24, %c0_25, %c0_26, %c0_27, %c1_28, %c1_29, %c0_30] : memref<1x2x2x9x2x9x32xbf16, #tpu.memory_space<vmem>>, vector<1x1x1x8x1x8x16xbf16>
    %16 = vector.shape_cast %15 : vector<1x1x1x8x1x8x16xbf16> to vector<8x8x16xbf16>
    %17 = vector.shape_cast %16 : vector<8x8x16xbf16> to vector<64x16xbf16>
    %18 = tpu.concatenate %14, %17, %1 in 1 : vector<64x32xbf16>, vector<64x16xbf16>, vector<64x80xbf16> -> vector<64x128xbf16>
    %c0_31 = arith.constant 0 : index
    %c0_32 = arith.constant 0 : index
    %c128 = arith.constant 128 : index
    %19 = vector.load %arg7[%c0_31, %c0_32, %c128] : memref<2x64x1152xbf16, #tpu.memory_space<vmem>>, vector<1x64x128xbf16>
    %20 = vector.shape_cast %19 : vector<1x64x128xbf16> to vector<64x128xbf16>
    %21 = vector.shape_cast %18 : vector<64x128xbf16> to vector<1x64x128xbf16>
    tpu.vector_store %arg7[%c0_31, %c0_32, %c128], %21 {strides = array<i32>} : memref<2x64x1152xbf16, #tpu.memory_space<vmem>>, vector<1x64x128xbf16>,
    %c0_33 = arith.constant 0 : index
    %c0_34 = arith.constant 0 : index
    %c0_35 = arith.constant 0 : index
    %c1_36 = arith.constant 1 : index
    %c0_37 = arith.constant 0 : index
    %c0_38 = arith.constant 0 : index
    %c0_39 = arith.constant 0 : index
    %22 = vector.load %arg2[%c0_33, %c0_34, %c0_35, %c1_36, %c0_37, %c0_38, %c0_39] : memref<1x2x2x9x2x9x32xbf16, #tpu.memory_space<vmem>>, vector<1x1x1x8x1x8x32xbf16>
    %23 = vector.shape_cast %22 : vector<1x1x1x8x1x8x32xbf16> to vector<8x8x32xbf16>
    %24 = vector.shape_cast %23 : vector<8x8x32xbf16> to vector<64x32xbf16>
    %c0_40 = arith.constant 0 : index
    %c0_41 = arith.constant 0 : index
    %c0_42 = arith.constant 0 : index
    %c1_43 = arith.constant 1 : index
    %c0_44 = arith.constant 0 : index
    %c1_45 = arith.constant 1 : index
    %c0_46 = arith.constant 0 : index
    %25 = vector.load %arg2[%c0_40, %c0_41, %c0_42, %c1_43, %c0_44, %c1_45, %c0_46] : memref<1x2x2x9x2x9x32xbf16, #tpu.memory_space<vmem>>, vector<1x1x1x8x1x8x16xbf16>
    %26 = vector.shape_cast %25 : vector<1x1x1x8x1x8x16xbf16> to vector<8x8x16xbf16>
    %27 = vector.shape_cast %26 : vector<8x8x16xbf16> to vector<64x16xbf16>
    %28 = tpu.concatenate %24, %27, %1 in 1 : vector<64x32xbf16>, vector<64x16xbf16>, vector<64x80xbf16> -> vector<64x128xbf16>
    %c0_47 = arith.constant 0 : index
    %c0_48 = arith.constant 0 : index
    %c256 = arith.constant 256 : index
    %29 = vector.load %arg7[%c0_47, %c0_48, %c256] : memref<2x64x1152xbf16, #tpu.memory_space<vmem>>, vector<1x64x128xbf16>
    %30 = vector.shape_cast %29 : vector<1x64x128xbf16> to vector<64x128xbf16>
    %31 = vector.shape_cast %28 : vector<64x128xbf16> to vector<1x64x128xbf16>
    tpu.vector_store %arg7[%c0_47, %c0_48, %c256], %31 {strides = array<i32>} : memref<2x64x1152xbf16, #tpu.memory_space<vmem>>, vector<1x64x128xbf16>,
    %c0_49 = arith.constant 0 : index
    %c0_50 = arith.constant 0 : index
    %c1_51 = arith.constant 1 : index
    %c0_52 = arith.constant 0 : index
    %c0_53 = arith.constant 0 : index
    %c0_54 = arith.constant 0 : index
    %c0_55 = arith.constant 0 : index
    %32 = vector.load %arg2[%c0_49, %c0_50, %c1_51, %c0_52, %c0_53, %c0_54, %c0_55] : memref<1x2x2x9x2x9x32xbf16, #tpu.memory_space<vmem>>, vector<1x1x1x8x1x8x32xbf16>
    %33 = vector.shape_cast %32 : vector<1x1x1x8x1x8x32xbf16> to vector<8x8x32xbf16>
    %34 = vector.shape_cast %33 : vector<8x8x32xbf16> to vector<64x32xbf16>
    %c0_56 = arith.constant 0 : index
    %c0_57 = arith.constant 0 : index
    %c1_58 = arith.constant 1 : index
    %c0_59 = arith.constant 0 : index
    %c0_60 = arith.constant 0 : index
    %c1_61 = arith.constant 1 : index
    %c0_62 = arith.constant 0 : index
    %35 = vector.load %arg2[%c0_56, %c0_57, %c1_58, %c0_59, %c0_60, %c1_61, %c0_62] : memref<1x2x2x9x2x9x32xbf16, #tpu.memory_space<vmem>>, vector<1x1x1x8x1x8x16xbf16>
    %36 = vector.shape_cast %35 : vector<1x1x1x8x1x8x16xbf16> to vector<8x8x16xbf16>
    %37 = vector.shape_cast %36 : vector<8x8x16xbf16> to vector<64x16xbf16>
    %38 = tpu.concatenate %34, %37, %1 in 1 : vector<64x32xbf16>, vector<64x16xbf16>, vector<64x80xbf16> -> vector<64x128xbf16>
    %c0_63 = arith.constant 0 : index
    %c0_64 = arith.constant 0 : index
    %c384 = arith.constant 384 : index
    %39 = vector.load %arg7[%c0_63, %c0_64, %c384] : memref<2x64x1152xbf16, #tpu.memory_space<vmem>>, vector<1x64x128xbf16>
    %40 = vector.shape_cast %39 : vector<1x64x128xbf16> to vector<64x128xbf16>
    %41 = vector.shape_cast %38 : vector<64x128xbf16> to vector<1x64x128xbf16>
    tpu.vector_store %arg7[%c0_63, %c0_64, %c384], %41 {strides = array<i32>} : memref<2x64x1152xbf16, #tpu.memory_space<vmem>>, vector<1x64x128xbf16>,
    %c0_65 = arith.constant 0 : index
    %c0_66 = arith.constant 0 : index
    %c1_67 = arith.constant 1 : index
    %c0_68 = arith.constant 0 : index
    %c1_69 = arith.constant 1 : index
    %c0_70 = arith.constant 0 : index
    %c0_71 = arith.constant 0 : index
    %42 = vector.load %arg2[%c0_65, %c0_66, %c1_67, %c0_68, %c1_69, %c0_70, %c0_71] : memref<1x2x2x9x2x9x32xbf16, #tpu.memory_space<vmem>>, vector<1x1x1x8x1x8x32xbf16>
    %43 = vector.shape_cast %42 : vector<1x1x1x8x1x8x32xbf16> to vector<8x8x32xbf16>
    %44 = vector.shape_cast %43 : vector<8x8x32xbf16> to vector<64x32xbf16>
    %c0_72 = arith.constant 0 : index
    %c0_73 = arith.constant 0 : index
    %c1_74 = arith.constant 1 : index
    %c0_75 = arith.constant 0 : index
    %c1_76 = arith.constant 1 : index
    %c1_77 = arith.constant 1 : index
    %c0_78 = arith.constant 0 : index
    %45 = vector.load %arg2[%c0_72, %c0_73, %c1_74, %c0_75, %c1_76, %c1_77, %c0_78] : memref<1x2x2x9x2x9x32xbf16, #tpu.memory_space<vmem>>, vector<1x1x1x8x1x8x16xbf16>
    %46 = vector.shape_cast %45 : vector<1x1x1x8x1x8x16xbf16> to vector<8x8x16xbf16>
    %47 = vector.shape_cast %46 : vector<8x8x16xbf16> to vector<64x16xbf16>
    %48 = tpu.concatenate %44, %47, %1 in 1 : vector<64x32xbf16>, vector<64x16xbf16>, vector<64x80xbf16> -> vector<64x128xbf16>
    %c0_79 = arith.constant 0 : index
    %c0_80 = arith.constant 0 : index
    %c512 = arith.constant 512 : index
    %49 = vector.load %arg7[%c0_79, %c0_80, %c512] : memref<2x64x1152xbf16, #tpu.memory_space<vmem>>, vector<1x64x128xbf16>
    %50 = vector.shape_cast %49 : vector<1x64x128xbf16> to vector<64x128xbf16>
    %51 = vector.shape_cast %48 : vector<64x128xbf16> to vector<1x64x128xbf16>
    tpu.vector_store %arg7[%c0_79, %c0_80, %c512], %51 {strides = array<i32>} : memref<2x64x1152xbf16, #tpu.memory_space<vmem>>, vector<1x64x128xbf16>,
    %c0_81 = arith.constant 0 : index
    %c0_82 = arith.constant 0 : index
    %c1_83 = arith.constant 1 : index
    %c1_84 = arith.constant 1 : index
    %c0_85 = arith.constant 0 : index
    %c0_86 = arith.constant 0 : index
    %c0_87 = arith.constant 0 : index
    %52 = vector.load %arg2[%c0_81, %c0_82, %c1_83, %c1_84, %c0_85, %c0_86, %c0_87] : memref<1x2x2x9x2x9x32xbf16, #tpu.memory_space<vmem>>, vector<1x1x1x8x1x8x32xbf16>
    %53 = vector.shape_cast %52 : vector<1x1x1x8x1x8x32xbf16> to vector<8x8x32xbf16>
    %54 = vector.shape_cast %53 : vector<8x8x32xbf16> to vector<64x32xbf16>
    %c0_88 = arith.constant 0 : index
    %c0_89 = arith.constant 0 : index
    %c1_90 = arith.constant 1 : index
    %c1_91 = arith.constant 1 : index
    %c0_92 = arith.constant 0 : index
    %c1_93 = arith.constant 1 : index
    %c0_94 = arith.constant 0 : index
    %55 = vector.load %arg2[%c0_88, %c0_89, %c1_90, %c1_91, %c0_92, %c1_93, %c0_94] : memref<1x2x2x9x2x9x32xbf16, #tpu.memory_space<vmem>>, vector<1x1x1x8x1x8x16xbf16>
    %56 = vector.shape_cast %55 : vector<1x1x1x8x1x8x16xbf16> to vector<8x8x16xbf16>
    %57 = vector.shape_cast %56 : vector<8x8x16xbf16> to vector<64x16xbf16>
    %58 = tpu.concatenate %54, %57, %1 in 1 : vector<64x32xbf16>, vector<64x16xbf16>, vector<64x80xbf16> -> vector<64x128xbf16>
    %c0_95 = arith.constant 0 : index
    %c0_96 = arith.constant 0 : index
    %c640 = arith.constant 640 : index
    %59 = vector.load %arg7[%c0_95, %c0_96, %c640] : memref<2x64x1152xbf16, #tpu.memory_space<vmem>>, vector<1x64x128xbf16>
    %60 = vector.shape_cast %59 : vector<1x64x128xbf16> to vector<64x128xbf16>
    %61 = vector.shape_cast %58 : vector<64x128xbf16> to vector<1x64x128xbf16>
    tpu.vector_store %arg7[%c0_95, %c0_96, %c640], %61 {strides = array<i32>} : memref<2x64x1152xbf16, #tpu.memory_space<vmem>>, vector<1x64x128xbf16>,
    %c0_97 = arith.constant 0 : index
    %c1_98 = arith.constant 1 : index
    %c0_99 = arith.constant 0 : index
    %c0_100 = arith.constant 0 : index
    %c0_101 = arith.constant 0 : index
    %c0_102 = arith.constant 0 : index
    %c0_103 = arith.constant 0 : index
    %62 = vector.load %arg2[%c0_97, %c1_98, %c0_99, %c0_100, %c0_101, %c0_102, %c0_103] : memref<1x2x2x9x2x9x32xbf16, #tpu.memory_space<vmem>>, vector<1x1x1x8x1x8x32xbf16>
    %63 = vector.shape_cast %62 : vector<1x1x1x8x1x8x32xbf16> to vector<8x8x32xbf16>
    %64 = vector.shape_cast %63 : vector<8x8x32xbf16> to vector<64x32xbf16>
    %c0_104 = arith.constant 0 : index
    %c1_105 = arith.constant 1 : index
    %c0_106 = arith.constant 0 : index
    %c0_107 = arith.constant 0 : index
    %c0_108 = arith.constant 0 : index
    %c1_109 = arith.constant 1 : index
    %c0_110 = arith.constant 0 : index
    %65 = vector.load %arg2[%c0_104, %c1_105, %c0_106, %c0_107, %c0_108, %c1_109, %c0_110] : memref<1x2x2x9x2x9x32xbf16, #tpu.memory_space<vmem>>, vector<1x1x1x8x1x8x16xbf16>
    %66 = vector.shape_cast %65 : vector<1x1x1x8x1x8x16xbf16> to vector<8x8x16xbf16>
    %67 = vector.shape_cast %66 : vector<8x8x16xbf16> to vector<64x16xbf16>
    %68 = tpu.concatenate %64, %67, %1 in 1 : vector<64x32xbf16>, vector<64x16xbf16>, vector<64x80xbf16> -> vector<64x128xbf16>
    %c0_111 = arith.constant 0 : index
    %c0_112 = arith.constant 0 : index
    %c768 = arith.constant 768 : index
    %69 = vector.load %arg7[%c0_111, %c0_112, %c768] : memref<2x64x1152xbf16, #tpu.memory_space<vmem>>, vector<1x64x128xbf16>
    %70 = vector.shape_cast %69 : vector<1x64x128xbf16> to vector<64x128xbf16>
    %71 = vector.shape_cast %68 : vector<64x128xbf16> to vector<1x64x128xbf16>
    tpu.vector_store %arg7[%c0_111, %c0_112, %c768], %71 {strides = array<i32>} : memref<2x64x1152xbf16, #tpu.memory_space<vmem>>, vector<1x64x128xbf16>,
    %c0_113 = arith.constant 0 : index
    %c1_114 = arith.constant 1 : index
    %c0_115 = arith.constant 0 : index
    %c0_116 = arith.constant 0 : index
    %c1_117 = arith.constant 1 : index
    %c0_118 = arith.constant 0 : index
    %c0_119 = arith.constant 0 : index
    %72 = vector.load %arg2[%c0_113, %c1_114, %c0_115, %c0_116, %c1_117, %c0_118, %c0_119] : memref<1x2x2x9x2x9x32xbf16, #tpu.memory_space<vmem>>, vector<1x1x1x8x1x8x32xbf16>
    %73 = vector.shape_cast %72 : vector<1x1x1x8x1x8x32xbf16> to vector<8x8x32xbf16>
    %74 = vector.shape_cast %73 : vector<8x8x32xbf16> to vector<64x32xbf16>
    %c0_120 = arith.constant 0 : index
    %c1_121 = arith.constant 1 : index
    %c0_122 = arith.constant 0 : index
    %c0_123 = arith.constant 0 : index
    %c1_124 = arith.constant 1 : index
    %c1_125 = arith.constant 1 : index
    %c0_126 = arith.constant 0 : index
    %75 = vector.load %arg2[%c0_120, %c1_121, %c0_122, %c0_123, %c1_124, %c1_125, %c0_126] : memref<1x2x2x9x2x9x32xbf16, #tpu.memory_space<vmem>>, vector<1x1x1x8x1x8x16xbf16>
    %76 = vector.shape_cast %75 : vector<1x1x1x8x1x8x16xbf16> to vector<8x8x16xbf16>
    %77 = vector.shape_cast %76 : vector<8x8x16xbf16> to vector<64x16xbf16>
    %78 = tpu.concatenate %74, %77, %1 in 1 : vector<64x32xbf16>, vector<64x16xbf16>, vector<64x80xbf16> -> vector<64x128xbf16>
    %c0_127 = arith.constant 0 : index
    %c0_128 = arith.constant 0 : index
    %c896 = arith.constant 896 : index
    %79 = vector.load %arg7[%c0_127, %c0_128, %c896] : memref<2x64x1152xbf16, #tpu.memory_space<vmem>>, vector<1x64x128xbf16>
    %80 = vector.shape_cast %79 : vector<1x64x128xbf16> to vector<64x128xbf16>
    %81 = vector.shape_cast %78 : vector<64x128xbf16> to vector<1x64x128xbf16>
    tpu.vector_store %arg7[%c0_127, %c0_128, %c896], %81 {strides = array<i32>} : memref<2x64x1152xbf16, #tpu.memory_space<vmem>>, vector<1x64x128xbf16>,
    %c0_129 = arith.constant 0 : index
    %c1_130 = arith.constant 1 : index
    %c0_131 = arith.constant 0 : index
    %c1_132 = arith.constant 1 : index
    %c0_133 = arith.constant 0 : index
    %c0_134 = arith.constant 0 : index
    %c0_135 = arith.constant 0 : index
    %82 = vector.load %arg2[%c0_129, %c1_130, %c0_131, %c1_132, %c0_133, %c0_134, %c0_135] : memref<1x2x2x9x2x9x32xbf16, #tpu.memory_space<vmem>>, vector<1x1x1x8x1x8x32xbf16>
    %83 = vector.shape_cast %82 : vector<1x1x1x8x1x8x32xbf16> to vector<8x8x32xbf16>
    %84 = vector.shape_cast %83 : vector<8x8x32xbf16> to vector<64x32xbf16>
    %c0_136 = arith.constant 0 : index
    %c1_137 = arith.constant 1 : index
    %c0_138 = arith.constant 0 : index
    %c1_139 = arith.constant 1 : index
    %c0_140 = arith.constant 0 : index
    %c1_141 = arith.constant 1 : index
    %c0_142 = arith.constant 0 : index
    %85 = vector.load %arg2[%c0_136, %c1_137, %c0_138, %c1_139, %c0_140, %c1_141, %c0_142] : memref<1x2x2x9x2x9x32xbf16, #tpu.memory_space<vmem>>, vector<1x1x1x8x1x8x16xbf16>
    %86 = vector.shape_cast %85 : vector<1x1x1x8x1x8x16xbf16> to vector<8x8x16xbf16>
    %87 = vector.shape_cast %86 : vector<8x8x16xbf16> to vector<64x16xbf16>
    %88 = tpu.concatenate %84, %87, %1 in 1 : vector<64x32xbf16>, vector<64x16xbf16>, vector<64x80xbf16> -> vector<64x128xbf16>
    %c0_143 = arith.constant 0 : index
    %c0_144 = arith.constant 0 : index
    %c1024 = arith.constant 1024 : index
    %89 = vector.load %arg7[%c0_143, %c0_144, %c1024] : memref<2x64x1152xbf16, #tpu.memory_space<vmem>>, vector<1x64x128xbf16>
    %90 = vector.shape_cast %89 : vector<1x64x128xbf16> to vector<64x128xbf16>
    %91 = vector.shape_cast %88 : vector<64x128xbf16> to vector<1x64x128xbf16>
    tpu.vector_store %arg7[%c0_143, %c0_144, %c1024], %91 {strides = array<i32>} : memref<2x64x1152xbf16, #tpu.memory_space<vmem>>, vector<1x64x128xbf16>,
    %c0_145 = arith.constant 0 : index
    %c0_146 = arith.constant 0 : index
    %c0_147 = arith.constant 0 : index
    %92 = vector.load %arg7[%c0_145, %c0_146, %c0_147] : memref<2x64x1152xbf16, #tpu.memory_space<vmem>>, vector<1x64x1152xbf16>
    %93 = vector.shape_cast %92 : vector<1x64x1152xbf16> to vector<64x1152xbf16>
    %c0_148 = arith.constant 0 : index
    %c0_149 = arith.constant 0 : index
    %94 = vector.load %arg4[%c0_148, %c0_149] : memref<1152x128xbf16, #tpu.memory_space<vmem>>, vector<1152x128xbf16>
    %cst_150 = arith.constant dense<0.000000e+00> : vector<64x128xf32>
    %95 = tpu.matmul %93, %94, %cst_150 {dimension_numbers = #tpu.dot_dimension_numbers<[1], [0], [0], [1], [0, 0, 1, 1], [], []>} : vector<64x1152xbf16>, vector<1152x128xbf16>, vector<64x128xf32> -> vector<64x128xf32>
    %96 = vector.broadcast %0 : vector<1x128xf32> to vector<64x128xf32>
    %97 = arith.addf %95, %96 : vector<64x128xf32>
    %98 = arith.truncf %97 : vector<64x128xf32> to vector<64x128xbf16>
    %c0_151 = arith.constant 0 : index
    %c0_152 = arith.constant 0 : index
    %c0_153 = arith.constant 0 : index
    %c0_154 = arith.constant 0 : index
    %99 = vector.load %arg6[%c0_151, %c0_152, %c0_153, %c0_154] : memref<1x2x64x128xbf16, #tpu.memory_space<vmem>>, vector<1x1x64x128xbf16>
    %100 = vector.shape_cast %99 : vector<1x1x64x128xbf16> to vector<64x128xbf16>
    %101 = vector.shape_cast %98 : vector<64x128xbf16> to vector<1x1x64x128xbf16>
    tpu.vector_store %arg6[%c0_151, %c0_152, %c0_153, %c0_154], %101 {strides = array<i32>} : memref<1x2x64x128xbf16, #tpu.memory_space<vmem>>, vector<1x1x64x128xbf16>,
    %c0_155 = arith.constant 0 : index
    %c1_156 = arith.constant 1 : index
    %c0_157 = arith.constant 0 : index
    %c0_158 = arith.constant 0 : index
    %c0_159 = arith.constant 0 : index
    %c0_160 = arith.constant 0 : index
    %c0_161 = arith.constant 0 : index
    %102 = vector.load %arg2[%c0_155, %c1_156, %c0_157, %c0_158, %c0_159, %c0_160, %c0_161] : memref<1x2x2x9x2x9x32xbf16, #tpu.memory_space<vmem>>, vector<1x1x1x8x1x8x32xbf16>
    %103 = vector.shape_cast %102 : vector<1x1x1x8x1x8x32xbf16> to vector<8x8x32xbf16>
    %104 = vector.shape_cast %103 : vector<8x8x32xbf16> to vector<64x32xbf16>
    %c0_162 = arith.constant 0 : index
    %c1_163 = arith.constant 1 : index
    %c0_164 = arith.constant 0 : index
    %c0_165 = arith.constant 0 : index
    %c0_166 = arith.constant 0 : index
    %c1_167 = arith.constant 1 : index
    %c0_168 = arith.constant 0 : index
    %105 = vector.load %arg2[%c0_162, %c1_163, %c0_164, %c0_165, %c0_166, %c1_167, %c0_168] : memref<1x2x2x9x2x9x32xbf16, #tpu.memory_space<vmem>>, vector<1x1x1x8x1x8x16xbf16>
    %106 = vector.shape_cast %105 : vector<1x1x1x8x1x8x16xbf16> to vector<8x8x16xbf16>
    %107 = vector.shape_cast %106 : vector<8x8x16xbf16> to vector<64x16xbf16>
    %108 = tpu.concatenate %104, %107, %1 in 1 : vector<64x32xbf16>, vector<64x16xbf16>, vector<64x80xbf16> -> vector<64x128xbf16>
    %c1_169 = arith.constant 1 : index
    %c0_170 = arith.constant 0 : index
    %c0_171 = arith.constant 0 : index
    %109 = vector.load %arg7[%c1_169, %c0_170, %c0_171] : memref<2x64x1152xbf16, #tpu.memory_space<vmem>>, vector<1x64x128xbf16>
    %110 = vector.shape_cast %109 : vector<1x64x128xbf16> to vector<64x128xbf16>
    %111 = vector.shape_cast %108 : vector<64x128xbf16> to vector<1x64x128xbf16>
    tpu.vector_store %arg7[%c1_169, %c0_170, %c0_171], %111 {strides = array<i32>} : memref<2x64x1152xbf16, #tpu.memory_space<vmem>>, vector<1x64x128xbf16>,
    %c0_172 = arith.constant 0 : index
    %c1_173 = arith.constant 1 : index
    %c0_174 = arith.constant 0 : index
    %c0_175 = arith.constant 0 : index
    %c1_176 = arith.constant 1 : index
    %c0_177 = arith.constant 0 : index
    %c0_178 = arith.constant 0 : index
    %112 = vector.load %arg2[%c0_172, %c1_173, %c0_174, %c0_175, %c1_176, %c0_177, %c0_178] : memref<1x2x2x9x2x9x32xbf16, #tpu.memory_space<vmem>>, vector<1x1x1x8x1x8x32xbf16>
    %113 = vector.shape_cast %112 : vector<1x1x1x8x1x8x32xbf16> to vector<8x8x32xbf16>
    %114 = vector.shape_cast %113 : vector<8x8x32xbf16> to vector<64x32xbf16>
    %c0_179 = arith.constant 0 : index
    %c1_180 = arith.constant 1 : index
    %c0_181 = arith.constant 0 : index
    %c0_182 = arith.constant 0 : index
    %c1_183 = arith.constant 1 : index
    %c1_184 = arith.constant 1 : index
    %c0_185 = arith.constant 0 : index
    %115 = vector.load %arg2[%c0_179, %c1_180, %c0_181, %c0_182, %c1_183, %c1_184, %c0_185] : memref<1x2x2x9x2x9x32xbf16, #tpu.memory_space<vmem>>, vector<1x1x1x8x1x8x16xbf16>
    %116 = vector.shape_cast %115 : vector<1x1x1x8x1x8x16xbf16> to vector<8x8x16xbf16>
    %117 = vector.shape_cast %116 : vector<8x8x16xbf16> to vector<64x16xbf16>
    %118 = tpu.concatenate %114, %117, %1 in 1 : vector<64x32xbf16>, vector<64x16xbf16>, vector<64x80xbf16> -> vector<64x128xbf16>
    %c1_186 = arith.constant 1 : index
    %c0_187 = arith.constant 0 : index
    %c128_188 = arith.constant 128 : index
    %119 = vector.load %arg7[%c1_186, %c0_187, %c128_188] : memref<2x64x1152xbf16, #tpu.memory_space<vmem>>, vector<1x64x128xbf16>
    %120 = vector.shape_cast %119 : vector<1x64x128xbf16> to vector<64x128xbf16>
    %121 = vector.shape_cast %118 : vector<64x128xbf16> to vector<1x64x128xbf16>
    tpu.vector_store %arg7[%c1_186, %c0_187, %c128_188], %121 {strides = array<i32>} : memref<2x64x1152xbf16, #tpu.memory_space<vmem>>, vector<1x64x128xbf16>,
    %c0_189 = arith.constant 0 : index
    %c1_190 = arith.constant 1 : index
    %c0_191 = arith.constant 0 : index
    %c1_192 = arith.constant 1 : index
    %c0_193 = arith.constant 0 : index
    %c0_194 = arith.constant 0 : index
    %c0_195 = arith.constant 0 : index
    %122 = vector.load %arg2[%c0_189, %c1_190, %c0_191, %c1_192, %c0_193, %c0_194, %c0_195] : memref<1x2x2x9x2x9x32xbf16, #tpu.memory_space<vmem>>, vector<1x1x1x8x1x8x32xbf16>
    %123 = vector.shape_cast %122 : vector<1x1x1x8x1x8x32xbf16> to vector<8x8x32xbf16>
    %124 = vector.shape_cast %123 : vector<8x8x32xbf16> to vector<64x32xbf16>
    %c0_196 = arith.constant 0 : index
    %c1_197 = arith.constant 1 : index
    %c0_198 = arith.constant 0 : index
    %c1_199 = arith.constant 1 : index
    %c0_200 = arith.constant 0 : index
    %c1_201 = arith.constant 1 : index
    %c0_202 = arith.constant 0 : index
    %125 = vector.load %arg2[%c0_196, %c1_197, %c0_198, %c1_199, %c0_200, %c1_201, %c0_202] : memref<1x2x2x9x2x9x32xbf16, #tpu.memory_space<vmem>>, vector<1x1x1x8x1x8x16xbf16>
    %126 = vector.shape_cast %125 : vector<1x1x1x8x1x8x16xbf16> to vector<8x8x16xbf16>
    %127 = vector.shape_cast %126 : vector<8x8x16xbf16> to vector<64x16xbf16>
    %128 = tpu.concatenate %124, %127, %1 in 1 : vector<64x32xbf16>, vector<64x16xbf16>, vector<64x80xbf16> -> vector<64x128xbf16>
    %c1_203 = arith.constant 1 : index
    %c0_204 = arith.constant 0 : index
    %c256_205 = arith.constant 256 : index
    %129 = vector.load %arg7[%c1_203, %c0_204, %c256_205] : memref<2x64x1152xbf16, #tpu.memory_space<vmem>>, vector<1x64x128xbf16>
    %130 = vector.shape_cast %129 : vector<1x64x128xbf16> to vector<64x128xbf16>
    %131 = vector.shape_cast %128 : vector<64x128xbf16> to vector<1x64x128xbf16>
    tpu.vector_store %arg7[%c1_203, %c0_204, %c256_205], %131 {strides = array<i32>} : memref<2x64x1152xbf16, #tpu.memory_space<vmem>>, vector<1x64x128xbf16>,
    %c0_206 = arith.constant 0 : index
    %c1_207 = arith.constant 1 : index
    %c1_208 = arith.constant 1 : index
    %c0_209 = arith.constant 0 : index
    %c0_210 = arith.constant 0 : index
    %c0_211 = arith.constant 0 : index
    %c0_212 = arith.constant 0 : index
    %132 = vector.load %arg2[%c0_206, %c1_207, %c1_208, %c0_209, %c0_210, %c0_211, %c0_212] : memref<1x2x2x9x2x9x32xbf16, #tpu.memory_space<vmem>>, vector<1x1x1x8x1x8x32xbf16>
    %133 = vector.shape_cast %132 : vector<1x1x1x8x1x8x32xbf16> to vector<8x8x32xbf16>
    %134 = vector.shape_cast %133 : vector<8x8x32xbf16> to vector<64x32xbf16>
    %c0_213 = arith.constant 0 : index
    %c1_214 = arith.constant 1 : index
    %c1_215 = arith.constant 1 : index
    %c0_216 = arith.constant 0 : index
    %c0_217 = arith.constant 0 : index
    %c1_218 = arith.constant 1 : index
    %c0_219 = arith.constant 0 : index
    %135 = vector.load %arg2[%c0_213, %c1_214, %c1_215, %c0_216, %c0_217, %c1_218, %c0_219] : memref<1x2x2x9x2x9x32xbf16, #tpu.memory_space<vmem>>, vector<1x1x1x8x1x8x16xbf16>
    %136 = vector.shape_cast %135 : vector<1x1x1x8x1x8x16xbf16> to vector<8x8x16xbf16>
    %137 = vector.shape_cast %136 : vector<8x8x16xbf16> to vector<64x16xbf16>
    %138 = tpu.concatenate %134, %137, %1 in 1 : vector<64x32xbf16>, vector<64x16xbf16>, vector<64x80xbf16> -> vector<64x128xbf16>
    %c1_220 = arith.constant 1 : index
    %c0_221 = arith.constant 0 : index
    %c384_222 = arith.constant 384 : index
    %139 = vector.load %arg7[%c1_220, %c0_221, %c384_222] : memref<2x64x1152xbf16, #tpu.memory_space<vmem>>, vector<1x64x128xbf16>
    %140 = vector.shape_cast %139 : vector<1x64x128xbf16> to vector<64x128xbf16>
    %141 = vector.shape_cast %138 : vector<64x128xbf16> to vector<1x64x128xbf16>
    tpu.vector_store %arg7[%c1_220, %c0_221, %c384_222], %141 {strides = array<i32>} : memref<2x64x1152xbf16, #tpu.memory_space<vmem>>, vector<1x64x128xbf16>,
    %c0_223 = arith.constant 0 : index
    %c1_224 = arith.constant 1 : index
    %c1_225 = arith.constant 1 : index
    %c0_226 = arith.constant 0 : index
    %c1_227 = arith.constant 1 : index
    %c0_228 = arith.constant 0 : index
    %c0_229 = arith.constant 0 : index
    %142 = vector.load %arg2[%c0_223, %c1_224, %c1_225, %c0_226, %c1_227, %c0_228, %c0_229] : memref<1x2x2x9x2x9x32xbf16, #tpu.memory_space<vmem>>, vector<1x1x1x8x1x8x32xbf16>
    %143 = vector.shape_cast %142 : vector<1x1x1x8x1x8x32xbf16> to vector<8x8x32xbf16>
    %144 = vector.shape_cast %143 : vector<8x8x32xbf16> to vector<64x32xbf16>
    %c0_230 = arith.constant 0 : index
    %c1_231 = arith.constant 1 : index
    %c1_232 = arith.constant 1 : index
    %c0_233 = arith.constant 0 : index
    %c1_234 = arith.constant 1 : index
    %c1_235 = arith.constant 1 : index
    %c0_236 = arith.constant 0 : index
    %145 = vector.load %arg2[%c0_230, %c1_231, %c1_232, %c0_233, %c1_234, %c1_235, %c0_236] : memref<1x2x2x9x2x9x32xbf16, #tpu.memory_space<vmem>>, vector<1x1x1x8x1x8x16xbf16>
    %146 = vector.shape_cast %145 : vector<1x1x1x8x1x8x16xbf16> to vector<8x8x16xbf16>
    %147 = vector.shape_cast %146 : vector<8x8x16xbf16> to vector<64x16xbf16>
    %148 = tpu.concatenate %144, %147, %1 in 1 : vector<64x32xbf16>, vector<64x16xbf16>, vector<64x80xbf16> -> vector<64x128xbf16>
    %c1_237 = arith.constant 1 : index
    %c0_238 = arith.constant 0 : index
    %c512_239 = arith.constant 512 : index
    %149 = vector.load %arg7[%c1_237, %c0_238, %c512_239] : memref<2x64x1152xbf16, #tpu.memory_space<vmem>>, vector<1x64x128xbf16>
    %150 = vector.shape_cast %149 : vector<1x64x128xbf16> to vector<64x128xbf16>
    %151 = vector.shape_cast %148 : vector<64x128xbf16> to vector<1x64x128xbf16>
    tpu.vector_store %arg7[%c1_237, %c0_238, %c512_239], %151 {strides = array<i32>} : memref<2x64x1152xbf16, #tpu.memory_space<vmem>>, vector<1x64x128xbf16>,
    %c0_240 = arith.constant 0 : index
    %c1_241 = arith.constant 1 : index
    %c1_242 = arith.constant 1 : index
    %c1_243 = arith.constant 1 : index
    %c0_244 = arith.constant 0 : index
    %c0_245 = arith.constant 0 : index
    %c0_246 = arith.constant 0 : index
    %152 = vector.load %arg2[%c0_240, %c1_241, %c1_242, %c1_243, %c0_244, %c0_245, %c0_246] : memref<1x2x2x9x2x9x32xbf16, #tpu.memory_space<vmem>>, vector<1x1x1x8x1x8x32xbf16>
    %153 = vector.shape_cast %152 : vector<1x1x1x8x1x8x32xbf16> to vector<8x8x32xbf16>
    %154 = vector.shape_cast %153 : vector<8x8x32xbf16> to vector<64x32xbf16>
    %c0_247 = arith.constant 0 : index
    %c1_248 = arith.constant 1 : index
    %c1_249 = arith.constant 1 : index
    %c1_250 = arith.constant 1 : index
    %c0_251 = arith.constant 0 : index
    %c1_252 = arith.constant 1 : index
    %c0_253 = arith.constant 0 : index
    %155 = vector.load %arg2[%c0_247, %c1_248, %c1_249, %c1_250, %c0_251, %c1_252, %c0_253] : memref<1x2x2x9x2x9x32xbf16, #tpu.memory_space<vmem>>, vector<1x1x1x8x1x8x16xbf16>
    %156 = vector.shape_cast %155 : vector<1x1x1x8x1x8x16xbf16> to vector<8x8x16xbf16>
    %157 = vector.shape_cast %156 : vector<8x8x16xbf16> to vector<64x16xbf16>
    %158 = tpu.concatenate %154, %157, %1 in 1 : vector<64x32xbf16>, vector<64x16xbf16>, vector<64x80xbf16> -> vector<64x128xbf16>
    %c1_254 = arith.constant 1 : index
    %c0_255 = arith.constant 0 : index
    %c640_256 = arith.constant 640 : index
    %159 = vector.load %arg7[%c1_254, %c0_255, %c640_256] : memref<2x64x1152xbf16, #tpu.memory_space<vmem>>, vector<1x64x128xbf16>
    %160 = vector.shape_cast %159 : vector<1x64x128xbf16> to vector<64x128xbf16>
    %161 = vector.shape_cast %158 : vector<64x128xbf16> to vector<1x64x128xbf16>
    tpu.vector_store %arg7[%c1_254, %c0_255, %c640_256], %161 {strides = array<i32>} : memref<2x64x1152xbf16, #tpu.memory_space<vmem>>, vector<1x64x128xbf16>,
    %c0_257 = arith.constant 0 : index
    %c0_258 = arith.constant 0 : index
    %c0_259 = arith.constant 0 : index
    %c0_260 = arith.constant 0 : index
    %c0_261 = arith.constant 0 : index
    %c0_262 = arith.constant 0 : index
    %c0_263 = arith.constant 0 : index
    %162 = vector.load %arg3[%c0_257, %c0_258, %c0_259, %c0_260, %c0_261, %c0_262, %c0_263] : memref<1x1x1x9x2x9x32xbf16, #tpu.memory_space<vmem>>, vector<1x1x1x8x1x8x32xbf16>
    %163 = vector.shape_cast %162 : vector<1x1x1x8x1x8x32xbf16> to vector<8x8x32xbf16>
    %164 = vector.shape_cast %163 : vector<8x8x32xbf16> to vector<64x32xbf16>
    %c0_264 = arith.constant 0 : index
    %c0_265 = arith.constant 0 : index
    %c0_266 = arith.constant 0 : index
    %c0_267 = arith.constant 0 : index
    %c0_268 = arith.constant 0 : index
    %c1_269 = arith.constant 1 : index
    %c0_270 = arith.constant 0 : index
    %165 = vector.load %arg3[%c0_264, %c0_265, %c0_266, %c0_267, %c0_268, %c1_269, %c0_270] : memref<1x1x1x9x2x9x32xbf16, #tpu.memory_space<vmem>>, vector<1x1x1x8x1x8x16xbf16>
    %166 = vector.shape_cast %165 : vector<1x1x1x8x1x8x16xbf16> to vector<8x8x16xbf16>
    %167 = vector.shape_cast %166 : vector<8x8x16xbf16> to vector<64x16xbf16>
    %168 = tpu.concatenate %164, %167, %1 in 1 : vector<64x32xbf16>, vector<64x16xbf16>, vector<64x80xbf16> -> vector<64x128xbf16>
    %c1_271 = arith.constant 1 : index
    %c0_272 = arith.constant 0 : index
    %c768_273 = arith.constant 768 : index
    %169 = vector.load %arg7[%c1_271, %c0_272, %c768_273] : memref<2x64x1152xbf16, #tpu.memory_space<vmem>>, vector<1x64x128xbf16>
    %170 = vector.shape_cast %169 : vector<1x64x128xbf16> to vector<64x128xbf16>
    %171 = vector.shape_cast %168 : vector<64x128xbf16> to vector<1x64x128xbf16>
    tpu.vector_store %arg7[%c1_271, %c0_272, %c768_273], %171 {strides = array<i32>} : memref<2x64x1152xbf16, #tpu.memory_space<vmem>>, vector<1x64x128xbf16>,
    %c0_274 = arith.constant 0 : index
    %c0_275 = arith.constant 0 : index
    %c0_276 = arith.constant 0 : index
    %c0_277 = arith.constant 0 : index
    %c1_278 = arith.constant 1 : index
    %c0_279 = arith.constant 0 : index
    %c0_280 = arith.constant 0 : index
    %172 = vector.load %arg3[%c0_274, %c0_275, %c0_276, %c0_277, %c1_278, %c0_279, %c0_280] : memref<1x1x1x9x2x9x32xbf16, #tpu.memory_space<vmem>>, vector<1x1x1x8x1x8x32xbf16>
    %173 = vector.shape_cast %172 : vector<1x1x1x8x1x8x32xbf16> to vector<8x8x32xbf16>
    %174 = vector.shape_cast %173 : vector<8x8x32xbf16> to vector<64x32xbf16>
    %c0_281 = arith.constant 0 : index
    %c0_282 = arith.constant 0 : index
    %c0_283 = arith.constant 0 : index
    %c0_284 = arith.constant 0 : index
    %c1_285 = arith.constant 1 : index
    %c1_286 = arith.constant 1 : index
    %c0_287 = arith.constant 0 : index
    %175 = vector.load %arg3[%c0_281, %c0_282, %c0_283, %c0_284, %c1_285, %c1_286, %c0_287] : memref<1x1x1x9x2x9x32xbf16, #tpu.memory_space<vmem>>, vector<1x1x1x8x1x8x16xbf16>
    %176 = vector.shape_cast %175 : vector<1x1x1x8x1x8x16xbf16> to vector<8x8x16xbf16>
    %177 = vector.shape_cast %176 : vector<8x8x16xbf16> to vector<64x16xbf16>
    %178 = tpu.concatenate %174, %177, %1 in 1 : vector<64x32xbf16>, vector<64x16xbf16>, vector<64x80xbf16> -> vector<64x128xbf16>
    %c1_288 = arith.constant 1 : index
    %c0_289 = arith.constant 0 : index
    %c896_290 = arith.constant 896 : index
    %179 = vector.load %arg7[%c1_288, %c0_289, %c896_290] : memref<2x64x1152xbf16, #tpu.memory_space<vmem>>, vector<1x64x128xbf16>
    %180 = vector.shape_cast %179 : vector<1x64x128xbf16> to vector<64x128xbf16>
    %181 = vector.shape_cast %178 : vector<64x128xbf16> to vector<1x64x128xbf16>
    tpu.vector_store %arg7[%c1_288, %c0_289, %c896_290], %181 {strides = array<i32>} : memref<2x64x1152xbf16, #tpu.memory_space<vmem>>, vector<1x64x128xbf16>,
    %c0_291 = arith.constant 0 : index
    %c0_292 = arith.constant 0 : index
    %c0_293 = arith.constant 0 : index
    %c1_294 = arith.constant 1 : index
    %c0_295 = arith.constant 0 : index
    %c0_296 = arith.constant 0 : index
    %c0_297 = arith.constant 0 : index
    %182 = vector.load %arg3[%c0_291, %c0_292, %c0_293, %c1_294, %c0_295, %c0_296, %c0_297] : memref<1x1x1x9x2x9x32xbf16, #tpu.memory_space<vmem>>, vector<1x1x1x8x1x8x32xbf16>
    %183 = vector.shape_cast %182 : vector<1x1x1x8x1x8x32xbf16> to vector<8x8x32xbf16>
    %184 = vector.shape_cast %183 : vector<8x8x32xbf16> to vector<64x32xbf16>
    %c0_298 = arith.constant 0 : index
    %c0_299 = arith.constant 0 : index
    %c0_300 = arith.constant 0 : index
    %c1_301 = arith.constant 1 : index
    %c0_302 = arith.constant 0 : index
    %c1_303 = arith.constant 1 : index
    %c0_304 = arith.constant 0 : index
    %185 = vector.load %arg3[%c0_298, %c0_299, %c0_300, %c1_301, %c0_302, %c1_303, %c0_304] : memref<1x1x1x9x2x9x32xbf16, #tpu.memory_space<vmem>>, vector<1x1x1x8x1x8x16xbf16>
    %186 = vector.shape_cast %185 : vector<1x1x1x8x1x8x16xbf16> to vector<8x8x16xbf16>
    %187 = vector.shape_cast %186 : vector<8x8x16xbf16> to vector<64x16xbf16>
    %188 = tpu.concatenate %184, %187, %1 in 1 : vector<64x32xbf16>, vector<64x16xbf16>, vector<64x80xbf16> -> vector<64x128xbf16>
    %c1_305 = arith.constant 1 : index
    %c0_306 = arith.constant 0 : index
    %c1024_307 = arith.constant 1024 : index
    %189 = vector.load %arg7[%c1_305, %c0_306, %c1024_307] : memref<2x64x1152xbf16, #tpu.memory_space<vmem>>, vector<1x64x128xbf16>
    %190 = vector.shape_cast %189 : vector<1x64x128xbf16> to vector<64x128xbf16>
    %191 = vector.shape_cast %188 : vector<64x128xbf16> to vector<1x64x128xbf16>
    tpu.vector_store %arg7[%c1_305, %c0_306, %c1024_307], %191 {strides = array<i32>} : memref<2x64x1152xbf16, #tpu.memory_space<vmem>>, vector<1x64x128xbf16>,
    %c1_308 = arith.constant 1 : index
    %c0_309 = arith.constant 0 : index
    %c0_310 = arith.constant 0 : index
    %192 = vector.load %arg7[%c1_308, %c0_309, %c0_310] : memref<2x64x1152xbf16, #tpu.memory_space<vmem>>, vector<1x64x1152xbf16>
    %193 = vector.shape_cast %192 : vector<1x64x1152xbf16> to vector<64x1152xbf16>
    %c0_311 = arith.constant 0 : index
    %c0_312 = arith.constant 0 : index
    %194 = vector.load %arg4[%c0_311, %c0_312] : memref<1152x128xbf16, #tpu.memory_space<vmem>>, vector<1152x128xbf16>
    %cst_313 = arith.constant dense<0.000000e+00> : vector<64x128xf32>
    %195 = tpu.matmul %193, %194, %cst_313 {dimension_numbers = #tpu.dot_dimension_numbers<[1], [0], [0], [1], [0, 0, 1, 1], [], []>} : vector<64x1152xbf16>, vector<1152x128xbf16>, vector<64x128xf32> -> vector<64x128xf32>
    %196 = vector.broadcast %0 : vector<1x128xf32> to vector<64x128xf32>
    %197 = arith.addf %195, %196 : vector<64x128xf32>
    %198 = arith.truncf %197 : vector<64x128xf32> to vector<64x128xbf16>
    %c0_314 = arith.constant 0 : index
    %c1_315 = arith.constant 1 : index
    %c0_316 = arith.constant 0 : index
    %c0_317 = arith.constant 0 : index
    %199 = vector.load %arg6[%c0_314, %c1_315, %c0_316, %c0_317] : memref<1x2x64x128xbf16, #tpu.memory_space<vmem>>, vector<1x1x64x128xbf16>
    %200 = vector.shape_cast %199 : vector<1x1x64x128xbf16> to vector<64x128xbf16>
    %201 = vector.shape_cast %198 : vector<64x128xbf16> to vector<1x1x64x128xbf16>
    tpu.vector_store %arg6[%c0_314, %c1_315, %c0_316, %c0_317], %201 {strides = array<i32>} : memref<1x2x64x128xbf16, #tpu.memory_space<vmem>>, vector<1x1x64x128xbf16>,
    return
  }
  func.func @transform_0(%arg0: i32, %arg1: i32) -> (i32, i32, i32, i32, i32, i32, i32) {
    %c0_i32 = arith.constant 0 : i32
    %c0_i32_0 = arith.constant 0 : i32
    %c0_i32_1 = arith.constant 0 : i32
    %c0_i32_2 = arith.constant 0 : i32
    %c0_i32_3 = arith.constant 0 : i32
    %c0_i32_4 = arith.constant 0 : i32
    return %arg0, %arg1, %c0_i32, %c0_i32_0, %c0_i32_1, %c0_i32_2, %c0_i32_3 : i32, i32, i32, i32, i32, i32, i32
  }
  func.func @transform_1(%arg0: i32, %arg1: i32) -> (i32, i32, i32, i32, i32, i32, i32) {
    %c1_i32 = arith.constant 1 : i32
    %0 = arith.addi %arg1, %c1_i32 : i32
    %c2_i32 = arith.constant 2 : i32
    %1 = arith.muli %c2_i32, %0 : i32
    %c0_i32 = arith.constant 0 : i32
    %c0_i32_0 = arith.constant 0 : i32
    %c0_i32_1 = arith.constant 0 : i32
    %c0_i32_2 = arith.constant 0 : i32
    %c0_i32_3 = arith.constant 0 : i32
    %c0_i32_4 = arith.constant 0 : i32
    return %arg0, %1, %c0_i32, %c0_i32_0, %c0_i32_1, %c0_i32_2, %c0_i32_3 : i32, i32, i32, i32, i32, i32, i32
  }
  func.func @transform_2(%arg0: i32, %arg1: i32) -> (i32, i32) {
    %c0_i32 = arith.constant 0 : i32
    %c0_i32_0 = arith.constant 0 : i32
    %c0_i32_1 = arith.constant 0 : i32
    return %c0_i32, %c0_i32_0 : i32, i32
  }
  func.func @transform_3(%arg0: i32, %arg1: i32) -> (i32, i32) {
    %c0_i32 = arith.constant 0 : i32
    %c0_i32_0 = arith.constant 0 : i32
    %c0_i32_1 = arith.constant 0 : i32
    return %c0_i32, %c0_i32_0 : i32, i32
  }
  func.func @transform_4(%arg0: i32, %arg1: i32) -> (i32, i32, i32, i32) {
    %c0_i32 = arith.constant 0 : i32
    %c0_i32_0 = arith.constant 0 : i32
    %c0_i32_1 = arith.constant 0 : i32
    return %arg0, %arg1, %c0_i32, %c0_i32_0 : i32, i32, i32, i32
  }
}

</mosaic_0001>

<llo_original>
// kernel: td_forward_ncdhw.1
$region0: #{td_forward_ncdhw.1}
  #allocation0 [shape = 'u32[]', space=smem, size = 0x4, offset = 0x4, fixed_abs, tag = 'smem constant byte address 0x4 - core index']
  #allocation1 [shape = 'u32[72,128]{1,0:T(1,128)}', space=vmem, size = 0x9000, scoped, tag = 'internal scratch']
  #allocation2 [shape = 'bf16[2,64,1152]{2,1,0:T(8,128)(2,1)}', space=vmem, size = 0x48000, scoped, tag = 'scratch operand']
  %s0 = inlined_call_operand.vmem [shape: bf16[2,9,2,9,2,9,32], index: 0, kind: input, shape index: {}, may-alias: {0,1}]
  %s1 = inlined_call_operand.vmem [shape: bf16[2,9,2,9,2,9,32], index: 1, kind: input, shape index: {}, may-alias: {0,1}]
  %s2 = inlined_call_operand.vmem [shape: bf16[1152,128], index: 2, kind: input, shape index: {}]
  %s3 = inlined_call_operand.vmem [shape: f32[1,128], index: 3, kind: input, shape index: {}]
  %s4 = inlined_call_operand.vmem [shape: bf16[2,8,64,128], index: 4, kind: output, shape index: {}]
  %s5 = sld [smem:[#allocation0]]
  $region49: #{td_forward_ncdhw.1} parent=0
    _
  %s7 = ssub.s32 1, %s5
  %s8 = scalar_select 0, %s7, %s5
  loop: start=0, step=1, limit=10
  $region2: #{td_forward_ncdhw.1} parent=0 // loop_pre_header
    _
  $region3: #{td_forward_ncdhw.1} parent=0 // loop_header
    %s10 = sphi 0, %s14
    %p11 = scmp.ge.s32.totalorder %s10, 10
    %s17 = sphi 0, %s29
    %s18 = sphi 0, %s25
    %s19 = sphi 0, %s17
    %s20 = sphi 0, %s18
    %s21 = sphi 0, %s19
    %s22 = sphi 0, %s20
    %s34 = sphi 0, %s36
    %s37 = sphi 0, %s34
    %s38 = sphi 0, %s37
    %s54 = sphi 0, %s38
    %s66 = sphi 0, %s68
    %s69 = sphi 0, %s66
    %s70 = sphi 0, %s69
    %s86 = sphi 0, %s70
    %s90 = sphi 0, %s90
    %s92 = sphi 0, %s90
    %s93 = sphi 0, %s92
    %s107 = sphi 0, %s93
    %s111 = sphi 0, %s111
    %s113 = sphi 0, %s111
    %s114 = sphi 0, %s113
    %s128 = sphi 0, %s114
    %s136 = sphi 0, %s138
    %s139 = sphi 0, %s136
    %s140 = sphi 0, %s139
    %s156 = sphi 0, %s140
  $region4: #{td_forward_ncdhw.1} parent=0 // loop_header_branch
    %13 = sbr.rel (%p11) target = $region8
  $region5: #{td_forward_ncdhw.1} parent=0 // loop_body
    %s15 = ssub.s32 %s10, 1
    %s16 = ssub.s32 %s10, 2
    %s23 = sadd.s32 1, %s18
    %p24 = scmp.ge.s32.totalorder %s23, 4
    %s25 = scalar_select %p24, 0, %s23
    %s26 = sadd.s32 1, %s17
    %s27 = scalar_select %p24, %s26, %s17
    %p28 = scmp.ge.s32.totalorder %s27, 2
    %s29 = scalar_select %p28, 0, %s27
    %s30 = ssub.s32 %s17, %s29
    %s31 = ssub.s32 %s18, %s25
    %s32 = sor.u32 %s30, %s31
    %p33 = scmp.eq.s32.totalorder %s32, 0
    %s35 = sadd.s32 %s34, 1
    %s36 = scalar_select %p33, %s34, %s35
    %p39 = pneg %p33
    %p40 = scmp.eq.s32.totalorder %s10, 7
    %p41 = por %p39, %p40
    %p42 = scmp.ne.s32.totalorder %s34, %s37
    %p43 = scmp.eq.s32.totalorder %s10, 0
    %p44 = por %p42, %p43
    %p45 = scmp.ne.s32.totalorder %s34, %s37
    %p46 = scmp.eq.s32.totalorder %s15, 7
    %p47 = por %p45, %p46
    %p48 = scmp.ne.s32.totalorder %s37, %s38
    %p49 = scmp.eq.s32.totalorder %s15, 0
    %p50 = por %p48, %p49
    %p51 = scmp.ne.s32.totalorder %s37, %s38
    %p52 = scmp.eq.s32.totalorder %s16, 7
    %p53 = por %p51, %p52
    %p55 = scmp.ne.s32.totalorder %s38, %s54
    %p56 = scmp.eq.s32.totalorder %s16, 0
    %p57 = por %p55, %p56
    %s58 = sadd.s32 %s18, 1
    %s59 = smul.u32 %s58, 2
    %s60 = sadd.s32 %s25, 1
    %s61 = smul.u32 %s60, 2
    %s62 = ssub.s32 %s17, %s29
    %s63 = ssub.s32 %s59, %s61
    %s64 = sor.u32 %s62, %s63
    %p65 = scmp.eq.s32.totalorder %s64, 0
    %s67 = sadd.s32 %s66, 1
    %s68 = scalar_select %p65, %s66, %s67
    %p71 = pneg %p65
    %p72 = scmp.eq.s32.totalorder %s10, 7
    %p73 = por %p71, %p72
    %p74 = scmp.ne.s32.totalorder %s66, %s69
    %p75 = scmp.eq.s32.totalorder %s10, 0
    %p76 = por %p74, %p75
    %p77 = scmp.ne.s32.totalorder %s66, %s69
    %p78 = scmp.eq.s32.totalorder %s15, 7
    %p79 = por %p77, %p78
    %p80 = scmp.ne.s32.totalorder %s69, %s70
    %p81 = scmp.eq.s32.totalorder %s15, 0
    %p82 = por %p80, %p81
    %p83 = scmp.ne.s32.totalorder %s69, %s70
    %p84 = scmp.eq.s32.totalorder %s16, 7
    %p85 = por %p83, %p84
    %p87 = scmp.ne.s32.totalorder %s70, %s86
    %p88 = scmp.eq.s32.totalorder %s16, 0
    %p89 = por %p87, %p88
    %s91 = sadd.s32 %s90, 1
    %p94 = scmp.eq.s32.totalorder %s10, 7
    %p95 = scmp.ne.s32.totalorder %s90, %s92
    %p96 = scmp.eq.s32.totalorder %s10, 0
    %p97 = por %p95, %p96
    %p98 = scmp.ne.s32.totalorder %s90, %s92
    %p99 = scmp.eq.s32.totalorder %s15, 7
    %p100 = por %p98, %p99
    %p101 = scmp.ne.s32.totalorder %s92, %s93
    %p102 = scmp.eq.s32.totalorder %s15, 0
    %p103 = por %p101, %p102
    %p104 = scmp.ne.s32.totalorder %s92, %s93
    %p105 = scmp.eq.s32.totalorder %s16, 7
    %p106 = por %p104, %p105
    %p108 = scmp.ne.s32.totalorder %s93, %s107
    %p109 = scmp.eq.s32.totalorder %s16, 0
    %p110 = por %p108, %p109
    %s112 = sadd.s32 %s111, 1
    %p115 = scmp.eq.s32.totalorder %s10, 7
    %p116 = scmp.ne.s32.totalorder %s111, %s113
    %p117 = scmp.eq.s32.totalorder %s10, 0
    %p118 = por %p116, %p117
    %p119 = scmp.ne.s32.totalorder %s111, %s113
    %p120 = scmp.eq.s32.totalorder %s15, 7
    %p121 = por %p119, %p120
    %p122 = scmp.ne.s32.totalorder %s113, %s114
    %p123 = scmp.eq.s32.totalorder %s15, 0
    %p124 = por %p122, %p123
    %p125 = scmp.ne.s32.totalorder %s113, %s114
    %p126 = scmp.eq.s32.totalorder %s16, 7
    %p127 = por %p125, %p126
    %p129 = scmp.ne.s32.totalorder %s114, %s128
    %p130 = scmp.eq.s32.totalorder %s16, 0
    %p131 = por %p129, %p130
    %s132 = ssub.s32 %s17, %s29
    %s133 = ssub.s32 %s18, %s25
    %s134 = sor.u32 %s132, %s133
    %p135 = scmp.eq.s32.totalorder %s134, 0
    %s137 = sadd.s32 %s136, 1
    %s138 = scalar_select %p135, %s136, %s137
    %p141 = pneg %p135
    %p142 = scmp.eq.s32.totalorder %s10, 7
    %p143 = por %p141, %p142
    %p144 = scmp.ne.s32.totalorder %s136, %s139
    %p145 = scmp.eq.s32.totalorder %s10, 0
    %p146 = por %p144, %p145
    %p147 = scmp.ne.s32.totalorder %s136, %s139
    %p148 = scmp.eq.s32.totalorder %s15, 7
    %p149 = por %p147, %p148
    %p150 = scmp.ne.s32.totalorder %s139, %s140
    %p151 = scmp.eq.s32.totalorder %s15, 0
    %p152 = por %p150, %p151
    %p153 = scmp.ne.s32.totalorder %s139, %s140
    %p154 = scmp.eq.s32.totalorder %s16, 7
    %p155 = por %p153, %p154
    %p157 = scmp.ne.s32.totalorder %s140, %s156
    %p158 = scmp.eq.s32.totalorder %s16, 0
    %p159 = por %p157, %p158
    %p160 = scmp.le.s32.totalorder 1, %s10
    %p161 = scmp.lt.s32.totalorder %s10, 9
    %p162 = pnand %p160, %p161
    %p163 = pneg %p162
    // Predicated region
    $region9: #{td_forward_ncdhw.1} parent=5 // pred_check
      _
    $region10: #{td_forward_ncdhw.1} parent=5 // pred_check_branch
      %165 = sbr.rel (%p162) target = $region12
    $region11: #{td_forward_ncdhw.1} parent=5 // pred_region
      %s166 = ssub.s32 %s10, 1
      // Predicated region
      $region13: #{td_forward_ncdhw.1} parent=11 // pred_check
        %p167 = pneg %p103
      $region14: #{td_forward_ncdhw.1} parent=11 // pred_check_branch
        %169 = sbr.rel (%p167) target = $region16
      $region15: #{td_forward_ncdhw.1} parent=11 // pred_region
        _
      $region16: #{td_forward_ncdhw.1} parent=11 // pred_fallthru
        _
      // Predicated region
      $region17: #{td_forward_ncdhw.1} parent=11 // pred_check
        %p170 = pneg %p124
      $region18: #{td_forward_ncdhw.1} parent=11 // pred_check_branch
        %172 = sbr.rel (%p170) target = $region20
      $region19: #{td_forward_ncdhw.1} parent=11 // pred_region
        _
      $region20: #{td_forward_ncdhw.1} parent=11 // pred_fallthru
        _
    $region12: #{td_forward_ncdhw.1} parent=5 // pred_fallthru
      _
    %p173 = scmp.lt.s32.totalorder %s10, 8
    // Predicated region
    $region21: #{td_forward_ncdhw.1} parent=5 // pred_check
      %p174 = pneg %p173
    $region22: #{td_forward_ncdhw.1} parent=5 // pred_check_branch
      %176 = sbr.rel (%p174) target = $region24
    $region23: #{td_forward_ncdhw.1} parent=5 // pred_region
      // Predicated region
      $region25: #{td_forward_ncdhw.1} parent=23 // pred_check
        %p177 = pneg %p44
      $region26: #{td_forward_ncdhw.1} parent=23 // pred_check_branch
        %179 = sbr.rel (%p177) target = $region28
      $region27: #{td_forward_ncdhw.1} parent=23 // pred_region
        %s180 = smul.u32 2, %s18
        %s181 = ssub.s32 9, %s180
        %p182 = scmp.lt.s32.totalorder %s181, 2
        %s183 = scalar_select %p182, %s181, 2
        %s184 = smul.u32 4, %s183
        %s185 = smul.u32 %s184, 2
        %s186 = smul.u32 %s185, 9
        %s187 = smul.u32 %s186, 2
        %s188 = smul.u32 %s187, 2
        %p189 = scmp.lt.s32.totalorder %s17, 1
        %s190 = scalar_select %p189, %s17, 1
        %p191 = scmp.lt.s32.totalorder %s180, 8
        %s192 = scalar_select %p191, %s180, 8
        %s193 = smul.addr %s192, 72
        %s194 = smul.addr %s190, 648
        %s195 = sadd.s32 %s193, %s194
        %s196 = smul.addr %s195, 4
        %s197 = scalar_lea.vmem %s0, %s196
        %s198 = smul.u32 2, %s18
        %s199 = ssub.s32 9, %s198
        %p200 = scmp.lt.s32.totalorder %s199, 2
        %s201 = scalar_select %p200, %s199, 2
        %s202 = smul.u32 4, %s201
        %s203 = smul.u32 %s202, 2
        %s204 = smul.u32 %s203, 9
        %s205 = smul.u32 %s204, 2
        %s206 = smul.u32 %s205, 2
      $region28: #{td_forward_ncdhw.1} parent=23 // pred_fallthru
        _
      // Predicated region
      $region29: #{td_forward_ncdhw.1} parent=23 // pred_check
        %p207 = pneg %p76
      $region30: #{td_forward_ncdhw.1} parent=23 // pred_check_branch
        %209 = sbr.rel (%p207) target = $region32
      $region31: #{td_forward_ncdhw.1} parent=23 // pred_region
        %s210 = sadd.s32 %s18, 1
        %s211 = smul.u32 %s210, 2
        %p212 = scmp.lt.s32.totalorder %s17, 1
        %s213 = scalar_select %p212, %s17, 1
        %p214 = scmp.lt.s32.totalorder %s211, 8
        %s215 = scalar_select %p214, %s211, 8
        %s216 = smul.addr %s215, 72
        %s217 = smul.addr %s213, 648
        %s218 = sadd.s32 %s216, %s217
        %s219 = smul.addr %s218, 4
        %s220 = scalar_lea.vmem %s1, %s219
        %s221 = sadd.s32 %s18, 1
        %s222 = smul.u32 %s221, 2
      $region32: #{td_forward_ncdhw.1} parent=23 // pred_fallthru
        _
    $region24: #{td_forward_ncdhw.1} parent=5 // pred_fallthru
      _
    %p223 = scmp.le.s32.totalorder 1, %s10
    %p224 = scmp.lt.s32.totalorder %s10, 9
    %p225 = pnand %p223, %p224
    %p226 = pneg %p225
    // Predicated region
    $region33: #{td_forward_ncdhw.1} parent=5 // pred_check
      _
    $region34: #{td_forward_ncdhw.1} parent=5 // pred_check_branch
      %228 = sbr.rel (%p225) target = $region36
    $region35: #{td_forward_ncdhw.1} parent=5 // pred_region
      %s229 = ssub.s32 %s10, 1
      %s230 = smul.u32 2, %s20
      %s231 = ssub.s32 9, %s230
      %p232 = scmp.lt.s32.totalorder %s231, 2
      %s233 = scalar_select %p232, %s231, 2
      %s234 = smul.u32 4, %s233
      %s235 = smul.u32 %s234, 2
      %s236 = smul.u32 %s235, 9
      %s237 = smul.u32 %s236, 2
      %s238 = smul.u32 %s237, 2
      %p239 = scmp.lt.s32.totalorder %s19, 1
      %s240 = scalar_select %p239, %s19, 1
      %p241 = scmp.lt.s32.totalorder %s230, 8
      %s242 = scalar_select %p241, %s230, 8
      %s243 = smul.addr %s242, 72
      %s244 = smul.addr %s240, 648
      %s245 = sadd.s32 %s243, %s244
      %s246 = smul.addr %s245, 4
      %s247 = scalar_lea.vmem %s0, %s246
      %p248 = pneg %p50
      %p249 = pneg %p47
      %s250 = sadd.s32 %s20, 1
      %s251 = smul.u32 %s250, 2
      %p252 = scmp.lt.s32.totalorder %s19, 1
      %s253 = scalar_select %p252, %s19, 1
      %p254 = scmp.lt.s32.totalorder %s251, 8
      %s255 = scalar_select %p254, %s251, 8
      %s256 = smul.addr %s255, 72
      %s257 = smul.addr %s253, 648
      %s258 = sadd.s32 %s256, %s257
      %s259 = smul.addr %s258, 4
      %s260 = scalar_lea.vmem %s1, %s259
      %p261 = pneg %p82
      %p262 = pneg %p79
      %p263 = pneg %p103
      %p264 = pneg %p100
      %p265 = pneg %p124
      %p266 = pneg %p121
      %p267 = pneg %p152
      %p268 = pneg %p149
      %s269 = smul.u32 2, %s20
      %p270 = scmp.lt.s32.totalorder %s19, 1
      %s271 = scalar_select %p270, %s19, 1
      %p272 = scmp.lt.s32.totalorder %s269, 7
      %s273 = scalar_select %p272, %s269, 7
      %s274 = smul.addr %s273, 8
      %s275 = smul.addr %s271, 64
      %s276 = sadd.s32 %s274, %s275
      %s277 = smul.addr %s276, 4
      %s278 = scalar_lea.vmem %s4, %s277
      %s279 = smul.u32 2, %s20
      %s280 = ssub.s32 9, %s279
      %p281 = scmp.lt.s32.totalorder %s280, 2
      %s282 = scalar_select %p281, %s280, 2
      %s283 = smul.u32 4, %s282
      %s284 = smul.u32 %s283, 2
      %s285 = smul.u32 %s284, 9
      %s286 = smul.u32 %s285, 2
      %s287 = smul.u32 %s286, 2
      %p288 = scmp.lt.s32.totalorder %s19, 1
      %s289 = scalar_select %p288, %s19, 1
      %p290 = scmp.lt.s32.totalorder %s279, 8
      %s291 = scalar_select %p290, %s279, 8
      %s292 = smul.addr %s291, 72
      %s293 = smul.addr %s289, 648
      %s294 = sadd.s32 %s292, %s293
      %s295 = smul.addr %s294, 4
      %s296 = scalar_lea.vmem %s0, %s295
      %s297 = smul.u32 2, %s20
      %s298 = ssub.s32 9, %s297
      %p299 = scmp.lt.s32.totalorder %s298, 2
      %s300 = scalar_select %p299, %s298, 2
      %s301 = smul.u32 4, %s300
      %s302 = smul.u32 %s301, 2
      %s303 = smul.u32 %s302, 9
      %s304 = smul.u32 %s303, 2
      %s305 = smul.u32 %s304, 2
      %s306 = sadd.s32 %s20, 1
      %s307 = smul.u32 %s306, 2
      %p308 = scmp.lt.s32.totalorder %s19, 1
      %s309 = scalar_select %p308, %s19, 1
      %p310 = scmp.lt.s32.totalorder %s307, 8
      %s311 = scalar_select %p310, %s307, 8
      %s312 = smul.addr %s311, 72
      %s313 = smul.addr %s309, 648
      %s314 = sadd.s32 %s312, %s313
      %s315 = smul.addr %s314, 4
      %s316 = scalar_lea.vmem %s1, %s315
      %s317 = sadd.s32 %s20, 1
      %s318 = smul.u32 %s317, 2
      %s319 = smul.u32 2, %s20
      %p320 = scmp.lt.s32.totalorder %s19, 1
      %s321 = scalar_select %p320, %s19, 1
      %p322 = scmp.lt.s32.totalorder %s319, 7
      %s323 = scalar_select %p322, %s319, 7
      %s324 = smul.addr %s323, 8
      %s325 = smul.addr %s321, 64
      %s326 = sadd.s32 %s324, %s325
      %s327 = smul.addr %s326, 4
      %s328 = scalar_lea.vmem %s4, %s327
      %s329 = smul.u32 2, %s20
      %v331 = vld [vmem:[%s3] sm:$0x1]
      %v332 = vld [vmem:[%s296] sm:$0xf]
      %v333 = vld [vmem:[%s296 + $0x10] sm:$0xf]
      %v334 = vld [vmem:[%s296 + $0x20] sm:$0xf]
      %v335 = vld [vmem:[%s296 + $0x30] sm:$0xf]
      %v336 = vld [vmem:[%s296 + $0x40] sm:$0xf]
      %v337 = vld [vmem:[%s296 + $0x50] sm:$0xf]
      %v338 = vld [vmem:[%s296 + $0x60] sm:$0xf]
      %v339 = vld [vmem:[%s296 + $0x70] sm:$0xf]
      %v340 = vld [vmem:[%s296 + $0x4] sm:$0x1]
      %v341 = vld [vmem:[%s296 + $0x14] sm:$0x1]
      %v342 = vld [vmem:[%s296 + $0x24] sm:$0x1]
      %v343 = vld [vmem:[%s296 + $0x34] sm:$0x1]
      %v344 = vld [vmem:[%s296 + $0x44] sm:$0x1]
      %v345 = vld [vmem:[%s296 + $0x54] sm:$0x1]
      %v346 = vld [vmem:[%s296 + $0x64] sm:$0x1]
      %v347 = vld [vmem:[%s296 + $0x74] sm:$0x1]
      %vm348 = vsmask.f32 3328
      %vm349 = vsmask.f32 7440
      %vm350 = vmor %vm348, %vm349
      %v352 = vshrl.u32 %v332, 16
      %v354 = vrot.slane %v352, 4
      %v355 = vshll.u32 %v332, 16
      %v357 = vrot.slane %v355, 5
      %v358 = vor.u32 %v354, %v357
      %v359 = vrot.slane %v358, 4
      %v361 = vshll.u32 %v340, 16
      %v363 = vrot.slane %v361, 5
      %v364 = vsel %vm350, %v359, %v363
      %v366 = vshrl.u32 %v333, 16
      %v368 = vrot.slane %v366, 4
      %v369 = vshll.u32 %v333, 16
      %v371 = vrot.slane %v369, 5
      %v372 = vor.u32 %v368, %v371
      %v373 = vrot.slane %v372, 4
      %v375 = vshll.u32 %v341, 16
      %v377 = vrot.slane %v375, 5
      %v378 = vsel %vm350, %v373, %v377
      %v380 = vshrl.u32 %v334, 16
      %v382 = vrot.slane %v380, 4
      %v383 = vshll.u32 %v334, 16
      %v385 = vrot.slane %v383, 5
      %v386 = vor.u32 %v382, %v385
      %v387 = vrot.slane %v386, 4
      %v389 = vshll.u32 %v342, 16
      %v391 = vrot.slane %v389, 5
      %v392 = vsel %vm350, %v387, %v391
      %v394 = vshrl.u32 %v335, 16
      %v396 = vrot.slane %v394, 4
      %v397 = vshll.u32 %v335, 16
      %v399 = vrot.slane %v397, 5
      %v400 = vor.u32 %v396, %v399
      %v401 = vrot.slane %v400, 4
      %v403 = vshll.u32 %v343, 16
      %v405 = vrot.slane %v403, 5
      %v406 = vsel %vm350, %v401, %v405
      %v408 = vshrl.u32 %v336, 16
      %v410 = vrot.slane %v408, 4
      %v411 = vshll.u32 %v336, 16
      %v413 = vrot.slane %v411, 5
      %v414 = vor.u32 %v410, %v413
      %v415 = vrot.slane %v414, 4
      %v417 = vshll.u32 %v344, 16
      %v419 = vrot.slane %v417, 5
      %v420 = vsel %vm350, %v415, %v419
      %v422 = vshrl.u32 %v337, 16
      %v424 = vrot.slane %v422, 4
      %v425 = vshll.u32 %v337, 16
      %v427 = vrot.slane %v425, 5
      %v428 = vor.u32 %v424, %v427
      %v429 = vrot.slane %v428, 4
      %v431 = vshll.u32 %v345, 16
      %v433 = vrot.slane %v431, 5
      %v434 = vsel %vm350, %v429, %v433
      %v436 = vshrl.u32 %v338, 16
      %v438 = vrot.slane %v436, 4
      %v439 = vshll.u32 %v338, 16
      %v441 = vrot.slane %v439, 5
      %v442 = vor.u32 %v438, %v441
      %v443 = vrot.slane %v442, 4
      %v445 = vshll.u32 %v346, 16
      %v447 = vrot.slane %v445, 5
      %v448 = vsel %vm350, %v443, %v447
      %v450 = vshrl.u32 %v339, 16
      %v452 = vrot.slane %v450, 4
      %v453 = vshll.u32 %v339, 16
      %v455 = vrot.slane %v453, 5
      %v456 = vor.u32 %v452, %v455
      %v457 = vrot.slane %v456, 4
      %v459 = vshll.u32 %v347, 16
      %v461 = vrot.slane %v459, 5
      %v462 = vsel %vm350, %v457, %v461
      %v471 = vunpack.c.l.b16 %v332
      %v472 = vunpack.c.l.b16 %v333
      %v473 = vunpack.c.l.b16 %v334
      %v474 = vunpack.c.l.b16 %v335
      %v475 = vunpack.c.l.b16 %v336
      %v476 = vunpack.c.l.b16 %v337
      %v477 = vunpack.c.l.b16 %v338
      %v478 = vunpack.c.l.b16 %v339
      %v479 = vpack.c.b16 %v472, %v471
      %v480 = vpack.c.b16 %v474, %v473
      %v481 = vpack.c.b16 %v476, %v475
      %v482 = vpack.c.b16 %v478, %v477
      %v483 = vunpack.c.l.b16 %v364
      %v484 = vunpack.c.l.b16 %v378
      %v485 = vunpack.c.l.b16 %v392
      %v486 = vunpack.c.l.b16 %v406
      %v487 = vunpack.c.l.b16 %v420
      %v488 = vunpack.c.l.b16 %v434
      %v489 = vunpack.c.l.b16 %v448
      %v490 = vunpack.c.l.b16 %v462
      %v491 = vpack.c.b16 %v484, %v483
      %v492 = vpack.c.b16 %v486, %v485
      %v493 = vpack.c.b16 %v488, %v487
      %v494 = vpack.c.b16 %v490, %v489
      %495 = vrot.lane.b32.xlu0 %v491, 32
      %v496 = vpop.permute.xlu0 %495
      %497 = vrot.lane.b32.xlu0 %v492, 32
      %v498 = vpop.permute.xlu0 %497
      %499 = vrot.lane.b32.xlu0 %v493, 32
      %v500 = vpop.permute.xlu0 %499
      %501 = vrot.lane.b32.xlu0 %v494, 32
      %v502 = vpop.permute.xlu0 %501
      %vm503 = vcmask 261120
      %v506 = vsel %vm503, %v479, %v496
      %v509 = vsel %vm503, %v480, %v498
      %v512 = vsel %vm503, %v481, %v500
      %v515 = vsel %vm503, %v482, %v502
      %vm516 = vcmask 392192
      %v518 = vsel %vm516, %v506, 0
      %v519 = vsel %vm516, %v509, 0
      %v520 = vsel %vm516, %v512, 0
      %v521 = vsel %vm516, %v515, 0
      %v526 = vunpack.c.l.b16 %v518
      %v527 = vunpack.c.h.b16 %v518
      %v528 = vunpack.c.l.b16 %v519
      %v529 = vunpack.c.h.b16 %v519
      %v530 = vunpack.c.l.b16 %v520
      %v531 = vunpack.c.h.b16 %v520
      %v532 = vunpack.c.l.b16 %v521
      %v533 = vunpack.c.h.b16 %v521
      %v534 = vpack.c.b16 %v526, %v526
      %v535 = vpack.c.b16 %v527, %v527
      %v536 = vpack.c.b16 %v528, %v528
      %v537 = vpack.c.b16 %v529, %v529
      %v538 = vpack.c.b16 %v530, %v530
      %v539 = vpack.c.b16 %v531, %v531
      %v540 = vpack.c.b16 %v532, %v532
      %v541 = vpack.c.b16 %v533, %v533
      %550 = vst [vmem:[#allocation2] sm:$0xf] %v534
      %551 = vst [vmem:[#allocation2 + $0x24] sm:$0xf] %v535
      %552 = vst [vmem:[#allocation2 + $0x48] sm:$0xf] %v536
      %553 = vst [vmem:[#allocation2 + $0x6c] sm:$0xf] %v537
      %554 = vst [vmem:[#allocation2 + $0x90] sm:$0xf] %v538
      %555 = vst [vmem:[#allocation2 + $0xb4] sm:$0xf] %v539
      %556 = vst [vmem:[#allocation2 + $0xd8] sm:$0xf] %v540
      %557 = vst [vmem:[#allocation2 + $0xfc] sm:$0xf] %v541
      %s558 = scalar_lea.vmem %s296, 8
      %v559 = vld [vmem:[%s558] sm:$0xf]
      %v560 = vld [vmem:[%s558 + $0x10] sm:$0xf]
      %v561 = vld [vmem:[%s558 + $0x20] sm:$0xf]
      %v562 = vld [vmem:[%s558 + $0x30] sm:$0xf]
      %v563 = vld [vmem:[%s558 + $0x40] sm:$0xf]
      %v564 = vld [vmem:[%s558 + $0x50] sm:$0xf]
      %v565 = vld [vmem:[%s558 + $0x60] sm:$0xf]
      %v566 = vld [vmem:[%s558 + $0x70] sm:$0xf]
      %v567 = vld [vmem:[%s558 + $0x4] sm:$0x1]
      %v568 = vld [vmem:[%s558 + $0x14] sm:$0x1]
      %v569 = vld [vmem:[%s558 + $0x24] sm:$0x1]
      %v570 = vld [vmem:[%s558 + $0x34] sm:$0x1]
      %v571 = vld [vmem:[%s558 + $0x44] sm:$0x1]
      %v572 = vld [vmem:[%s558 + $0x54] sm:$0x1]
      %v573 = vld [vmem:[%s558 + $0x64] sm:$0x1]
      %v574 = vld [vmem:[%s558 + $0x74] sm:$0x1]
      %v576 = vshrl.u32 %v559, 16
      %v578 = vrot.slane %v576, 4
      %v579 = vshll.u32 %v559, 16
      %v581 = vrot.slane %v579, 5
      %v582 = vor.u32 %v578, %v581
      %v583 = vrot.slane %v582, 4
      %v585 = vshll.u32 %v567, 16
      %v587 = vrot.slane %v585, 5
      %v588 = vsel %vm350, %v583, %v587
      %v590 = vshrl.u32 %v560, 16
      %v592 = vrot.slane %v590, 4
      %v593 = vshll.u32 %v560, 16
      %v595 = vrot.slane %v593, 5
      %v596 = vor.u32 %v592, %v595
      %v597 = vrot.slane %v596, 4
      %v599 = vshll.u32 %v568, 16
      %v601 = vrot.slane %v599, 5
      %v602 = vsel %vm350, %v597, %v601
      %v604 = vshrl.u32 %v561, 16
      %v606 = vrot.slane %v604, 4
      %v607 = vshll.u32 %v561, 16
      %v609 = vrot.slane %v607, 5
      %v610 = vor.u32 %v606, %v609
      %v611 = vrot.slane %v610, 4
      %v613 = vshll.u32 %v569, 16
      %v615 = vrot.slane %v613, 5
      %v616 = vsel %vm350, %v611, %v615
      %v618 = vshrl.u32 %v562, 16
      %v620 = vrot.slane %v618, 4
      %v621 = vshll.u32 %v562, 16
      %v623 = vrot.slane %v621, 5
      %v624 = vor.u32 %v620, %v623
      %v625 = vrot.slane %v624, 4
      %v627 = vshll.u32 %v570, 16
      %v629 = vrot.slane %v627, 5
      %v630 = vsel %vm350, %v625, %v629
      %v632 = vshrl.u32 %v563, 16
      %v634 = vrot.slane %v632, 4
      %v635 = vshll.u32 %v563, 16
      %v637 = vrot.slane %v635, 5
      %v638 = vor.u32 %v634, %v637
      %v639 = vrot.slane %v638, 4
      %v641 = vshll.u32 %v571, 16
      %v643 = vrot.slane %v641, 5
      %v644 = vsel %vm350, %v639, %v643
      %v646 = vshrl.u32 %v564, 16
      %v648 = vrot.slane %v646, 4
      %v649 = vshll.u32 %v564, 16
      %v651 = vrot.slane %v649, 5
      %v652 = vor.u32 %v648, %v651
      %v653 = vrot.slane %v652, 4
      %v655 = vshll.u32 %v572, 16
      %v657 = vrot.slane %v655, 5
      %v658 = vsel %vm350, %v653, %v657
      %v660 = vshrl.u32 %v565, 16
      %v662 = vrot.slane %v660, 4
      %v663 = vshll.u32 %v565, 16
      %v665 = vrot.slane %v663, 5
      %v666 = vor.u32 %v662, %v665
      %v667 = vrot.slane %v666, 4
      %v669 = vshll.u32 %v573, 16
      %v671 = vrot.slane %v669, 5
      %v672 = vsel %vm350, %v667, %v671
      %v674 = vshrl.u32 %v566, 16
      %v676 = vrot.slane %v674, 4
      %v677 = vshll.u32 %v566, 16
      %v679 = vrot.slane %v677, 5
      %v680 = vor.u32 %v676, %v679
      %v681 = vrot.slane %v680, 4
      %v683 = vshll.u32 %v574, 16
      %v685 = vrot.slane %v683, 5
      %v686 = vsel %vm350, %v681, %v685
      %v695 = vunpack.c.l.b16 %v559
      %v696 = vunpack.c.l.b16 %v560
      %v697 = vunpack.c.l.b16 %v561
      %v698 = vunpack.c.l.b16 %v562
      %v699 = vunpack.c.l.b16 %v563
      %v700 = vunpack.c.l.b16 %v564
      %v701 = vunpack.c.l.b16 %v565
      %v702 = vunpack.c.l.b16 %v566
      %v703 = vpack.c.b16 %v696, %v695
      %v704 = vpack.c.b16 %v698, %v697
      %v705 = vpack.c.b16 %v700, %v699
      %v706 = vpack.c.b16 %v702, %v701
      %v707 = vunpack.c.l.b16 %v588
      %v708 = vunpack.c.l.b16 %v602
      %v709 = vunpack.c.l.b16 %v616
      %v710 = vunpack.c.l.b16 %v630
      %v711 = vunpack.c.l.b16 %v644
      %v712 = vunpack.c.l.b16 %v658
      %v713 = vunpack.c.l.b16 %v672
      %v714 = vunpack.c.l.b16 %v686
      %v715 = vpack.c.b16 %v708, %v707
      %v716 = vpack.c.b16 %v710, %v709
      %v717 = vpack.c.b16 %v712, %v711
      %v718 = vpack.c.b16 %v714, %v713
      %719 = vrot.lane.b32.xlu0 %v715, 32
      %v720 = vpop.permute.xlu0 %719
      %721 = vrot.lane.b32.xlu0 %v716, 32
      %v722 = vpop.permute.xlu0 %721
      %723 = vrot.lane.b32.xlu0 %v717, 32
      %v724 = vpop.permute.xlu0 %723
      %725 = vrot.lane.b32.xlu0 %v718, 32
      %v726 = vpop.permute.xlu0 %725
      %v729 = vsel %vm503, %v703, %v720
      %v732 = vsel %vm503, %v704, %v722
      %v735 = vsel %vm503, %v705, %v724
      %v738 = vsel %vm503, %v706, %v726
      %v739 = vsel %vm516, %v729, 0
      %v740 = vsel %vm516, %v732, 0
      %v741 = vsel %vm516, %v735, 0
      %v742 = vsel %vm516, %v738, 0
      %v747 = vunpack.c.l.b16 %v739
      %v748 = vunpack.c.h.b16 %v739
      %v749 = vunpack.c.l.b16 %v740
      %v750 = vunpack.c.h.b16 %v740
      %v751 = vunpack.c.l.b16 %v741
      %v752 = vunpack.c.h.b16 %v741
      %v753 = vunpack.c.l.b16 %v742
      %v754 = vunpack.c.h.b16 %v742
      %v755 = vpack.c.b16 %v747, %v747
      %v756 = vpack.c.b16 %v748, %v748
      %v757 = vpack.c.b16 %v749, %v749
      %v758 = vpack.c.b16 %v750, %v750
      %v759 = vpack.c.b16 %v751, %v751
      %v760 = vpack.c.b16 %v752, %v752
      %v761 = vpack.c.b16 %v753, %v753
      %v762 = vpack.c.b16 %v754, %v754
      %771 = vst [vmem:[#allocation2 + $0x4] sm:$0xf] %v755
      %772 = vst [vmem:[#allocation2 + $0x28] sm:$0xf] %v756
      %773 = vst [vmem:[#allocation2 + $0x4c] sm:$0xf] %v757
      %774 = vst [vmem:[#allocation2 + $0x70] sm:$0xf] %v758
      %775 = vst [vmem:[#allocation2 + $0x94] sm:$0xf] %v759
      %776 = vst [vmem:[#allocation2 + $0xb8] sm:$0xf] %v760
      %777 = vst [vmem:[#allocation2 + $0xdc] sm:$0xf] %v761
      %778 = vst [vmem:[#allocation2 + $0x100] sm:$0xf] %v762
      %s779 = scalar_lea.vmem %s296, 16
      %v780 = vld [vmem:[%s779] sm:$0xf]
      %v781 = vld [vmem:[%s779 + $0x10] sm:$0xf]
      %v782 = vld [vmem:[%s779 + $0x20] sm:$0xf]
      %v783 = vld [vmem:[%s779 + $0x30] sm:$0xf]
      %v784 = vld [vmem:[%s779 + $0x40] sm:$0xf]
      %v785 = vld [vmem:[%s779 + $0x50] sm:$0xf]
      %v786 = vld [vmem:[%s779 + $0x60] sm:$0xf]
      %v787 = vld [vmem:[%s779 + $0x70] sm:$0xf]
      %v788 = vld [vmem:[%s779 + $0x4] sm:$0x1]
      %v789 = vld [vmem:[%s779 + $0x14] sm:$0x1]
      %v790 = vld [vmem:[%s779 + $0x24] sm:$0x1]
      %v791 = vld [vmem:[%s779 + $0x34] sm:$0x1]
      %v792 = vld [vmem:[%s779 + $0x44] sm:$0x1]
      %v793 = vld [vmem:[%s779 + $0x54] sm:$0x1]
      %v794 = vld [vmem:[%s779 + $0x64] sm:$0x1]
      %v795 = vld [vmem:[%s779 + $0x74] sm:$0x1]
      %v797 = vshrl.u32 %v780, 16
      %v799 = vrot.slane %v797, 4
      %v800 = vshll.u32 %v780, 16
      %v802 = vrot.slane %v800, 5
      %v803 = vor.u32 %v799, %v802
      %v804 = vrot.slane %v803, 4
      %v806 = vshll.u32 %v788, 16
      %v808 = vrot.slane %v806, 5
      %v809 = vsel %vm350, %v804, %v808
      %v811 = vshrl.u32 %v781, 16
      %v813 = vrot.slane %v811, 4
      %v814 = vshll.u32 %v781, 16
      %v816 = vrot.slane %v814, 5
      %v817 = vor.u32 %v813, %v816
      %v818 = vrot.slane %v817, 4
      %v820 = vshll.u32 %v789, 16
      %v822 = vrot.slane %v820, 5
      %v823 = vsel %vm350, %v818, %v822
      %v825 = vshrl.u32 %v782, 16
      %v827 = vrot.slane %v825, 4
      %v828 = vshll.u32 %v782, 16
      %v830 = vrot.slane %v828, 5
      %v831 = vor.u32 %v827, %v830
      %v832 = vrot.slane %v831, 4
      %v834 = vshll.u32 %v790, 16
      %v836 = vrot.slane %v834, 5
      %v837 = vsel %vm350, %v832, %v836
      %v839 = vshrl.u32 %v783, 16
      %v841 = vrot.slane %v839, 4
      %v842 = vshll.u32 %v783, 16
      %v844 = vrot.slane %v842, 5
      %v845 = vor.u32 %v841, %v844
      %v846 = vrot.slane %v845, 4
      %v848 = vshll.u32 %v791, 16
      %v850 = vrot.slane %v848, 5
      %v851 = vsel %vm350, %v846, %v850
      %v853 = vshrl.u32 %v784, 16
      %v855 = vrot.slane %v853, 4
      %v856 = vshll.u32 %v784, 16
      %v858 = vrot.slane %v856, 5
      %v859 = vor.u32 %v855, %v858
      %v860 = vrot.slane %v859, 4
      %v862 = vshll.u32 %v792, 16
      %v864 = vrot.slane %v862, 5
      %v865 = vsel %vm350, %v860, %v864
      %v867 = vshrl.u32 %v785, 16
      %v869 = vrot.slane %v867, 4
      %v870 = vshll.u32 %v785, 16
      %v872 = vrot.slane %v870, 5
      %v873 = vor.u32 %v869, %v872
      %v874 = vrot.slane %v873, 4
      %v876 = vshll.u32 %v793, 16
      %v878 = vrot.slane %v876, 5
      %v879 = vsel %vm350, %v874, %v878
      %v881 = vshrl.u32 %v786, 16
      %v883 = vrot.slane %v881, 4
      %v884 = vshll.u32 %v786, 16
      %v886 = vrot.slane %v884, 5
      %v887 = vor.u32 %v883, %v886
      %v888 = vrot.slane %v887, 4
      %v890 = vshll.u32 %v794, 16
      %v892 = vrot.slane %v890, 5
      %v893 = vsel %vm350, %v888, %v892
      %v895 = vshrl.u32 %v787, 16
      %v897 = vrot.slane %v895, 4
      %v898 = vshll.u32 %v787, 16
      %v900 = vrot.slane %v898, 5
      %v901 = vor.u32 %v897, %v900
      %v902 = vrot.slane %v901, 4
      %v904 = vshll.u32 %v795, 16
      %v906 = vrot.slane %v904, 5
      %v907 = vsel %vm350, %v902, %v906
      %v916 = vunpack.c.l.b16 %v780
      %v917 = vunpack.c.l.b16 %v781
      %v918 = vunpack.c.l.b16 %v782
      %v919 = vunpack.c.l.b16 %v783
      %v920 = vunpack.c.l.b16 %v784
      %v921 = vunpack.c.l.b16 %v785
      %v922 = vunpack.c.l.b16 %v786
      %v923 = vunpack.c.l.b16 %v787
      %v924 = vpack.c.b16 %v917, %v916
      %v925 = vpack.c.b16 %v919, %v918
      %v926 = vpack.c.b16 %v921, %v920
      %v927 = vpack.c.b16 %v923, %v922
      %v928 = vunpack.c.l.b16 %v809
      %v929 = vunpack.c.l.b16 %v823
      %v930 = vunpack.c.l.b16 %v837
      %v931 = vunpack.c.l.b16 %v851
      %v932 = vunpack.c.l.b16 %v865
      %v933 = vunpack.c.l.b16 %v879
      %v934 = vunpack.c.l.b16 %v893
      %v935 = vunpack.c.l.b16 %v907
      %v936 = vpack.c.b16 %v929, %v928
      %v937 = vpack.c.b16 %v931, %v930
      %v938 = vpack.c.b16 %v933, %v932
      %v939 = vpack.c.b16 %v935, %v934
      %940 = vrot.lane.b32.xlu0 %v936, 32
      %v941 = vpop.permute.xlu0 %940
      %942 = vrot.lane.b32.xlu0 %v937, 32
      %v943 = vpop.permute.xlu0 %942
      %944 = vrot.lane.b32.xlu0 %v938, 32
      %v945 = vpop.permute.xlu0 %944
      %946 = vrot.lane.b32.xlu0 %v939, 32
      %v947 = vpop.permute.xlu0 %946
      %v950 = vsel %vm503, %v924, %v941
      %v953 = vsel %vm503, %v925, %v943
      %v956 = vsel %vm503, %v926, %v945
      %v959 = vsel %vm503, %v927, %v947
      %v960 = vsel %vm516, %v950, 0
      %v961 = vsel %vm516, %v953, 0
      %v962 = vsel %vm516, %v956, 0
      %v963 = vsel %vm516, %v959, 0
      %v968 = vunpack.c.l.b16 %v960
      %v969 = vunpack.c.h.b16 %v960
      %v970 = vunpack.c.l.b16 %v961
      %v971 = vunpack.c.h.b16 %v961
      %v972 = vunpack.c.l.b16 %v962
      %v973 = vunpack.c.h.b16 %v962
      %v974 = vunpack.c.l.b16 %v963
      %v975 = vunpack.c.h.b16 %v963
      %v976 = vpack.c.b16 %v968, %v968
      %v977 = vpack.c.b16 %v969, %v969
      %v978 = vpack.c.b16 %v970, %v970
      %v979 = vpack.c.b16 %v971, %v971
      %v980 = vpack.c.b16 %v972, %v972
      %v981 = vpack.c.b16 %v973, %v973
      %v982 = vpack.c.b16 %v974, %v974
      %v983 = vpack.c.b16 %v975, %v975
      %992 = vst [vmem:[#allocation2 + $0x8] sm:$0xf] %v976
      %993 = vst [vmem:[#allocation2 + $0x2c] sm:$0xf] %v977
      %994 = vst [vmem:[#allocation2 + $0x50] sm:$0xf] %v978
      %995 = vst [vmem:[#allocation2 + $0x74] sm:$0xf] %v979
      %996 = vst [vmem:[#allocation2 + $0x98] sm:$0xf] %v980
      %997 = vst [vmem:[#allocation2 + $0xbc] sm:$0xf] %v981
      %998 = vst [vmem:[#allocation2 + $0xe0] sm:$0xf] %v982
      %999 = vst [vmem:[#allocation2 + $0x104] sm:$0xf] %v983
      %s1000 = scalar_lea.vmem %s296, 144
      %v1001 = vld [vmem:[%s1000] sm:$0xf]
      %v1002 = vld [vmem:[%s1000 + $0x10] sm:$0xf]
      %v1003 = vld [vmem:[%s1000 + $0x20] sm:$0xf]
      %v1004 = vld [vmem:[%s1000 + $0x30] sm:$0xf]
      %v1005 = vld [vmem:[%s1000 + $0x40] sm:$0xf]
      %v1006 = vld [vmem:[%s1000 + $0x50] sm:$0xf]
      %v1007 = vld [vmem:[%s1000 + $0x60] sm:$0xf]
      %v1008 = vld [vmem:[%s1000 + $0x70] sm:$0xf]
      %v1009 = vld [vmem:[%s1000 + $0x4] sm:$0x1]
      %v1010 = vld [vmem:[%s1000 + $0x14] sm:$0x1]
      %v1011 = vld [vmem:[%s1000 + $0x24] sm:$0x1]
      %v1012 = vld [vmem:[%s1000 + $0x34] sm:$0x1]
      %v1013 = vld [vmem:[%s1000 + $0x44] sm:$0x1]
      %v1014 = vld [vmem:[%s1000 + $0x54] sm:$0x1]
      %v1015 = vld [vmem:[%s1000 + $0x64] sm:$0x1]
      %v1016 = vld [vmem:[%s1000 + $0x74] sm:$0x1]
      %v1018 = vshrl.u32 %v1001, 16
      %v1020 = vrot.slane %v1018, 4
      %v1021 = vshll.u32 %v1001, 16
      %v1023 = vrot.slane %v1021, 5
      %v1024 = vor.u32 %v1020, %v1023
      %v1025 = vrot.slane %v1024, 4
      %v1027 = vshll.u32 %v1009, 16
      %v1029 = vrot.slane %v1027, 5
      %v1030 = vsel %vm350, %v1025, %v1029
      %v1032 = vshrl.u32 %v1002, 16
      %v1034 = vrot.slane %v1032, 4
      %v1035 = vshll.u32 %v1002, 16
      %v1037 = vrot.slane %v1035, 5
      %v1038 = vor.u32 %v1034, %v1037
      %v1039 = vrot.slane %v1038, 4
      %v1041 = vshll.u32 %v1010, 16
      %v1043 = vrot.slane %v1041, 5
      %v1044 = vsel %vm350, %v1039, %v1043
      %v1046 = vshrl.u32 %v1003, 16
      %v1048 = vrot.slane %v1046, 4
      %v1049 = vshll.u32 %v1003, 16
      %v1051 = vrot.slane %v1049, 5
      %v1052 = vor.u32 %v1048, %v1051
      %v1053 = vrot.slane %v1052, 4
      %v1055 = vshll.u32 %v1011, 16
      %v1057 = vrot.slane %v1055, 5
      %v1058 = vsel %vm350, %v1053, %v1057
      %v1060 = vshrl.u32 %v1004, 16
      %v1062 = vrot.slane %v1060, 4
      %v1063 = vshll.u32 %v1004, 16
      %v1065 = vrot.slane %v1063, 5
      %v1066 = vor.u32 %v1062, %v1065
      %v1067 = vrot.slane %v1066, 4
      %v1069 = vshll.u32 %v1012, 16
      %v1071 = vrot.slane %v1069, 5
      %v1072 = vsel %vm350, %v1067, %v1071
      %v1074 = vshrl.u32 %v1005, 16
      %v1076 = vrot.slane %v1074, 4
      %v1077 = vshll.u32 %v1005, 16
      %v1079 = vrot.slane %v1077, 5
      %v1080 = vor.u32 %v1076, %v1079
      %v1081 = vrot.slane %v1080, 4
      %v1083 = vshll.u32 %v1013, 16
      %v1085 = vrot.slane %v1083, 5
      %v1086 = vsel %vm350, %v1081, %v1085
      %v1088 = vshrl.u32 %v1006, 16
      %v1090 = vrot.slane %v1088, 4
      %v1091 = vshll.u32 %v1006, 16
      %v1093 = vrot.slane %v1091, 5
      %v1094 = vor.u32 %v1090, %v1093
      %v1095 = vrot.slane %v1094, 4
      %v1097 = vshll.u32 %v1014, 16
      %v1099 = vrot.slane %v1097, 5
      %v1100 = vsel %vm350, %v1095, %v1099
      %v1102 = vshrl.u32 %v1007, 16
      %v1104 = vrot.slane %v1102, 4
      %v1105 = vshll.u32 %v1007, 16
      %v1107 = vrot.slane %v1105, 5
      %v1108 = vor.u32 %v1104, %v1107
      %v1109 = vrot.slane %v1108, 4
      %v1111 = vshll.u32 %v1015, 16
      %v1113 = vrot.slane %v1111, 5
      %v1114 = vsel %vm350, %v1109, %v1113
      %v1116 = vshrl.u32 %v1008, 16
      %v1118 = vrot.slane %v1116, 4
      %v1119 = vshll.u32 %v1008, 16
      %v1121 = vrot.slane %v1119, 5
      %v1122 = vor.u32 %v1118, %v1121
      %v1123 = vrot.slane %v1122, 4
      %v1125 = vshll.u32 %v1016, 16
      %v1127 = vrot.slane %v1125, 5
      %v1128 = vsel %vm350, %v1123, %v1127
      %v1137 = vunpack.c.l.b16 %v1001
      %v1138 = vunpack.c.l.b16 %v1002
      %v1139 = vunpack.c.l.b16 %v1003
      %v1140 = vunpack.c.l.b16 %v1004
      %v1141 = vunpack.c.l.b16 %v1005
      %v1142 = vunpack.c.l.b16 %v1006
      %v1143 = vunpack.c.l.b16 %v1007
      %v1144 = vunpack.c.l.b16 %v1008
      %v1145 = vpack.c.b16 %v1138, %v1137
      %v1146 = vpack.c.b16 %v1140, %v1139
      %v1147 = vpack.c.b16 %v1142, %v1141
      %v1148 = vpack.c.b16 %v1144, %v1143
      %v1149 = vunpack.c.l.b16 %v1030
      %v1150 = vunpack.c.l.b16 %v1044
      %v1151 = vunpack.c.l.b16 %v1058
      %v1152 = vunpack.c.l.b16 %v1072
      %v1153 = vunpack.c.l.b16 %v1086
      %v1154 = vunpack.c.l.b16 %v1100
      %v1155 = vunpack.c.l.b16 %v1114
      %v1156 = vunpack.c.l.b16 %v1128
      %v1157 = vpack.c.b16 %v1150, %v1149
      %v1158 = vpack.c.b16 %v1152, %v1151
      %v1159 = vpack.c.b16 %v1154, %v1153
      %v1160 = vpack.c.b16 %v1156, %v1155
      %1161 = vrot.lane.b32.xlu0 %v1157, 32
      %v1162 = vpop.permute.xlu0 %1161
      %1163 = vrot.lane.b32.xlu0 %v1158, 32
      %v1164 = vpop.permute.xlu0 %1163
      %1165 = vrot.lane.b32.xlu0 %v1159, 32
      %v1166 = vpop.permute.xlu0 %1165
      %1167 = vrot.lane.b32.xlu0 %v1160, 32
      %v1168 = vpop.permute.xlu0 %1167
      %v1171 = vsel %vm503, %v1145, %v1162
      %v1174 = vsel %vm503, %v1146, %v1164
      %v1177 = vsel %vm503, %v1147, %v1166
      %v1180 = vsel %vm503, %v1148, %v1168
      %v1181 = vsel %vm516, %v1171, 0
      %v1182 = vsel %vm516, %v1174, 0
      %v1183 = vsel %vm516, %v1177, 0
      %v1184 = vsel %vm516, %v1180, 0
      %v1189 = vunpack.c.l.b16 %v1181
      %v1190 = vunpack.c.h.b16 %v1181
      %v1191 = vunpack.c.l.b16 %v1182
      %v1192 = vunpack.c.h.b16 %v1182
      %v1193 = vunpack.c.l.b16 %v1183
      %v1194 = vunpack.c.h.b16 %v1183
      %v1195 = vunpack.c.l.b16 %v1184
      %v1196 = vunpack.c.h.b16 %v1184
      %v1197 = vpack.c.b16 %v1189, %v1189
      %v1198 = vpack.c.b16 %v1190, %v1190
      %v1199 = vpack.c.b16 %v1191, %v1191
      %v1200 = vpack.c.b16 %v1192, %v1192
      %v1201 = vpack.c.b16 %v1193, %v1193
      %v1202 = vpack.c.b16 %v1194, %v1194
      %v1203 = vpack.c.b16 %v1195, %v1195
      %v1204 = vpack.c.b16 %v1196, %v1196
      %1213 = vst [vmem:[#allocation2 + $0xc] sm:$0xf] %v1197
      %1214 = vst [vmem:[#allocation2 + $0x30] sm:$0xf] %v1198
      %1215 = vst [vmem:[#allocation2 + $0x54] sm:$0xf] %v1199
      %1216 = vst [vmem:[#allocation2 + $0x78] sm:$0xf] %v1200
      %1217 = vst [vmem:[#allocation2 + $0x9c] sm:$0xf] %v1201
      %1218 = vst [vmem:[#allocation2 + $0xc0] sm:$0xf] %v1202
      %1219 = vst [vmem:[#allocation2 + $0xe4] sm:$0xf] %v1203
      %1220 = vst [vmem:[#allocation2 + $0x108] sm:$0xf] %v1204
      %s1221 = scalar_lea.vmem %s296, 152
      %v1222 = vld [vmem:[%s1221] sm:$0xf]
      %v1223 = vld [vmem:[%s1221 + $0x10] sm:$0xf]
      %v1224 = vld [vmem:[%s1221 + $0x20] sm:$0xf]
      %v1225 = vld [vmem:[%s1221 + $0x30] sm:$0xf]
      %v1226 = vld [vmem:[%s1221 + $0x40] sm:$0xf]
      %v1227 = vld [vmem:[%s1221 + $0x50] sm:$0xf]
      %v1228 = vld [vmem:[%s1221 + $0x60] sm:$0xf]
      %v1229 = vld [vmem:[%s1221 + $0x70] sm:$0xf]
      %v1230 = vld [vmem:[%s1221 + $0x4] sm:$0x1]
      %v1231 = vld [vmem:[%s1221 + $0x14] sm:$0x1]
      %v1232 = vld [vmem:[%s1221 + $0x24] sm:$0x1]
      %v1233 = vld [vmem:[%s1221 + $0x34] sm:$0x1]
      %v1234 = vld [vmem:[%s1221 + $0x44] sm:$0x1]
      %v1235 = vld [vmem:[%s1221 + $0x54] sm:$0x1]
      %v1236 = vld [vmem:[%s1221 + $0x64] sm:$0x1]
      %v1237 = vld [vmem:[%s1221 + $0x74] sm:$0x1]
      %v1239 = vshrl.u32 %v1222, 16
      %v1241 = vrot.slane %v1239, 4
      %v1242 = vshll.u32 %v1222, 16
      %v1244 = vrot.slane %v1242, 5
      %v1245 = vor.u32 %v1241, %v1244
      %v1246 = vrot.slane %v1245, 4
      %v1248 = vshll.u32 %v1230, 16
      %v1250 = vrot.slane %v1248, 5
      %v1251 = vsel %vm350, %v1246, %v1250
      %v1253 = vshrl.u32 %v1223, 16
      %v1255 = vrot.slane %v1253, 4
      %v1256 = vshll.u32 %v1223, 16
      %v1258 = vrot.slane %v1256, 5
      %v1259 = vor.u32 %v1255, %v1258
      %v1260 = vrot.slane %v1259, 4
      %v1262 = vshll.u32 %v1231, 16
      %v1264 = vrot.slane %v1262, 5
      %v1265 = vsel %vm350, %v1260, %v1264
      %v1267 = vshrl.u32 %v1224, 16
      %v1269 = vrot.slane %v1267, 4
      %v1270 = vshll.u32 %v1224, 16
      %v1272 = vrot.slane %v1270, 5
      %v1273 = vor.u32 %v1269, %v1272
      %v1274 = vrot.slane %v1273, 4
      %v1276 = vshll.u32 %v1232, 16
      %v1278 = vrot.slane %v1276, 5
      %v1279 = vsel %vm350, %v1274, %v1278
      %v1281 = vshrl.u32 %v1225, 16
      %v1283 = vrot.slane %v1281, 4
      %v1284 = vshll.u32 %v1225, 16
      %v1286 = vrot.slane %v1284, 5
      %v1287 = vor.u32 %v1283, %v1286
      %v1288 = vrot.slane %v1287, 4
      %v1290 = vshll.u32 %v1233, 16
      %v1292 = vrot.slane %v1290, 5
      %v1293 = vsel %vm350, %v1288, %v1292
      %v1295 = vshrl.u32 %v1226, 16
      %v1297 = vrot.slane %v1295, 4
      %v1298 = vshll.u32 %v1226, 16
      %v1300 = vrot.slane %v1298, 5
      %v1301 = vor.u32 %v1297, %v1300
      %v1302 = vrot.slane %v1301, 4
      %v1304 = vshll.u32 %v1234, 16
      %v1306 = vrot.slane %v1304, 5
      %v1307 = vsel %vm350, %v1302, %v1306
      %v1309 = vshrl.u32 %v1227, 16
      %v1311 = vrot.slane %v1309, 4
      %v1312 = vshll.u32 %v1227, 16
      %v1314 = vrot.slane %v1312, 5
      %v1315 = vor.u32 %v1311, %v1314
      %v1316 = vrot.slane %v1315, 4
      %v1318 = vshll.u32 %v1235, 16
      %v1320 = vrot.slane %v1318, 5
      %v1321 = vsel %vm350, %v1316, %v1320
      %v1323 = vshrl.u32 %v1228, 16
      %v1325 = vrot.slane %v1323, 4
      %v1326 = vshll.u32 %v1228, 16
      %v1328 = vrot.slane %v1326, 5
      %v1329 = vor.u32 %v1325, %v1328
      %v1330 = vrot.slane %v1329, 4
      %v1332 = vshll.u32 %v1236, 16
      %v1334 = vrot.slane %v1332, 5
      %v1335 = vsel %vm350, %v1330, %v1334
      %v1337 = vshrl.u32 %v1229, 16
      %v1339 = vrot.slane %v1337, 4
      %v1340 = vshll.u32 %v1229, 16
      %v1342 = vrot.slane %v1340, 5
      %v1343 = vor.u32 %v1339, %v1342
      %v1344 = vrot.slane %v1343, 4
      %v1346 = vshll.u32 %v1237, 16
      %v1348 = vrot.slane %v1346, 5
      %v1349 = vsel %vm350, %v1344, %v1348
      %v1358 = vunpack.c.l.b16 %v1222
      %v1359 = vunpack.c.l.b16 %v1223
      %v1360 = vunpack.c.l.b16 %v1224
      %v1361 = vunpack.c.l.b16 %v1225
      %v1362 = vunpack.c.l.b16 %v1226
      %v1363 = vunpack.c.l.b16 %v1227
      %v1364 = vunpack.c.l.b16 %v1228
      %v1365 = vunpack.c.l.b16 %v1229
      %v1366 = vpack.c.b16 %v1359, %v1358
      %v1367 = vpack.c.b16 %v1361, %v1360
      %v1368 = vpack.c.b16 %v1363, %v1362
      %v1369 = vpack.c.b16 %v1365, %v1364
      %v1370 = vunpack.c.l.b16 %v1251
      %v1371 = vunpack.c.l.b16 %v1265
      %v1372 = vunpack.c.l.b16 %v1279
      %v1373 = vunpack.c.l.b16 %v1293
      %v1374 = vunpack.c.l.b16 %v1307
      %v1375 = vunpack.c.l.b16 %v1321
      %v1376 = vunpack.c.l.b16 %v1335
      %v1377 = vunpack.c.l.b16 %v1349
      %v1378 = vpack.c.b16 %v1371, %v1370
      %v1379 = vpack.c.b16 %v1373, %v1372
      %v1380 = vpack.c.b16 %v1375, %v1374
      %v1381 = vpack.c.b16 %v1377, %v1376
      %1382 = vrot.lane.b32.xlu0 %v1378, 32
      %v1383 = vpop.permute.xlu0 %1382
      %1384 = vrot.lane.b32.xlu0 %v1379, 32
      %v1385 = vpop.permute.xlu0 %1384
      %1386 = vrot.lane.b32.xlu0 %v1380, 32
      %v1387 = vpop.permute.xlu0 %1386
      %1388 = vrot.lane.b32.xlu0 %v1381, 32
      %v1389 = vpop.permute.xlu0 %1388
      %v1392 = vsel %vm503, %v1366, %v1383
      %v1395 = vsel %vm503, %v1367, %v1385
      %v1398 = vsel %vm503, %v1368, %v1387
      %v1401 = vsel %vm503, %v1369, %v1389
      %v1402 = vsel %vm516, %v1392, 0
      %v1403 = vsel %vm516, %v1395, 0
      %v1404 = vsel %vm516, %v1398, 0
      %v1405 = vsel %vm516, %v1401, 0
      %v1410 = vunpack.c.l.b16 %v1402
      %v1411 = vunpack.c.h.b16 %v1402
      %v1412 = vunpack.c.l.b16 %v1403
      %v1413 = vunpack.c.h.b16 %v1403
      %v1414 = vunpack.c.l.b16 %v1404
      %v1415 = vunpack.c.h.b16 %v1404
      %v1416 = vunpack.c.l.b16 %v1405
      %v1417 = vunpack.c.h.b16 %v1405
      %v1418 = vpack.c.b16 %v1410, %v1410
      %v1419 = vpack.c.b16 %v1411, %v1411
      %v1420 = vpack.c.b16 %v1412, %v1412
      %v1421 = vpack.c.b16 %v1413, %v1413
      %v1422 = vpack.c.b16 %v1414, %v1414
      %v1423 = vpack.c.b16 %v1415, %v1415
      %v1424 = vpack.c.b16 %v1416, %v1416
      %v1425 = vpack.c.b16 %v1417, %v1417
      %1434 = vst [vmem:[#allocation2 + $0x10] sm:$0xf] %v1418
      %1435 = vst [vmem:[#allocation2 + $0x34] sm:$0xf] %v1419
      %1436 = vst [vmem:[#allocation2 + $0x58] sm:$0xf] %v1420
      %1437 = vst [vmem:[#allocation2 + $0x7c] sm:$0xf] %v1421
      %1438 = vst [vmem:[#allocation2 + $0xa0] sm:$0xf] %v1422
      %1439 = vst [vmem:[#allocation2 + $0xc4] sm:$0xf] %v1423
      %1440 = vst [vmem:[#allocation2 + $0xe8] sm:$0xf] %v1424
      %1441 = vst [vmem:[#allocation2 + $0x10c] sm:$0xf] %v1425
      %s1442 = scalar_lea.vmem %s296, 160
      %v1443 = vld [vmem:[%s1442] sm:$0xf]
      %v1444 = vld [vmem:[%s1442 + $0x10] sm:$0xf]
      %v1445 = vld [vmem:[%s1442 + $0x20] sm:$0xf]
      %v1446 = vld [vmem:[%s1442 + $0x30] sm:$0xf]
      %v1447 = vld [vmem:[%s1442 + $0x40] sm:$0xf]
      %v1448 = vld [vmem:[%s1442 + $0x50] sm:$0xf]
      %v1449 = vld [vmem:[%s1442 + $0x60] sm:$0xf]
      %v1450 = vld [vmem:[%s1442 + $0x70] sm:$0xf]
      %v1451 = vld [vmem:[%s1442 + $0x4] sm:$0x1]
      %v1452 = vld [vmem:[%s1442 + $0x14] sm:$0x1]
      %v1453 = vld [vmem:[%s1442 + $0x24] sm:$0x1]
      %v1454 = vld [vmem:[%s1442 + $0x34] sm:$0x1]
      %v1455 = vld [vmem:[%s1442 + $0x44] sm:$0x1]
      %v1456 = vld [vmem:[%s1442 + $0x54] sm:$0x1]
      %v1457 = vld [vmem:[%s1442 + $0x64] sm:$0x1]
      %v1458 = vld [vmem:[%s1442 + $0x74] sm:$0x1]
      %v1460 = vshrl.u32 %v1443, 16
      %v1462 = vrot.slane %v1460, 4
      %v1463 = vshll.u32 %v1443, 16
      %v1465 = vrot.slane %v1463, 5
      %v1466 = vor.u32 %v1462, %v1465
      %v1467 = vrot.slane %v1466, 4
      %v1469 = vshll.u32 %v1451, 16
      %v1471 = vrot.slane %v1469, 5
      %v1472 = vsel %vm350, %v1467, %v1471
      %v1474 = vshrl.u32 %v1444, 16
      %v1476 = vrot.slane %v1474, 4
      %v1477 = vshll.u32 %v1444, 16
      %v1479 = vrot.slane %v1477, 5
      %v1480 = vor.u32 %v1476, %v1479
      %v1481 = vrot.slane %v1480, 4
      %v1483 = vshll.u32 %v1452, 16
      %v1485 = vrot.slane %v1483, 5
      %v1486 = vsel %vm350, %v1481, %v1485
      %v1488 = vshrl.u32 %v1445, 16
      %v1490 = vrot.slane %v1488, 4
      %v1491 = vshll.u32 %v1445, 16
      %v1493 = vrot.slane %v1491, 5
      %v1494 = vor.u32 %v1490, %v1493
      %v1495 = vrot.slane %v1494, 4
      %v1497 = vshll.u32 %v1453, 16
      %v1499 = vrot.slane %v1497, 5
      %v1500 = vsel %vm350, %v1495, %v1499
      %v1502 = vshrl.u32 %v1446, 16
      %v1504 = vrot.slane %v1502, 4
      %v1505 = vshll.u32 %v1446, 16
      %v1507 = vrot.slane %v1505, 5
      %v1508 = vor.u32 %v1504, %v1507
      %v1509 = vrot.slane %v1508, 4
      %v1511 = vshll.u32 %v1454, 16
      %v1513 = vrot.slane %v1511, 5
      %v1514 = vsel %vm350, %v1509, %v1513
      %v1516 = vshrl.u32 %v1447, 16
      %v1518 = vrot.slane %v1516, 4
      %v1519 = vshll.u32 %v1447, 16
      %v1521 = vrot.slane %v1519, 5
      %v1522 = vor.u32 %v1518, %v1521
      %v1523 = vrot.slane %v1522, 4
      %v1525 = vshll.u32 %v1455, 16
      %v1527 = vrot.slane %v1525, 5
      %v1528 = vsel %vm350, %v1523, %v1527
      %v1530 = vshrl.u32 %v1448, 16
      %v1532 = vrot.slane %v1530, 4
      %v1533 = vshll.u32 %v1448, 16
      %v1535 = vrot.slane %v1533, 5
      %v1536 = vor.u32 %v1532, %v1535
      %v1537 = vrot.slane %v1536, 4
      %v1539 = vshll.u32 %v1456, 16
      %v1541 = vrot.slane %v1539, 5
      %v1542 = vsel %vm350, %v1537, %v1541
      %v1544 = vshrl.u32 %v1449, 16
      %v1546 = vrot.slane %v1544, 4
      %v1547 = vshll.u32 %v1449, 16
      %v1549 = vrot.slane %v1547, 5
      %v1550 = vor.u32 %v1546, %v1549
      %v1551 = vrot.slane %v1550, 4
      %v1553 = vshll.u32 %v1457, 16
      %v1555 = vrot.slane %v1553, 5
      %v1556 = vsel %vm350, %v1551, %v1555
      %v1558 = vshrl.u32 %v1450, 16
      %v1560 = vrot.slane %v1558, 4
      %v1561 = vshll.u32 %v1450, 16
      %v1563 = vrot.slane %v1561, 5
      %v1564 = vor.u32 %v1560, %v1563
      %v1565 = vrot.slane %v1564, 4
      %v1567 = vshll.u32 %v1458, 16
      %v1569 = vrot.slane %v1567, 5
      %v1570 = vsel %vm350, %v1565, %v1569
      %v1579 = vunpack.c.l.b16 %v1443
      %v1580 = vunpack.c.l.b16 %v1444
      %v1581 = vunpack.c.l.b16 %v1445
      %v1582 = vunpack.c.l.b16 %v1446
      %v1583 = vunpack.c.l.b16 %v1447
      %v1584 = vunpack.c.l.b16 %v1448
      %v1585 = vunpack.c.l.b16 %v1449
      %v1586 = vunpack.c.l.b16 %v1450
      %v1587 = vpack.c.b16 %v1580, %v1579
      %v1588 = vpack.c.b16 %v1582, %v1581
      %v1589 = vpack.c.b16 %v1584, %v1583
      %v1590 = vpack.c.b16 %v1586, %v1585
      %v1591 = vunpack.c.l.b16 %v1472
      %v1592 = vunpack.c.l.b16 %v1486
      %v1593 = vunpack.c.l.b16 %v1500
      %v1594 = vunpack.c.l.b16 %v1514
      %v1595 = vunpack.c.l.b16 %v1528
      %v1596 = vunpack.c.l.b16 %v1542
      %v1597 = vunpack.c.l.b16 %v1556
      %v1598 = vunpack.c.l.b16 %v1570
      %v1599 = vpack.c.b16 %v1592, %v1591
      %v1600 = vpack.c.b16 %v1594, %v1593
      %v1601 = vpack.c.b16 %v1596, %v1595
      %v1602 = vpack.c.b16 %v1598, %v1597
      %1603 = vrot.lane.b32.xlu0 %v1599, 32
      %v1604 = vpop.permute.xlu0 %1603
      %1605 = vrot.lane.b32.xlu0 %v1600, 32
      %v1606 = vpop.permute.xlu0 %1605
      %1607 = vrot.lane.b32.xlu0 %v1601, 32
      %v1608 = vpop.permute.xlu0 %1607
      %1609 = vrot.lane.b32.xlu0 %v1602, 32
      %v1610 = vpop.permute.xlu0 %1609
      %v1613 = vsel %vm503, %v1587, %v1604
      %v1616 = vsel %vm503, %v1588, %v1606
      %v1619 = vsel %vm503, %v1589, %v1608
      %v1622 = vsel %vm503, %v1590, %v1610
      %v1623 = vsel %vm516, %v1613, 0
      %v1624 = vsel %vm516, %v1616, 0
      %v1625 = vsel %vm516, %v1619, 0
      %v1626 = vsel %vm516, %v1622, 0
      %v1631 = vunpack.c.l.b16 %v1623
      %v1632 = vunpack.c.h.b16 %v1623
      %v1633 = vunpack.c.l.b16 %v1624
      %v1634 = vunpack.c.h.b16 %v1624
      %v1635 = vunpack.c.l.b16 %v1625
      %v1636 = vunpack.c.h.b16 %v1625
      %v1637 = vunpack.c.l.b16 %v1626
      %v1638 = vunpack.c.h.b16 %v1626
      %v1639 = vpack.c.b16 %v1631, %v1631
      %v1640 = vpack.c.b16 %v1632, %v1632
      %v1641 = vpack.c.b16 %v1633, %v1633
      %v1642 = vpack.c.b16 %v1634, %v1634
      %v1643 = vpack.c.b16 %v1635, %v1635
      %v1644 = vpack.c.b16 %v1636, %v1636
      %v1645 = vpack.c.b16 %v1637, %v1637
      %v1646 = vpack.c.b16 %v1638, %v1638
      %1655 = vst [vmem:[#allocation2 + $0x14] sm:$0xf] %v1639
      %1656 = vst [vmem:[#allocation2 + $0x38] sm:$0xf] %v1640
      %1657 = vst [vmem:[#allocation2 + $0x5c] sm:$0xf] %v1641
      %1658 = vst [vmem:[#allocation2 + $0x80] sm:$0xf] %v1642
      %1659 = vst [vmem:[#allocation2 + $0xa4] sm:$0xf] %v1643
      %1660 = vst [vmem:[#allocation2 + $0xc8] sm:$0xf] %v1644
      %1661 = vst [vmem:[#allocation2 + $0xec] sm:$0xf] %v1645
      %1662 = vst [vmem:[#allocation2 + $0x110] sm:$0xf] %v1646
      %s1663 = scalar_lea.vmem %s296, 288
      %v1664 = vld [vmem:[%s1663] sm:$0xf]
      %v1665 = vld [vmem:[%s1663 + $0x10] sm:$0xf]
      %v1666 = vld [vmem:[%s1663 + $0x20] sm:$0xf]
      %v1667 = vld [vmem:[%s1663 + $0x30] sm:$0xf]
      %v1668 = vld [vmem:[%s1663 + $0x40] sm:$0xf]
      %v1669 = vld [vmem:[%s1663 + $0x50] sm:$0xf]
      %v1670 = vld [vmem:[%s1663 + $0x60] sm:$0xf]
      %v1671 = vld [vmem:[%s1663 + $0x70] sm:$0xf]
      %v1672 = vld [vmem:[%s1663 + $0x4] sm:$0x1]
      %v1673 = vld [vmem:[%s1663 + $0x14] sm:$0x1]
      %v1674 = vld [vmem:[%s1663 + $0x24] sm:$0x1]
      %v1675 = vld [vmem:[%s1663 + $0x34] sm:$0x1]
      %v1676 = vld [vmem:[%s1663 + $0x44] sm:$0x1]
      %v1677 = vld [vmem:[%s1663 + $0x54] sm:$0x1]
      %v1678 = vld [vmem:[%s1663 + $0x64] sm:$0x1]
      %v1679 = vld [vmem:[%s1663 + $0x74] sm:$0x1]
      %v1681 = vshrl.u32 %v1664, 16
      %v1683 = vrot.slane %v1681, 4
      %v1684 = vshll.u32 %v1664, 16
      %v1686 = vrot.slane %v1684, 5
      %v1687 = vor.u32 %v1683, %v1686
      %v1688 = vrot.slane %v1687, 4
      %v1690 = vshll.u32 %v1672, 16
      %v1692 = vrot.slane %v1690, 5
      %v1693 = vsel %vm350, %v1688, %v1692
      %v1695 = vshrl.u32 %v1665, 16
      %v1697 = vrot.slane %v1695, 4
      %v1698 = vshll.u32 %v1665, 16
      %v1700 = vrot.slane %v1698, 5
      %v1701 = vor.u32 %v1697, %v1700
      %v1702 = vrot.slane %v1701, 4
      %v1704 = vshll.u32 %v1673, 16
      %v1706 = vrot.slane %v1704, 5
      %v1707 = vsel %vm350, %v1702, %v1706
      %v1709 = vshrl.u32 %v1666, 16
      %v1711 = vrot.slane %v1709, 4
      %v1712 = vshll.u32 %v1666, 16
      %v1714 = vrot.slane %v1712, 5
      %v1715 = vor.u32 %v1711, %v1714
      %v1716 = vrot.slane %v1715, 4
      %v1718 = vshll.u32 %v1674, 16
      %v1720 = vrot.slane %v1718, 5
      %v1721 = vsel %vm350, %v1716, %v1720
      %v1723 = vshrl.u32 %v1667, 16
      %v1725 = vrot.slane %v1723, 4
      %v1726 = vshll.u32 %v1667, 16
      %v1728 = vrot.slane %v1726, 5
      %v1729 = vor.u32 %v1725, %v1728
      %v1730 = vrot.slane %v1729, 4
      %v1732 = vshll.u32 %v1675, 16
      %v1734 = vrot.slane %v1732, 5
      %v1735 = vsel %vm350, %v1730, %v1734
      %v1737 = vshrl.u32 %v1668, 16
      %v1739 = vrot.slane %v1737, 4
      %v1740 = vshll.u32 %v1668, 16
      %v1742 = vrot.slane %v1740, 5
      %v1743 = vor.u32 %v1739, %v1742
      %v1744 = vrot.slane %v1743, 4
      %v1746 = vshll.u32 %v1676, 16
      %v1748 = vrot.slane %v1746, 5
      %v1749 = vsel %vm350, %v1744, %v1748
      %v1751 = vshrl.u32 %v1669, 16
      %v1753 = vrot.slane %v1751, 4
      %v1754 = vshll.u32 %v1669, 16
      %v1756 = vrot.slane %v1754, 5
      %v1757 = vor.u32 %v1753, %v1756
      %v1758 = vrot.slane %v1757, 4
      %v1760 = vshll.u32 %v1677, 16
      %v1762 = vrot.slane %v1760, 5
      %v1763 = vsel %vm350, %v1758, %v1762
      %v1765 = vshrl.u32 %v1670, 16
      %v1767 = vrot.slane %v1765, 4
      %v1768 = vshll.u32 %v1670, 16
      %v1770 = vrot.slane %v1768, 5
      %v1771 = vor.u32 %v1767, %v1770
      %v1772 = vrot.slane %v1771, 4
      %v1774 = vshll.u32 %v1678, 16
      %v1776 = vrot.slane %v1774, 5
      %v1777 = vsel %vm350, %v1772, %v1776
      %v1779 = vshrl.u32 %v1671, 16
      %v1781 = vrot.slane %v1779, 4
      %v1782 = vshll.u32 %v1671, 16
      %v1784 = vrot.slane %v1782, 5
      %v1785 = vor.u32 %v1781, %v1784
      %v1786 = vrot.slane %v1785, 4
      %v1788 = vshll.u32 %v1679, 16
      %v1790 = vrot.slane %v1788, 5
      %v1791 = vsel %vm350, %v1786, %v1790
      %v1800 = vunpack.c.l.b16 %v1664
      %v1801 = vunpack.c.l.b16 %v1665
      %v1802 = vunpack.c.l.b16 %v1666
      %v1803 = vunpack.c.l.b16 %v1667
      %v1804 = vunpack.c.l.b16 %v1668
      %v1805 = vunpack.c.l.b16 %v1669
      %v1806 = vunpack.c.l.b16 %v1670
      %v1807 = vunpack.c.l.b16 %v1671
      %v1808 = vpack.c.b16 %v1801, %v1800
      %v1809 = vpack.c.b16 %v1803, %v1802
      %v1810 = vpack.c.b16 %v1805, %v1804
      %v1811 = vpack.c.b16 %v1807, %v1806
      %v1812 = vunpack.c.l.b16 %v1693
      %v1813 = vunpack.c.l.b16 %v1707
      %v1814 = vunpack.c.l.b16 %v1721
      %v1815 = vunpack.c.l.b16 %v1735
      %v1816 = vunpack.c.l.b16 %v1749
      %v1817 = vunpack.c.l.b16 %v1763
      %v1818 = vunpack.c.l.b16 %v1777
      %v1819 = vunpack.c.l.b16 %v1791
      %v1820 = vpack.c.b16 %v1813, %v1812
      %v1821 = vpack.c.b16 %v1815, %v1814
      %v1822 = vpack.c.b16 %v1817, %v1816
      %v1823 = vpack.c.b16 %v1819, %v1818
      %1824 = vrot.lane.b32.xlu0 %v1820, 32
      %v1825 = vpop.permute.xlu0 %1824
      %1826 = vrot.lane.b32.xlu0 %v1821, 32
      %v1827 = vpop.permute.xlu0 %1826
      %1828 = vrot.lane.b32.xlu0 %v1822, 32
      %v1829 = vpop.permute.xlu0 %1828
      %1830 = vrot.lane.b32.xlu0 %v1823, 32
      %v1831 = vpop.permute.xlu0 %1830
      %v1834 = vsel %vm503, %v1808, %v1825
      %v1837 = vsel %vm503, %v1809, %v1827
      %v1840 = vsel %vm503, %v1810, %v1829
      %v1843 = vsel %vm503, %v1811, %v1831
      %v1844 = vsel %vm516, %v1834, 0
      %v1845 = vsel %vm516, %v1837, 0
      %v1846 = vsel %vm516, %v1840, 0
      %v1847 = vsel %vm516, %v1843, 0
      %v1852 = vunpack.c.l.b16 %v1844
      %v1853 = vunpack.c.h.b16 %v1844
      %v1854 = vunpack.c.l.b16 %v1845
      %v1855 = vunpack.c.h.b16 %v1845
      %v1856 = vunpack.c.l.b16 %v1846
      %v1857 = vunpack.c.h.b16 %v1846
      %v1858 = vunpack.c.l.b16 %v1847
      %v1859 = vunpack.c.h.b16 %v1847
      %v1860 = vpack.c.b16 %v1852, %v1852
      %v1861 = vpack.c.b16 %v1853, %v1853
      %v1862 = vpack.c.b16 %v1854, %v1854
      %v1863 = vpack.c.b16 %v1855, %v1855
      %v1864 = vpack.c.b16 %v1856, %v1856
      %v1865 = vpack.c.b16 %v1857, %v1857
      %v1866 = vpack.c.b16 %v1858, %v1858
      %v1867 = vpack.c.b16 %v1859, %v1859
      %1876 = vst [vmem:[#allocation2 + $0x18] sm:$0xf] %v1860
      %1877 = vst [vmem:[#allocation2 + $0x3c] sm:$0xf] %v1861
      %1878 = vst [vmem:[#allocation2 + $0x60] sm:$0xf] %v1862
      %1879 = vst [vmem:[#allocation2 + $0x84] sm:$0xf] %v1863
      %1880 = vst [vmem:[#allocation2 + $0xa8] sm:$0xf] %v1864
      %1881 = vst [vmem:[#allocation2 + $0xcc] sm:$0xf] %v1865
      %1882 = vst [vmem:[#allocation2 + $0xf0] sm:$0xf] %v1866
      %1883 = vst [vmem:[#allocation2 + $0x114] sm:$0xf] %v1867
      %s1884 = scalar_lea.vmem %s296, 296
      %v1885 = vld [vmem:[%s1884] sm:$0xf]
      %v1886 = vld [vmem:[%s1884 + $0x10] sm:$0xf]
      %v1887 = vld [vmem:[%s1884 + $0x20] sm:$0xf]
      %v1888 = vld [vmem:[%s1884 + $0x30] sm:$0xf]
      %v1889 = vld [vmem:[%s1884 + $0x40] sm:$0xf]
      %v1890 = vld [vmem:[%s1884 + $0x50] sm:$0xf]
      %v1891 = vld [vmem:[%s1884 + $0x60] sm:$0xf]
      %v1892 = vld [vmem:[%s1884 + $0x70] sm:$0xf]
      %v1893 = vld [vmem:[%s1884 + $0x4] sm:$0x1]
      %v1894 = vld [vmem:[%s1884 + $0x14] sm:$0x1]
      %v1895 = vld [vmem:[%s1884 + $0x24] sm:$0x1]
      %v1896 = vld [vmem:[%s1884 + $0x34] sm:$0x1]
      %v1897 = vld [vmem:[%s1884 + $0x44] sm:$0x1]
      %v1898 = vld [vmem:[%s1884 + $0x54] sm:$0x1]
      %v1899 = vld [vmem:[%s1884 + $0x64] sm:$0x1]
      %v1900 = vld [vmem:[%s1884 + $0x74] sm:$0x1]
      %v1902 = vshrl.u32 %v1885, 16
      %v1904 = vrot.slane %v1902, 4
      %v1905 = vshll.u32 %v1885, 16
      %v1907 = vrot.slane %v1905, 5
      %v1908 = vor.u32 %v1904, %v1907
      %v1909 = vrot.slane %v1908, 4
      %v1911 = vshll.u32 %v1893, 16
      %v1913 = vrot.slane %v1911, 5
      %v1914 = vsel %vm350, %v1909, %v1913
      %v1916 = vshrl.u32 %v1886, 16
      %v1918 = vrot.slane %v1916, 4
      %v1919 = vshll.u32 %v1886, 16
      %v1921 = vrot.slane %v1919, 5
      %v1922 = vor.u32 %v1918, %v1921
      %v1923 = vrot.slane %v1922, 4
      %v1925 = vshll.u32 %v1894, 16
      %v1927 = vrot.slane %v1925, 5
      %v1928 = vsel %vm350, %v1923, %v1927
      %v1930 = vshrl.u32 %v1887, 16
      %v1932 = vrot.slane %v1930, 4
      %v1933 = vshll.u32 %v1887, 16
      %v1935 = vrot.slane %v1933, 5
      %v1936 = vor.u32 %v1932, %v1935
      %v1937 = vrot.slane %v1936, 4
      %v1939 = vshll.u32 %v1895, 16
      %v1941 = vrot.slane %v1939, 5
      %v1942 = vsel %vm350, %v1937, %v1941
      %v1944 = vshrl.u32 %v1888, 16
      %v1946 = vrot.slane %v1944, 4
      %v1947 = vshll.u32 %v1888, 16
      %v1949 = vrot.slane %v1947, 5
      %v1950 = vor.u32 %v1946, %v1949
      %v1951 = vrot.slane %v1950, 4
      %v1953 = vshll.u32 %v1896, 16
      %v1955 = vrot.slane %v1953, 5
      %v1956 = vsel %vm350, %v1951, %v1955
      %v1958 = vshrl.u32 %v1889, 16
      %v1960 = vrot.slane %v1958, 4
      %v1961 = vshll.u32 %v1889, 16
      %v1963 = vrot.slane %v1961, 5
      %v1964 = vor.u32 %v1960, %v1963
      %v1965 = vrot.slane %v1964, 4
      %v1967 = vshll.u32 %v1897, 16
      %v1969 = vrot.slane %v1967, 5
      %v1970 = vsel %vm350, %v1965, %v1969
      %v1972 = vshrl.u32 %v1890, 16
      %v1974 = vrot.slane %v1972, 4
      %v1975 = vshll.u32 %v1890, 16
      %v1977 = vrot.slane %v1975, 5
      %v1978 = vor.u32 %v1974, %v1977
      %v1979 = vrot.slane %v1978, 4
      %v1981 = vshll.u32 %v1898, 16
      %v1983 = vrot.slane %v1981, 5
      %v1984 = vsel %vm350, %v1979, %v1983
      %v1986 = vshrl.u32 %v1891, 16
      %v1988 = vrot.slane %v1986, 4
      %v1989 = vshll.u32 %v1891, 16
      %v1991 = vrot.slane %v1989, 5
      %v1992 = vor.u32 %v1988, %v1991
      %v1993 = vrot.slane %v1992, 4
      %v1995 = vshll.u32 %v1899, 16
      %v1997 = vrot.slane %v1995, 5
      %v1998 = vsel %vm350, %v1993, %v1997
      %v2000 = vshrl.u32 %v1892, 16
      %v2002 = vrot.slane %v2000, 4
      %v2003 = vshll.u32 %v1892, 16
      %v2005 = vrot.slane %v2003, 5
      %v2006 = vor.u32 %v2002, %v2005
      %v2007 = vrot.slane %v2006, 4
      %v2009 = vshll.u32 %v1900, 16
      %v2011 = vrot.slane %v2009, 5
      %v2012 = vsel %vm350, %v2007, %v2011
      %v2021 = vunpack.c.l.b16 %v1885
      %v2022 = vunpack.c.l.b16 %v1886
      %v2023 = vunpack.c.l.b16 %v1887
      %v2024 = vunpack.c.l.b16 %v1888
      %v2025 = vunpack.c.l.b16 %v1889
      %v2026 = vunpack.c.l.b16 %v1890
      %v2027 = vunpack.c.l.b16 %v1891
      %v2028 = vunpack.c.l.b16 %v1892
      %v2029 = vpack.c.b16 %v2022, %v2021
      %v2030 = vpack.c.b16 %v2024, %v2023
      %v2031 = vpack.c.b16 %v2026, %v2025
      %v2032 = vpack.c.b16 %v2028, %v2027
      %v2033 = vunpack.c.l.b16 %v1914
      %v2034 = vunpack.c.l.b16 %v1928
      %v2035 = vunpack.c.l.b16 %v1942
      %v2036 = vunpack.c.l.b16 %v1956
      %v2037 = vunpack.c.l.b16 %v1970
      %v2038 = vunpack.c.l.b16 %v1984
      %v2039 = vunpack.c.l.b16 %v1998
      %v2040 = vunpack.c.l.b16 %v2012
      %v2041 = vpack.c.b16 %v2034, %v2033
      %v2042 = vpack.c.b16 %v2036, %v2035
      %v2043 = vpack.c.b16 %v2038, %v2037
      %v2044 = vpack.c.b16 %v2040, %v2039
      %2045 = vrot.lane.b32.xlu0 %v2041, 32
      %v2046 = vpop.permute.xlu0 %2045
      %2047 = vrot.lane.b32.xlu0 %v2042, 32
      %v2048 = vpop.permute.xlu0 %2047
      %2049 = vrot.lane.b32.xlu0 %v2043, 32
      %v2050 = vpop.permute.xlu0 %2049
      %2051 = vrot.lane.b32.xlu0 %v2044, 32
      %v2052 = vpop.permute.xlu0 %2051
      %v2055 = vsel %vm503, %v2029, %v2046
      %v2058 = vsel %vm503, %v2030, %v2048
      %v2061 = vsel %vm503, %v2031, %v2050
      %v2064 = vsel %vm503, %v2032, %v2052
      %v2065 = vsel %vm516, %v2055, 0
      %v2066 = vsel %vm516, %v2058, 0
      %v2067 = vsel %vm516, %v2061, 0
      %v2068 = vsel %vm516, %v2064, 0
      %v2073 = vunpack.c.l.b16 %v2065
      %v2074 = vunpack.c.h.b16 %v2065
      %v2075 = vunpack.c.l.b16 %v2066
      %v2076 = vunpack.c.h.b16 %v2066
      %v2077 = vunpack.c.l.b16 %v2067
      %v2078 = vunpack.c.h.b16 %v2067
      %v2079 = vunpack.c.l.b16 %v2068
      %v2080 = vunpack.c.h.b16 %v2068
      %v2081 = vpack.c.b16 %v2073, %v2073
      %v2082 = vpack.c.b16 %v2074, %v2074
      %v2083 = vpack.c.b16 %v2075, %v2075
      %v2084 = vpack.c.b16 %v2076, %v2076
      %v2085 = vpack.c.b16 %v2077, %v2077
      %v2086 = vpack.c.b16 %v2078, %v2078
      %v2087 = vpack.c.b16 %v2079, %v2079
      %v2088 = vpack.c.b16 %v2080, %v2080
      %2097 = vst [vmem:[#allocation2 + $0x1c] sm:$0xf] %v2081
      %2098 = vst [vmem:[#allocation2 + $0x40] sm:$0xf] %v2082
      %2099 = vst [vmem:[#allocation2 + $0x64] sm:$0xf] %v2083
      %2100 = vst [vmem:[#allocation2 + $0x88] sm:$0xf] %v2084
      %2101 = vst [vmem:[#allocation2 + $0xac] sm:$0xf] %v2085
      %2102 = vst [vmem:[#allocation2 + $0xd0] sm:$0xf] %v2086
      %2103 = vst [vmem:[#allocation2 + $0xf4] sm:$0xf] %v2087
      %2104 = vst [vmem:[#allocation2 + $0x118] sm:$0xf] %v2088
      %s2105 = scalar_lea.vmem %s296, 304
      %v2106 = vld [vmem:[%s2105] sm:$0xf]
      %v2107 = vld [vmem:[%s2105 + $0x10] sm:$0xf]
      %v2108 = vld [vmem:[%s2105 + $0x20] sm:$0xf]
      %v2109 = vld [vmem:[%s2105 + $0x30] sm:$0xf]
      %v2110 = vld [vmem:[%s2105 + $0x40] sm:$0xf]
      %v2111 = vld [vmem:[%s2105 + $0x50] sm:$0xf]
      %v2112 = vld [vmem:[%s2105 + $0x60] sm:$0xf]
      %v2113 = vld [vmem:[%s2105 + $0x70] sm:$0xf]
      %v2114 = vld [vmem:[%s2105 + $0x4] sm:$0x1]
      %v2115 = vld [vmem:[%s2105 + $0x14] sm:$0x1]
      %v2116 = vld [vmem:[%s2105 + $0x24] sm:$0x1]
      %v2117 = vld [vmem:[%s2105 + $0x34] sm:$0x1]
      %v2118 = vld [vmem:[%s2105 + $0x44] sm:$0x1]
      %v2119 = vld [vmem:[%s2105 + $0x54] sm:$0x1]
      %v2120 = vld [vmem:[%s2105 + $0x64] sm:$0x1]
      %v2121 = vld [vmem:[%s2105 + $0x74] sm:$0x1]
      %v2123 = vshrl.u32 %v2106, 16
      %v2125 = vrot.slane %v2123, 4
      %v2126 = vshll.u32 %v2106, 16
      %v2128 = vrot.slane %v2126, 5
      %v2129 = vor.u32 %v2125, %v2128
      %v2130 = vrot.slane %v2129, 4
      %v2132 = vshll.u32 %v2114, 16
      %v2134 = vrot.slane %v2132, 5
      %v2135 = vsel %vm350, %v2130, %v2134
      %v2137 = vshrl.u32 %v2107, 16
      %v2139 = vrot.slane %v2137, 4
      %v2140 = vshll.u32 %v2107, 16
      %v2142 = vrot.slane %v2140, 5
      %v2143 = vor.u32 %v2139, %v2142
      %v2144 = vrot.slane %v2143, 4
      %v2146 = vshll.u32 %v2115, 16
      %v2148 = vrot.slane %v2146, 5
      %v2149 = vsel %vm350, %v2144, %v2148
      %v2151 = vshrl.u32 %v2108, 16
      %v2153 = vrot.slane %v2151, 4
      %v2154 = vshll.u32 %v2108, 16
      %v2156 = vrot.slane %v2154, 5
      %v2157 = vor.u32 %v2153, %v2156
      %v2158 = vrot.slane %v2157, 4
      %v2160 = vshll.u32 %v2116, 16
      %v2162 = vrot.slane %v2160, 5
      %v2163 = vsel %vm350, %v2158, %v2162
      %v2165 = vshrl.u32 %v2109, 16
      %v2167 = vrot.slane %v2165, 4
      %v2168 = vshll.u32 %v2109, 16
      %v2170 = vrot.slane %v2168, 5
      %v2171 = vor.u32 %v2167, %v2170
      %v2172 = vrot.slane %v2171, 4
      %v2174 = vshll.u32 %v2117, 16
      %v2176 = vrot.slane %v2174, 5
      %v2177 = vsel %vm350, %v2172, %v2176
      %v2179 = vshrl.u32 %v2110, 16
      %v2181 = vrot.slane %v2179, 4
      %v2182 = vshll.u32 %v2110, 16
      %v2184 = vrot.slane %v2182, 5
      %v2185 = vor.u32 %v2181, %v2184
      %v2186 = vrot.slane %v2185, 4
      %v2188 = vshll.u32 %v2118, 16
      %v2190 = vrot.slane %v2188, 5
      %v2191 = vsel %vm350, %v2186, %v2190
      %v2193 = vshrl.u32 %v2111, 16
      %v2195 = vrot.slane %v2193, 4
      %v2196 = vshll.u32 %v2111, 16
      %v2198 = vrot.slane %v2196, 5
      %v2199 = vor.u32 %v2195, %v2198
      %v2200 = vrot.slane %v2199, 4
      %v2202 = vshll.u32 %v2119, 16
      %v2204 = vrot.slane %v2202, 5
      %v2205 = vsel %vm350, %v2200, %v2204
      %v2207 = vshrl.u32 %v2112, 16
      %v2209 = vrot.slane %v2207, 4
      %v2210 = vshll.u32 %v2112, 16
      %v2212 = vrot.slane %v2210, 5
      %v2213 = vor.u32 %v2209, %v2212
      %v2214 = vrot.slane %v2213, 4
      %v2216 = vshll.u32 %v2120, 16
      %v2218 = vrot.slane %v2216, 5
      %v2219 = vsel %vm350, %v2214, %v2218
      %v2221 = vshrl.u32 %v2113, 16
      %v2223 = vrot.slane %v2221, 4
      %v2224 = vshll.u32 %v2113, 16
      %v2226 = vrot.slane %v2224, 5
      %v2227 = vor.u32 %v2223, %v2226
      %v2228 = vrot.slane %v2227, 4
      %v2230 = vshll.u32 %v2121, 16
      %v2232 = vrot.slane %v2230, 5
      %v2233 = vsel %vm350, %v2228, %v2232
      %v2242 = vunpack.c.l.b16 %v2106
      %v2243 = vunpack.c.l.b16 %v2107
      %v2244 = vunpack.c.l.b16 %v2108
      %v2245 = vunpack.c.l.b16 %v2109
      %v2246 = vunpack.c.l.b16 %v2110
      %v2247 = vunpack.c.l.b16 %v2111
      %v2248 = vunpack.c.l.b16 %v2112
      %v2249 = vunpack.c.l.b16 %v2113
      %v2250 = vpack.c.b16 %v2243, %v2242
      %v2251 = vpack.c.b16 %v2245, %v2244
      %v2252 = vpack.c.b16 %v2247, %v2246
      %v2253 = vpack.c.b16 %v2249, %v2248
      %v2254 = vunpack.c.l.b16 %v2135
      %v2255 = vunpack.c.l.b16 %v2149
      %v2256 = vunpack.c.l.b16 %v2163
      %v2257 = vunpack.c.l.b16 %v2177
      %v2258 = vunpack.c.l.b16 %v2191
      %v2259 = vunpack.c.l.b16 %v2205
      %v2260 = vunpack.c.l.b16 %v2219
      %v2261 = vunpack.c.l.b16 %v2233
      %v2262 = vpack.c.b16 %v2255, %v2254
      %v2263 = vpack.c.b16 %v2257, %v2256
      %v2264 = vpack.c.b16 %v2259, %v2258
      %v2265 = vpack.c.b16 %v2261, %v2260
      %2266 = vrot.lane.b32.xlu0 %v2262, 32
      %v2267 = vpop.permute.xlu0 %2266
      %2268 = vrot.lane.b32.xlu0 %v2263, 32
      %v2269 = vpop.permute.xlu0 %2268
      %2270 = vrot.lane.b32.xlu0 %v2264, 32
      %v2271 = vpop.permute.xlu0 %2270
      %2272 = vrot.lane.b32.xlu0 %v2265, 32
      %v2273 = vpop.permute.xlu0 %2272
      %v2276 = vsel %vm503, %v2250, %v2267
      %v2279 = vsel %vm503, %v2251, %v2269
      %v2282 = vsel %vm503, %v2252, %v2271
      %v2285 = vsel %vm503, %v2253, %v2273
      %v2286 = vsel %vm516, %v2276, 0
      %v2287 = vsel %vm516, %v2279, 0
      %v2288 = vsel %vm516, %v2282, 0
      %v2289 = vsel %vm516, %v2285, 0
      %v2294 = vunpack.c.l.b16 %v2286
      %v2295 = vunpack.c.h.b16 %v2286
      %v2296 = vunpack.c.l.b16 %v2287
      %v2297 = vunpack.c.h.b16 %v2287
      %v2298 = vunpack.c.l.b16 %v2288
      %v2299 = vunpack.c.h.b16 %v2288
      %v2300 = vunpack.c.l.b16 %v2289
      %v2301 = vunpack.c.h.b16 %v2289
      %v2302 = vpack.c.b16 %v2294, %v2294
      %v2303 = vpack.c.b16 %v2295, %v2295
      %v2304 = vpack.c.b16 %v2296, %v2296
      %v2305 = vpack.c.b16 %v2297, %v2297
      %v2306 = vpack.c.b16 %v2298, %v2298
      %v2307 = vpack.c.b16 %v2299, %v2299
      %v2308 = vpack.c.b16 %v2300, %v2300
      %v2309 = vpack.c.b16 %v2301, %v2301
      %2318 = vst [vmem:[#allocation2 + $0x20] sm:$0xf] %v2302
      %2319 = vst [vmem:[#allocation2 + $0x44] sm:$0xf] %v2303
      %2320 = vst [vmem:[#allocation2 + $0x68] sm:$0xf] %v2304
      %2321 = vst [vmem:[#allocation2 + $0x8c] sm:$0xf] %v2305
      %2322 = vst [vmem:[#allocation2 + $0xb0] sm:$0xf] %v2306
      %2323 = vst [vmem:[#allocation2 + $0xd4] sm:$0xf] %v2307
      %2324 = vst [vmem:[#allocation2 + $0xf8] sm:$0xf] %v2308
      %2325 = vst [vmem:[#allocation2 + $0x11c] sm:$0xf] %v2309
      %v2326 = vld [vmem:[#allocation2] sm:$0xff]
      %v2327 = vld [vmem:[#allocation2 + $0x8] sm:$0xff]
      %v2328 = vld [vmem:[#allocation2 + $0x10] sm:$0xff]
      %v2329 = vld [vmem:[#allocation2 + $0x18] sm:$0xff]
      %v2330 = vld [vmem:[#allocation2 + $0x20] sm:$0xf]
      %v2331 = vld [vmem:[#allocation2 + $0x24] sm:$0xff]
      %v2332 = vld [vmem:[#allocation2 + $0x2c] sm:$0xff]
      %v2333 = vld [vmem:[#allocation2 + $0x34] sm:$0xff]
      %v2334 = vld [vmem:[#allocation2 + $0x3c] sm:$0xff]
      %v2335 = vld [vmem:[#allocation2 + $0x44] sm:$0xf]
      %v2336 = vld [vmem:[#allocation2 + $0x48] sm:$0xff]
      %v2337 = vld [vmem:[#allocation2 + $0x50] sm:$0xff]
      %v2338 = vld [vmem:[#allocation2 + $0x58] sm:$0xff]
      %v2339 = vld [vmem:[#allocation2 + $0x60] sm:$0xff]
      %v2340 = vld [vmem:[#allocation2 + $0x68] sm:$0xf]
      %v2341 = vld [vmem:[#allocation2 + $0x6c] sm:$0xff]
      %v2342 = vld [vmem:[#allocation2 + $0x74] sm:$0xff]
      %v2343 = vld [vmem:[#allocation2 + $0x7c] sm:$0xff]
      %v2344 = vld [vmem:[#allocation2 + $0x84] sm:$0xff]
      %v2345 = vld [vmem:[#allocation2 + $0x8c] sm:$0xf]
      %v2346 = vld [vmem:[#allocation2 + $0x90] sm:$0xff]
      %v2347 = vld [vmem:[#allocation2 + $0x98] sm:$0xff]
      %v2348 = vld [vmem:[#allocation2 + $0xa0] sm:$0xff]
      %v2349 = vld [vmem:[#allocation2 + $0xa8] sm:$0xff]
      %v2350 = vld [vmem:[#allocation2 + $0xb0] sm:$0xf]
      %v2351 = vld [vmem:[#allocation2 + $0xb4] sm:$0xff]
      %v2352 = vld [vmem:[#allocation2 + $0xbc] sm:$0xff]
      %v2353 = vld [vmem:[#allocation2 + $0xc4] sm:$0xff]
      %v2354 = vld [vmem:[#allocation2 + $0xcc] sm:$0xff]
      %v2355 = vld [vmem:[#allocation2 + $0xd4] sm:$0xf]
      %v2356 = vld [vmem:[#allocation2 + $0xd8] sm:$0xff]
      %v2357 = vld [vmem:[#allocation2 + $0xe0] sm:$0xff]
      %v2358 = vld [vmem:[#allocation2 + $0xe8] sm:$0xff]
      %v2359 = vld [vmem:[#allocation2 + $0xf0] sm:$0xff]
      %v2360 = vld [vmem:[#allocation2 + $0xf8] sm:$0xf]
      %v2361 = vld [vmem:[#allocation2 + $0xfc] sm:$0xff]
      %v2362 = vld [vmem:[#allocation2 + $0x104] sm:$0xff]
      %v2363 = vld [vmem:[#allocation2 + $0x10c] sm:$0xff]
      %v2364 = vld [vmem:[#allocation2 + $0x114] sm:$0xff]
      %v2365 = vld [vmem:[#allocation2 + $0x11c] sm:$0xf]
      %v2366 = vld [vmem:[%s2] sm:$0xf]
      %v2367 = vld [vmem:[%s2 + $0x4] sm:$0xf]
      %v2368 = vld [vmem:[%s2 + $0x8] sm:$0xf]
      %v2369 = vld [vmem:[%s2 + $0xc] sm:$0xf]
      %v2370 = vld [vmem:[%s2 + $0x10] sm:$0xf]
      %v2371 = vld [vmem:[%s2 + $0x14] sm:$0xf]
      %v2372 = vld [vmem:[%s2 + $0x18] sm:$0xf]
      %v2373 = vld [vmem:[%s2 + $0x1c] sm:$0xf]
      %v2374 = vld [vmem:[%s2 + $0x20] sm:$0xf]
      %v2375 = vld [vmem:[%s2 + $0x24] sm:$0xf]
      %v2376 = vld [vmem:[%s2 + $0x28] sm:$0xf]
      %v2377 = vld [vmem:[%s2 + $0x2c] sm:$0xf]
      %v2378 = vld [vmem:[%s2 + $0x30] sm:$0xf]
      %v2379 = vld [vmem:[%s2 + $0x34] sm:$0xf]
      %v2380 = vld [vmem:[%s2 + $0x38] sm:$0xf]
      %v2381 = vld [vmem:[%s2 + $0x3c] sm:$0xf]
      %v2382 = vld [vmem:[%s2 + $0x40] sm:$0xf]
      %v2383 = vld [vmem:[%s2 + $0x44] sm:$0xf]
      %v2384 = vld [vmem:[%s2 + $0x48] sm:$0xf]
      %v2385 = vld [vmem:[%s2 + $0x4c] sm:$0xf]
      %v2386 = vld [vmem:[%s2 + $0x50] sm:$0xf]
      %v2387 = vld [vmem:[%s2 + $0x54] sm:$0xf]
      %v2388 = vld [vmem:[%s2 + $0x58] sm:$0xf]
      %v2389 = vld [vmem:[%s2 + $0x5c] sm:$0xf]
      %v2390 = vld [vmem:[%s2 + $0x60] sm:$0xf]
      %v2391 = vld [vmem:[%s2 + $0x64] sm:$0xf]
      %v2392 = vld [vmem:[%s2 + $0x68] sm:$0xf]
      %v2393 = vld [vmem:[%s2 + $0x6c] sm:$0xf]
      %v2394 = vld [vmem:[%s2 + $0x70] sm:$0xf]
      %v2395 = vld [vmem:[%s2 + $0x74] sm:$0xf]
      %v2396 = vld [vmem:[%s2 + $0x78] sm:$0xf]
      %v2397 = vld [vmem:[%s2 + $0x7c] sm:$0xf]
      %v2398 = vld [vmem:[%s2 + $0x80] sm:$0xf]
      %v2399 = vld [vmem:[%s2 + $0x84] sm:$0xf]
      %v2400 = vld [vmem:[%s2 + $0x88] sm:$0xf]
      %v2401 = vld [vmem:[%s2 + $0x8c] sm:$0xf]
      %v2402 = vld [vmem:[%s2 + $0x90] sm:$0xf]
      %v2403 = vld [vmem:[%s2 + $0x94] sm:$0xf]
      %v2404 = vld [vmem:[%s2 + $0x98] sm:$0xf]
      %v2405 = vld [vmem:[%s2 + $0x9c] sm:$0xf]
      %v2406 = vld [vmem:[%s2 + $0xa0] sm:$0xf]
      %v2407 = vld [vmem:[%s2 + $0xa4] sm:$0xf]
      %v2408 = vld [vmem:[%s2 + $0xa8] sm:$0xf]
      %v2409 = vld [vmem:[%s2 + $0xac] sm:$0xf]
      %v2410 = vld [vmem:[%s2 + $0xb0] sm:$0xf]
      %v2411 = vld [vmem:[%s2 + $0xb4] sm:$0xf]
      %v2412 = vld [vmem:[%s2 + $0xb8] sm:$0xf]
      %v2413 = vld [vmem:[%s2 + $0xbc] sm:$0xf]
      %v2414 = vld [vmem:[%s2 + $0xc0] sm:$0xf]
      %v2415 = vld [vmem:[%s2 + $0xc4] sm:$0xf]
      %v2416 = vld [vmem:[%s2 + $0xc8] sm:$0xf]
      %v2417 = vld [vmem:[%s2 + $0xcc] sm:$0xf]
      %v2418 = vld [vmem:[%s2 + $0xd0] sm:$0xf]
      %v2419 = vld [vmem:[%s2 + $0xd4] sm:$0xf]
      %v2420 = vld [vmem:[%s2 + $0xd8] sm:$0xf]
      %v2421 = vld [vmem:[%s2 + $0xdc] sm:$0xf]
      %v2422 = vld [vmem:[%s2 + $0xe0] sm:$0xf]
      %v2423 = vld [vmem:[%s2 + $0xe4] sm:$0xf]
      %v2424 = vld [vmem:[%s2 + $0xe8] sm:$0xf]
      %v2425 = vld [vmem:[%s2 + $0xec] sm:$0xf]
      %v2426 = vld [vmem:[%s2 + $0xf0] sm:$0xf]
      %v2427 = vld [vmem:[%s2 + $0xf4] sm:$0xf]
      %v2428 = vld [vmem:[%s2 + $0xf8] sm:$0xf]
      %v2429 = vld [vmem:[%s2 + $0xfc] sm:$0xf]
      %v2430 = vld [vmem:[%s2 + $0x100] sm:$0xf]
      %v2431 = vld [vmem:[%s2 + $0x104] sm:$0xf]
      %v2432 = vld [vmem:[%s2 + $0x108] sm:$0xf]
      %v2433 = vld [vmem:[%s2 + $0x10c] sm:$0xf]
      %v2434 = vld [vmem:[%s2 + $0x110] sm:$0xf]
      %v2435 = vld [vmem:[%s2 + $0x114] sm:$0xf]
      %v2436 = vld [vmem:[%s2 + $0x118] sm:$0xf]
      %v2437 = vld [vmem:[%s2 + $0x11c] sm:$0xf]
      %v2438 = vld [vmem:[%s2 + $0x120] sm:$0xf]
      %v2439 = vld [vmem:[%s2 + $0x124] sm:$0xf]
      %v2440 = vld [vmem:[%s2 + $0x128] sm:$0xf]
      %v2441 = vld [vmem:[%s2 + $0x12c] sm:$0xf]
      %v2442 = vld [vmem:[%s2 + $0x130] sm:$0xf]
      %v2443 = vld [vmem:[%s2 + $0x134] sm:$0xf]
      %v2444 = vld [vmem:[%s2 + $0x138] sm:$0xf]
      %v2445 = vld [vmem:[%s2 + $0x13c] sm:$0xf]
      %v2446 = vld [vmem:[%s2 + $0x140] sm:$0xf]
      %v2447 = vld [vmem:[%s2 + $0x144] sm:$0xf]
      %v2448 = vld [vmem:[%s2 + $0x148] sm:$0xf]
      %v2449 = vld [vmem:[%s2 + $0x14c] sm:$0xf]
      %v2450 = vld [vmem:[%s2 + $0x150] sm:$0xf]
      %v2451 = vld [vmem:[%s2 + $0x154] sm:$0xf]
      %v2452 = vld [vmem:[%s2 + $0x158] sm:$0xf]
      %v2453 = vld [vmem:[%s2 + $0x15c] sm:$0xf]
      %v2454 = vld [vmem:[%s2 + $0x160] sm:$0xf]
      %v2455 = vld [vmem:[%s2 + $0x164] sm:$0xf]
      %v2456 = vld [vmem:[%s2 + $0x168] sm:$0xf]
      %v2457 = vld [vmem:[%s2 + $0x16c] sm:$0xf]
      %v2458 = vld [vmem:[%s2 + $0x170] sm:$0xf]
      %v2459 = vld [vmem:[%s2 + $0x174] sm:$0xf]
      %v2460 = vld [vmem:[%s2 + $0x178] sm:$0xf]
      %v2461 = vld [vmem:[%s2 + $0x17c] sm:$0xf]
      %v2462 = vld [vmem:[%s2 + $0x180] sm:$0xf]
      %v2463 = vld [vmem:[%s2 + $0x184] sm:$0xf]
      %v2464 = vld [vmem:[%s2 + $0x188] sm:$0xf]
      %v2465 = vld [vmem:[%s2 + $0x18c] sm:$0xf]
      %v2466 = vld [vmem:[%s2 + $0x190] sm:$0xf]
      %v2467 = vld [vmem:[%s2 + $0x194] sm:$0xf]
      %v2468 = vld [vmem:[%s2 + $0x198] sm:$0xf]
      %v2469 = vld [vmem:[%s2 + $0x19c] sm:$0xf]
      %v2470 = vld [vmem:[%s2 + $0x1a0] sm:$0xf]
      %v2471 = vld [vmem:[%s2 + $0x1a4] sm:$0xf]
      %v2472 = vld [vmem:[%s2 + $0x1a8] sm:$0xf]
      %v2473 = vld [vmem:[%s2 + $0x1ac] sm:$0xf]
      %v2474 = vld [vmem:[%s2 + $0x1b0] sm:$0xf]
      %v2475 = vld [vmem:[%s2 + $0x1b4] sm:$0xf]
      %v2476 = vld [vmem:[%s2 + $0x1b8] sm:$0xf]
      %v2477 = vld [vmem:[%s2 + $0x1bc] sm:$0xf]
      %v2478 = vld [vmem:[%s2 + $0x1c0] sm:$0xf]
      %v2479 = vld [vmem:[%s2 + $0x1c4] sm:$0xf]
      %v2480 = vld [vmem:[%s2 + $0x1c8] sm:$0xf]
      %v2481 = vld [vmem:[%s2 + $0x1cc] sm:$0xf]
      %v2482 = vld [vmem:[%s2 + $0x1d0] sm:$0xf]
      %v2483 = vld [vmem:[%s2 + $0x1d4] sm:$0xf]
      %v2484 = vld [vmem:[%s2 + $0x1d8] sm:$0xf]
      %v2485 = vld [vmem:[%s2 + $0x1dc] sm:$0xf]
      %v2486 = vld [vmem:[%s2 + $0x1e0] sm:$0xf]
      %v2487 = vld [vmem:[%s2 + $0x1e4] sm:$0xf]
      %v2488 = vld [vmem:[%s2 + $0x1e8] sm:$0xf]
      %v2489 = vld [vmem:[%s2 + $0x1ec] sm:$0xf]
      %v2490 = vld [vmem:[%s2 + $0x1f0] sm:$0xf]
      %v2491 = vld [vmem:[%s2 + $0x1f4] sm:$0xf]
      %v2492 = vld [vmem:[%s2 + $0x1f8] sm:$0xf]
      %v2493 = vld [vmem:[%s2 + $0x1fc] sm:$0xf]
      %v2494 = vld [vmem:[%s2 + $0x200] sm:$0xf]
      %v2495 = vld [vmem:[%s2 + $0x204] sm:$0xf]
      %v2496 = vld [vmem:[%s2 + $0x208] sm:$0xf]
      %v2497 = vld [vmem:[%s2 + $0x20c] sm:$0xf]
      %v2498 = vld [vmem:[%s2 + $0x210] sm:$0xf]
      %v2499 = vld [vmem:[%s2 + $0x214] sm:$0xf]
      %v2500 = vld [vmem:[%s2 + $0x218] sm:$0xf]
      %v2501 = vld [vmem:[%s2 + $0x21c] sm:$0xf]
      %v2502 = vld [vmem:[%s2 + $0x220] sm:$0xf]
      %v2503 = vld [vmem:[%s2 + $0x224] sm:$0xf]
      %v2504 = vld [vmem:[%s2 + $0x228] sm:$0xf]
      %v2505 = vld [vmem:[%s2 + $0x22c] sm:$0xf]
      %v2506 = vld [vmem:[%s2 + $0x230] sm:$0xf]
      %v2507 = vld [vmem:[%s2 + $0x234] sm:$0xf]
      %v2508 = vld [vmem:[%s2 + $0x238] sm:$0xf]
      %v2509 = vld [vmem:[%s2 + $0x23c] sm:$0xf]
      %v2511 = vperm.slane %v331, 0
      %v2553 = vunpack.c.l.b16 %v2326
      %v2554 = vunpack.c.h.b16 %v2326
      %v2555 = vunpack.c.l.b16 %v2327
      %v2556 = vunpack.c.h.b16 %v2327
      %v2557 = vunpack.c.l.b16 %v2328
      %v2558 = vunpack.c.h.b16 %v2328
      %v2559 = vunpack.c.l.b16 %v2329
      %v2560 = vunpack.c.h.b16 %v2329
      %v2561 = vunpack.c.l.b16 %v2330
      %v2562 = vunpack.c.l.b16 %v2331
      %v2563 = vunpack.c.h.b16 %v2331
      %v2564 = vunpack.c.l.b16 %v2332
      %v2565 = vunpack.c.h.b16 %v2332
      %v2566 = vunpack.c.l.b16 %v2333
      %v2567 = vunpack.c.h.b16 %v2333
      %v2568 = vunpack.c.l.b16 %v2334
      %v2569 = vunpack.c.h.b16 %v2334
      %v2570 = vunpack.c.l.b16 %v2335
      %v2571 = vunpack.c.l.b16 %v2336
      %v2572 = vunpack.c.h.b16 %v2336
      %v2573 = vunpack.c.l.b16 %v2337
      %v2574 = vunpack.c.h.b16 %v2337
      %v2575 = vunpack.c.l.b16 %v2338
      %v2576 = vunpack.c.h.b16 %v2338
      %v2577 = vunpack.c.l.b16 %v2339
      %v2578 = vunpack.c.h.b16 %v2339
      %v2579 = vunpack.c.l.b16 %v2340
      %v2580 = vunpack.c.l.b16 %v2341
      %v2581 = vunpack.c.h.b16 %v2341
      %v2582 = vunpack.c.l.b16 %v2342
      %v2583 = vunpack.c.h.b16 %v2342
      %v2584 = vunpack.c.l.b16 %v2343
      %v2585 = vunpack.c.h.b16 %v2343
      %v2586 = vunpack.c.l.b16 %v2344
      %v2587 = vunpack.c.h.b16 %v2344
      %v2588 = vunpack.c.l.b16 %v2345
      %v2589 = vunpack.c.l.b16 %v2346
      %v2590 = vunpack.c.h.b16 %v2346
      %v2591 = vunpack.c.l.b16 %v2347
      %v2592 = vunpack.c.h.b16 %v2347
      %v2593 = vunpack.c.l.b16 %v2348
      %v2594 = vunpack.c.h.b16 %v2348
      %v2595 = vunpack.c.l.b16 %v2349
      %v2596 = vunpack.c.h.b16 %v2349
      %v2597 = vunpack.c.l.b16 %v2350
      %v2598 = vunpack.c.l.b16 %v2351
      %v2599 = vunpack.c.h.b16 %v2351
      %v2600 = vunpack.c.l.b16 %v2352
      %v2601 = vunpack.c.h.b16 %v2352
      %v2602 = vunpack.c.l.b16 %v2353
      %v2603 = vunpack.c.h.b16 %v2353
      %v2604 = vunpack.c.l.b16 %v2354
      %v2605 = vunpack.c.h.b16 %v2354
      %v2606 = vunpack.c.l.b16 %v2355
      %v2607 = vunpack.c.l.b16 %v2356
      %v2608 = vunpack.c.h.b16 %v2356
      %v2609 = vunpack.c.l.b16 %v2357
      %v2610 = vunpack.c.h.b16 %v2357
      %v2611 = vunpack.c.l.b16 %v2358
      %v2612 = vunpack.c.h.b16 %v2358
      %v2613 = vunpack.c.l.b16 %v2359
      %v2614 = vunpack.c.h.b16 %v2359
      %v2615 = vunpack.c.l.b16 %v2360
      %v2616 = vunpack.c.l.b16 %v2361
      %v2617 = vunpack.c.h.b16 %v2361
      %v2618 = vunpack.c.l.b16 %v2362
      %v2619 = vunpack.c.h.b16 %v2362
      %v2620 = vunpack.c.l.b16 %v2363
      %v2621 = vunpack.c.h.b16 %v2363
      %v2622 = vunpack.c.l.b16 %v2364
      %v2623 = vunpack.c.h.b16 %v2364
      %v2624 = vunpack.c.l.b16 %v2365
      %v2625 = vpack.c.b16 %v2562, %v2553
      %v2626 = vpack.c.b16 %v2563, %v2554
      %v2627 = vpack.c.b16 %v2564, %v2555
      %v2628 = vpack.c.b16 %v2565, %v2556
      %v2629 = vpack.c.b16 %v2566, %v2557
      %v2630 = vpack.c.b16 %v2567, %v2558
      %v2631 = vpack.c.b16 %v2568, %v2559
      %v2632 = vpack.c.b16 %v2569, %v2560
      %v2633 = vpack.c.b16 %v2570, %v2561
      %v2634 = vpack.c.b16 %v2580, %v2571
      %v2635 = vpack.c.b16 %v2581, %v2572
      %v2636 = vpack.c.b16 %v2582, %v2573
      %v2637 = vpack.c.b16 %v2583, %v2574
      %v2638 = vpack.c.b16 %v2584, %v2575
      %v2639 = vpack.c.b16 %v2585, %v2576
      %v2640 = vpack.c.b16 %v2586, %v2577
      %v2641 = vpack.c.b16 %v2587, %v2578
      %v2642 = vpack.c.b16 %v2588, %v2579
      %v2643 = vpack.c.b16 %v2598, %v2589
      %v2644 = vpack.c.b16 %v2599, %v2590
      %v2645 = vpack.c.b16 %v2600, %v2591
      %v2646 = vpack.c.b16 %v2601, %v2592
      %v2647 = vpack.c.b16 %v2602, %v2593
      %v2648 = vpack.c.b16 %v2603, %v2594
      %v2649 = vpack.c.b16 %v2604, %v2595
      %v2650 = vpack.c.b16 %v2605, %v2596
      %v2651 = vpack.c.b16 %v2606, %v2597
      %v2652 = vpack.c.b16 %v2616, %v2607
      %v2653 = vpack.c.b16 %v2617, %v2608
      %v2654 = vpack.c.b16 %v2618, %v2609
      %v2655 = vpack.c.b16 %v2619, %v2610
      %v2656 = vpack.c.b16 %v2620, %v2611
      %v2657 = vpack.c.b16 %v2621, %v2612
      %v2658 = vpack.c.b16 %v2622, %v2613
      %v2659 = vpack.c.b16 %v2623, %v2614
      %v2660 = vpack.c.b16 %v2624, %v2615
      %v2841 = vunpack.c.l.b16 %v2366
      %v2842 = vunpack.c.l.b16 %v2367
      %v2843 = vunpack.c.l.b16 %v2368
      %v2844 = vunpack.c.l.b16 %v2369
      %v2845 = vunpack.c.l.b16 %v2370
      %v2846 = vunpack.c.l.b16 %v2371
      %v2847 = vunpack.c.l.b16 %v2372
      %v2848 = vunpack.c.l.b16 %v2373
      %v2849 = vunpack.c.l.b16 %v2374
      %v2850 = vunpack.c.l.b16 %v2375
      %v2851 = vunpack.c.l.b16 %v2376
      %v2852 = vunpack.c.l.b16 %v2377
      %v2853 = vunpack.c.l.b16 %v2378
      %v2854 = vunpack.c.l.b16 %v2379
      %v2855 = vunpack.c.l.b16 %v2380
      %v2856 = vunpack.c.l.b16 %v2381
      %v2857 = vunpack.c.l.b16 %v2382
      %v2858 = vunpack.c.l.b16 %v2383
      %v2859 = vunpack.c.l.b16 %v2384
      %v2860 = vunpack.c.l.b16 %v2385
      %v2861 = vunpack.c.l.b16 %v2386
      %v2862 = vunpack.c.l.b16 %v2387
      %v2863 = vunpack.c.l.b16 %v2388
      %v2864 = vunpack.c.l.b16 %v2389
      %v2865 = vunpack.c.l.b16 %v2390
      %v2866 = vunpack.c.l.b16 %v2391
      %v2867 = vunpack.c.l.b16 %v2392
      %v2868 = vunpack.c.l.b16 %v2393
      %v2869 = vunpack.c.l.b16 %v2394
      %v2870 = vunpack.c.l.b16 %v2395
      %v2871 = vunpack.c.l.b16 %v2396
      %v2872 = vunpack.c.l.b16 %v2397
      %v2873 = vunpack.c.l.b16 %v2398
      %v2874 = vunpack.c.l.b16 %v2399
      %v2875 = vunpack.c.l.b16 %v2400
      %v2876 = vunpack.c.l.b16 %v2401
      %v2877 = vunpack.c.l.b16 %v2402
      %v2878 = vunpack.c.l.b16 %v2403
      %v2879 = vunpack.c.l.b16 %v2404
      %v2880 = vunpack.c.l.b16 %v2405
      %v2881 = vunpack.c.l.b16 %v2406
      %v2882 = vunpack.c.l.b16 %v2407
      %v2883 = vunpack.c.l.b16 %v2408
      %v2884 = vunpack.c.l.b16 %v2409
      %v2885 = vunpack.c.l.b16 %v2410
      %v2886 = vunpack.c.l.b16 %v2411
      %v2887 = vunpack.c.l.b16 %v2412
      %v2888 = vunpack.c.l.b16 %v2413
      %v2889 = vunpack.c.l.b16 %v2414
      %v2890 = vunpack.c.l.b16 %v2415
      %v2891 = vunpack.c.l.b16 %v2416
      %v2892 = vunpack.c.l.b16 %v2417
      %v2893 = vunpack.c.l.b16 %v2418
      %v2894 = vunpack.c.l.b16 %v2419
      %v2895 = vunpack.c.l.b16 %v2420
      %v2896 = vunpack.c.l.b16 %v2421
      %v2897 = vunpack.c.l.b16 %v2422
      %v2898 = vunpack.c.l.b16 %v2423
      %v2899 = vunpack.c.l.b16 %v2424
      %v2900 = vunpack.c.l.b16 %v2425
      %v2901 = vunpack.c.l.b16 %v2426
      %v2902 = vunpack.c.l.b16 %v2427
      %v2903 = vunpack.c.l.b16 %v2428
      %v2904 = vunpack.c.l.b16 %v2429
      %v2905 = vunpack.c.l.b16 %v2430
      %v2906 = vunpack.c.l.b16 %v2431
      %v2907 = vunpack.c.l.b16 %v2432
      %v2908 = vunpack.c.l.b16 %v2433
      %v2909 = vunpack.c.l.b16 %v2434
      %v2910 = vunpack.c.l.b16 %v2435
      %v2911 = vunpack.c.l.b16 %v2436
      %v2912 = vunpack.c.l.b16 %v2437
      %v2913 = vunpack.c.l.b16 %v2438
      %v2914 = vunpack.c.l.b16 %v2439
      %v2915 = vunpack.c.l.b16 %v2440
      %v2916 = vunpack.c.l.b16 %v2441
      %v2917 = vunpack.c.l.b16 %v2442
      %v2918 = vunpack.c.l.b16 %v2443
      %v2919 = vunpack.c.l.b16 %v2444
      %v2920 = vunpack.c.l.b16 %v2445
      %v2921 = vunpack.c.l.b16 %v2446
      %v2922 = vunpack.c.l.b16 %v2447
      %v2923 = vunpack.c.l.b16 %v2448
      %v2924 = vunpack.c.l.b16 %v2449
      %v2925 = vunpack.c.l.b16 %v2450
      %v2926 = vunpack.c.l.b16 %v2451
      %v2927 = vunpack.c.l.b16 %v2452
      %v2928 = vunpack.c.l.b16 %v2453
      %v2929 = vunpack.c.l.b16 %v2454
      %v2930 = vunpack.c.l.b16 %v2455
      %v2931 = vunpack.c.l.b16 %v2456
      %v2932 = vunpack.c.l.b16 %v2457
      %v2933 = vunpack.c.l.b16 %v2458
      %v2934 = vunpack.c.l.b16 %v2459
      %v2935 = vunpack.c.l.b16 %v2460
      %v2936 = vunpack.c.l.b16 %v2461
      %v2937 = vunpack.c.l.b16 %v2462
      %v2938 = vunpack.c.l.b16 %v2463
      %v2939 = vunpack.c.l.b16 %v2464
      %v2940 = vunpack.c.l.b16 %v2465
      %v2941 = vunpack.c.l.b16 %v2466
      %v2942 = vunpack.c.l.b16 %v2467
      %v2943 = vunpack.c.l.b16 %v2468
      %v2944 = vunpack.c.l.b16 %v2469
      %v2945 = vunpack.c.l.b16 %v2470
      %v2946 = vunpack.c.l.b16 %v2471
      %v2947 = vunpack.c.l.b16 %v2472
      %v2948 = vunpack.c.l.b16 %v2473
      %v2949 = vunpack.c.l.b16 %v2474
      %v2950 = vunpack.c.l.b16 %v2475
      %v2951 = vunpack.c.l.b16 %v2476
      %v2952 = vunpack.c.l.b16 %v2477
      %v2953 = vunpack.c.l.b16 %v2478
      %v2954 = vunpack.c.l.b16 %v2479
      %v2955 = vunpack.c.l.b16 %v2480
      %v2956 = vunpack.c.l.b16 %v2481
      %v2957 = vunpack.c.l.b16 %v2482
      %v2958 = vunpack.c.l.b16 %v2483
      %v2959 = vunpack.c.l.b16 %v2484
      %v2960 = vunpack.c.l.b16 %v2485
      %v2961 = vunpack.c.l.b16 %v2486
      %v2962 = vunpack.c.l.b16 %v2487
      %v2963 = vunpack.c.l.b16 %v2488
      %v2964 = vunpack.c.l.b16 %v2489
      %v2965 = vunpack.c.l.b16 %v2490
      %v2966 = vunpack.c.l.b16 %v2491
      %v2967 = vunpack.c.l.b16 %v2492
      %v2968 = vunpack.c.l.b16 %v2493
      %v2969 = vunpack.c.l.b16 %v2494
      %v2970 = vunpack.c.l.b16 %v2495
      %v2971 = vunpack.c.l.b16 %v2496
      %v2972 = vunpack.c.l.b16 %v2497
      %v2973 = vunpack.c.l.b16 %v2498
      %v2974 = vunpack.c.l.b16 %v2499
      %v2975 = vunpack.c.l.b16 %v2500
      %v2976 = vunpack.c.l.b16 %v2501
      %v2977 = vunpack.c.l.b16 %v2502
      %v2978 = vunpack.c.l.b16 %v2503
      %v2979 = vunpack.c.l.b16 %v2504
      %v2980 = vunpack.c.l.b16 %v2505
      %v2981 = vunpack.c.l.b16 %v2506
      %v2982 = vunpack.c.l.b16 %v2507
      %v2983 = vunpack.c.l.b16 %v2508
      %v2984 = vunpack.c.l.b16 %v2509
      %v2985 = vpack.c.b16 %v2842, %v2841
      %v2986 = vpack.c.b16 %v2844, %v2843
      %v2987 = vpack.c.b16 %v2846, %v2845
      %v2988 = vpack.c.b16 %v2848, %v2847
      %v2989 = vpack.c.b16 %v2850, %v2849
      %v2990 = vpack.c.b16 %v2852, %v2851
      %v2991 = vpack.c.b16 %v2854, %v2853
      %v2992 = vpack.c.b16 %v2856, %v2855
      %v2993 = vpack.c.b16 %v2858, %v2857
      %v2994 = vpack.c.b16 %v2860, %v2859
      %v2995 = vpack.c.b16 %v2862, %v2861
      %v2996 = vpack.c.b16 %v2864, %v2863
      %v2997 = vpack.c.b16 %v2866, %v2865
      %v2998 = vpack.c.b16 %v2868, %v2867
      %v2999 = vpack.c.b16 %v2870, %v2869
      %v3000 = vpack.c.b16 %v2872, %v2871
      %v3001 = vpack.c.b16 %v2874, %v2873
      %v3002 = vpack.c.b16 %v2876, %v2875
      %v3003 = vpack.c.b16 %v2878, %v2877
      %v3004 = vpack.c.b16 %v2880, %v2879
      %v3005 = vpack.c.b16 %v2882, %v2881
      %v3006 = vpack.c.b16 %v2884, %v2883
      %v3007 = vpack.c.b16 %v2886, %v2885
      %v3008 = vpack.c.b16 %v2888, %v2887
      %v3009 = vpack.c.b16 %v2890, %v2889
      %v3010 = vpack.c.b16 %v2892, %v2891
      %v3011 = vpack.c.b16 %v2894, %v2893
      %v3012 = vpack.c.b16 %v2896, %v2895
      %v3013 = vpack.c.b16 %v2898, %v2897
      %v3014 = vpack.c.b16 %v2900, %v2899
      %v3015 = vpack.c.b16 %v2902, %v2901
      %v3016 = vpack.c.b16 %v2904, %v2903
      %v3017 = vpack.c.b16 %v2906, %v2905
      %v3018 = vpack.c.b16 %v2908, %v2907
      %v3019 = vpack.c.b16 %v2910, %v2909
      %v3020 = vpack.c.b16 %v2912, %v2911
      %v3021 = vpack.c.b16 %v2914, %v2913
      %v3022 = vpack.c.b16 %v2916, %v2915
      %v3023 = vpack.c.b16 %v2918, %v2917
      %v3024 = vpack.c.b16 %v2920, %v2919
      %v3025 = vpack.c.b16 %v2922, %v2921
      %v3026 = vpack.c.b16 %v2924, %v2923
      %v3027 = vpack.c.b16 %v2926, %v2925
      %v3028 = vpack.c.b16 %v2928, %v2927
      %v3029 = vpack.c.b16 %v2930, %v2929
      %v3030 = vpack.c.b16 %v2932, %v2931
      %v3031 = vpack.c.b16 %v2934, %v2933
      %v3032 = vpack.c.b16 %v2936, %v2935
      %v3033 = vpack.c.b16 %v2938, %v2937
      %v3034 = vpack.c.b16 %v2940, %v2939
      %v3035 = vpack.c.b16 %v2942, %v2941
      %v3036 = vpack.c.b16 %v2944, %v2943
      %v3037 = vpack.c.b16 %v2946, %v2945
      %v3038 = vpack.c.b16 %v2948, %v2947
      %v3039 = vpack.c.b16 %v2950, %v2949
      %v3040 = vpack.c.b16 %v2952, %v2951
      %v3041 = vpack.c.b16 %v2954, %v2953
      %v3042 = vpack.c.b16 %v2956, %v2955
      %v3043 = vpack.c.b16 %v2958, %v2957
      %v3044 = vpack.c.b16 %v2960, %v2959
      %v3045 = vpack.c.b16 %v2962, %v2961
      %v3046 = vpack.c.b16 %v2964, %v2963
      %v3047 = vpack.c.b16 %v2966, %v2965
      %v3048 = vpack.c.b16 %v2968, %v2967
      %v3049 = vpack.c.b16 %v2970, %v2969
      %v3050 = vpack.c.b16 %v2972, %v2971
      %v3051 = vpack.c.b16 %v2974, %v2973
      %v3052 = vpack.c.b16 %v2976, %v2975
      %v3053 = vpack.c.b16 %v2978, %v2977
      %v3054 = vpack.c.b16 %v2980, %v2979
      %v3055 = vpack.c.b16 %v2982, %v2981
      %v3056 = vpack.c.b16 %v2984, %v2983
      %3129 = vmatpush.bf16.msra.mxu0 %v2992
      %3130 = vmatpush.bf16.msra.mxu0 %v2991
      %3131 = vmatpush.bf16.msra.mxu0 %v2990
      %3132 = vmatpush.bf16.msra.mxu0 %v2989
      %3133 = vmatpush.bf16.msra.mxu0 %v2988
      %3134 = vmatpush.bf16.msra.mxu0 %v2987
      %3135 = vmatpush.bf16.msra.mxu0 %v2986
      %3136 = vmatpush.bf16.msra.mxu0 %v2985
      %3137 = vmatmul.bf16.gmra.mxu0 %v2625
      %v3138 = vpop.f32.mrf.mxu0
      %v3139 = vadd.f32 %v2511, %v3138
      %v3140 = vpop.f32.mrf.mxu0
      %v3141 = vadd.f32 %v2511, %v3140
      %3142 = vmatmul.bf16.gmra.mxu0 %v2634
      %v3143 = vpop.f32.mrf.mxu0
      %v3144 = vadd.f32 %v2511, %v3143
      %v3145 = vpop.f32.mrf.mxu0
      %v3146 = vadd.f32 %v2511, %v3145
      %3147 = vmatmul.bf16.gmra.mxu0 %v2643
      %v3148 = vpop.f32.mrf.mxu0
      %v3149 = vadd.f32 %v2511, %v3148
      %v3150 = vpop.f32.mrf.mxu0
      %v3151 = vadd.f32 %v2511, %v3150
      %3152 = vmatmul.bf16.gmra.mxu0 %v2652
      %v3153 = vpop.f32.mrf.mxu0
      %v3154 = vadd.f32 %v2511, %v3153
      %v3155 = vpop.f32.mrf.mxu0
      %v3156 = vadd.f32 %v2511, %v3155
      %3157 = vdwg.mxu0
      %3158 = vmatpush.bf16.msra.mxu0 %v3000
      %3159 = vmatpush.bf16.msra.mxu0 %v2999
      %3160 = vmatpush.bf16.msra.mxu0 %v2998
      %3161 = vmatpush.bf16.msra.mxu0 %v2997
      %3162 = vmatpush.bf16.msra.mxu0 %v2996
      %3163 = vmatpush.bf16.msra.mxu0 %v2995
      %3164 = vmatpush.bf16.msra.mxu0 %v2994
      %3165 = vmatpush.bf16.msra.mxu0 %v2993
      %3166 = vmatmul.bf16.gmra.mxu0 %v2626
      %v3167 = vpop.f32.mrf.mxu0
      %v3168 = vadd.f32 %v3139, %v3167
      %v3169 = vpop.f32.mrf.mxu0
      %v3170 = vadd.f32 %v3141, %v3169
      %3171 = vmatmul.bf16.gmra.mxu0 %v2635
      %v3172 = vpop.f32.mrf.mxu0
      %v3173 = vadd.f32 %v3144, %v3172
      %v3174 = vpop.f32.mrf.mxu0
      %v3175 = vadd.f32 %v3146, %v3174
      %3176 = vmatmul.bf16.gmra.mxu0 %v2644
      %v3177 = vpop.f32.mrf.mxu0
      %v3178 = vadd.f32 %v3149, %v3177
      %v3179 = vpop.f32.mrf.mxu0
      %v3180 = vadd.f32 %v3151, %v3179
      %3181 = vmatmul.bf16.gmra.mxu0 %v2653
      %v3182 = vpop.f32.mrf.mxu0
      %v3183 = vadd.f32 %v3154, %v3182
      %v3184 = vpop.f32.mrf.mxu0
      %v3185 = vadd.f32 %v3156, %v3184
      %3186 = vdwg.mxu0
      %3187 = vmatpush.bf16.msra.mxu0 %v3008
      %3188 = vmatpush.bf16.msra.mxu0 %v3007
      %3189 = vmatpush.bf16.msra.mxu0 %v3006
      %3190 = vmatpush.bf16.msra.mxu0 %v3005
      %3191 = vmatpush.bf16.msra.mxu0 %v3004
      %3192 = vmatpush.bf16.msra.mxu0 %v3003
      %3193 = vmatpush.bf16.msra.mxu0 %v3002
      %3194 = vmatpush.bf16.msra.mxu0 %v3001
      %3195 = vmatmul.bf16.gmra.mxu0 %v2627
      %v3196 = vpop.f32.mrf.mxu0
      %v3197 = vadd.f32 %v3168, %v3196
      %v3198 = vpop.f32.mrf.mxu0
      %v3199 = vadd.f32 %v3170, %v3198
      %3200 = vmatmul.bf16.gmra.mxu0 %v2636
      %v3201 = vpop.f32.mrf.mxu0
      %v3202 = vadd.f32 %v3173, %v3201
      %v3203 = vpop.f32.mrf.mxu0
      %v3204 = vadd.f32 %v3175, %v3203
      %3205 = vmatmul.bf16.gmra.mxu0 %v2645
      %v3206 = vpop.f32.mrf.mxu0
      %v3207 = vadd.f32 %v3178, %v3206
      %v3208 = vpop.f32.mrf.mxu0
      %v3209 = vadd.f32 %v3180, %v3208
      %3210 = vmatmul.bf16.gmra.mxu0 %v2654
      %v3211 = vpop.f32.mrf.mxu0
      %v3212 = vadd.f32 %v3183, %v3211
      %v3213 = vpop.f32.mrf.mxu0
      %v3214 = vadd.f32 %v3185, %v3213
      %3215 = vdwg.mxu0
      %3216 = vmatpush.bf16.msra.mxu0 %v3016
      %3217 = vmatpush.bf16.msra.mxu0 %v3015
      %3218 = vmatpush.bf16.msra.mxu0 %v3014
      %3219 = vmatpush.bf16.msra.mxu0 %v3013
      %3220 = vmatpush.bf16.msra.mxu0 %v3012
      %3221 = vmatpush.bf16.msra.mxu0 %v3011
      %3222 = vmatpush.bf16.msra.mxu0 %v3010
      %3223 = vmatpush.bf16.msra.mxu0 %v3009
      %3224 = vmatmul.bf16.gmra.mxu0 %v2628
      %v3225 = vpop.f32.mrf.mxu0
      %v3226 = vadd.f32 %v3197, %v3225
      %v3227 = vpop.f32.mrf.mxu0
      %v3228 = vadd.f32 %v3199, %v3227
      %3229 = vmatmul.bf16.gmra.mxu0 %v2637
      %v3230 = vpop.f32.mrf.mxu0
      %v3231 = vadd.f32 %v3202, %v3230
      %v3232 = vpop.f32.mrf.mxu0
      %v3233 = vadd.f32 %v3204, %v3232
      %3234 = vmatmul.bf16.gmra.mxu0 %v2646
      %v3235 = vpop.f32.mrf.mxu0
      %v3236 = vadd.f32 %v3207, %v3235
      %v3237 = vpop.f32.mrf.mxu0
      %v3238 = vadd.f32 %v3209, %v3237
      %3239 = vmatmul.bf16.gmra.mxu0 %v2655
      %v3240 = vpop.f32.mrf.mxu0
      %v3241 = vadd.f32 %v3212, %v3240
      %v3242 = vpop.f32.mrf.mxu0
      %v3243 = vadd.f32 %v3214, %v3242
      %3244 = vdwg.mxu0
      %3245 = vmatpush.bf16.msra.mxu0 %v3024
      %3246 = vmatpush.bf16.msra.mxu0 %v3023
      %3247 = vmatpush.bf16.msra.mxu0 %v3022
      %3248 = vmatpush.bf16.msra.mxu0 %v3021
      %3249 = vmatpush.bf16.msra.mxu0 %v3020
      %3250 = vmatpush.bf16.msra.mxu0 %v3019
      %3251 = vmatpush.bf16.msra.mxu0 %v3018
      %3252 = vmatpush.bf16.msra.mxu0 %v3017
      %3253 = vmatmul.bf16.gmra.mxu0 %v2629
      %v3254 = vpop.f32.mrf.mxu0
      %v3255 = vadd.f32 %v3226, %v3254
      %v3256 = vpop.f32.mrf.mxu0
      %v3257 = vadd.f32 %v3228, %v3256
      %3258 = vmatmul.bf16.gmra.mxu0 %v2638
      %v3259 = vpop.f32.mrf.mxu0
      %v3260 = vadd.f32 %v3231, %v3259
      %v3261 = vpop.f32.mrf.mxu0
      %v3262 = vadd.f32 %v3233, %v3261
      %3263 = vmatmul.bf16.gmra.mxu0 %v2647
      %v3264 = vpop.f32.mrf.mxu0
      %v3265 = vadd.f32 %v3236, %v3264
      %v3266 = vpop.f32.mrf.mxu0
      %v3267 = vadd.f32 %v3238, %v3266
      %3268 = vmatmul.bf16.gmra.mxu0 %v2656
      %v3269 = vpop.f32.mrf.mxu0
      %v3270 = vadd.f32 %v3241, %v3269
      %v3271 = vpop.f32.mrf.mxu0
      %v3272 = vadd.f32 %v3243, %v3271
      %3273 = vdwg.mxu0
      %3274 = vmatpush.bf16.msra.mxu0 %v3032
      %3275 = vmatpush.bf16.msra.mxu0 %v3031
      %3276 = vmatpush.bf16.msra.mxu0 %v3030
      %3277 = vmatpush.bf16.msra.mxu0 %v3029
      %3278 = vmatpush.bf16.msra.mxu0 %v3028
      %3279 = vmatpush.bf16.msra.mxu0 %v3027
      %3280 = vmatpush.bf16.msra.mxu0 %v3026
      %3281 = vmatpush.bf16.msra.mxu0 %v3025
      %3282 = vmatmul.bf16.gmra.mxu0 %v2630
      %v3283 = vpop.f32.mrf.mxu0
      %v3284 = vadd.f32 %v3255, %v3283
      %v3285 = vpop.f32.mrf.mxu0
      %v3286 = vadd.f32 %v3257, %v3285
      %3287 = vmatmul.bf16.gmra.mxu0 %v2639
      %v3288 = vpop.f32.mrf.mxu0
      %v3289 = vadd.f32 %v3260, %v3288
      %v3290 = vpop.f32.mrf.mxu0
      %v3291 = vadd.f32 %v3262, %v3290
      %3292 = vmatmul.bf16.gmra.mxu0 %v2648
      %v3293 = vpop.f32.mrf.mxu0
      %v3294 = vadd.f32 %v3265, %v3293
      %v3295 = vpop.f32.mrf.mxu0
      %v3296 = vadd.f32 %v3267, %v3295
      %3297 = vmatmul.bf16.gmra.mxu0 %v2657
      %v3298 = vpop.f32.mrf.mxu0
      %v3299 = vadd.f32 %v3270, %v3298
      %v3300 = vpop.f32.mrf.mxu0
      %v3301 = vadd.f32 %v3272, %v3300
      %3302 = vdwg.mxu0
      %3303 = vmatpush.bf16.msra.mxu0 %v3040
      %3304 = vmatpush.bf16.msra.mxu0 %v3039
      %3305 = vmatpush.bf16.msra.mxu0 %v3038
      %3306 = vmatpush.bf16.msra.mxu0 %v3037
      %3307 = vmatpush.bf16.msra.mxu0 %v3036
      %3308 = vmatpush.bf16.msra.mxu0 %v3035
      %3309 = vmatpush.bf16.msra.mxu0 %v3034
      %3310 = vmatpush.bf16.msra.mxu0 %v3033
      %3311 = vmatmul.bf16.gmra.mxu0 %v2631
      %v3312 = vpop.f32.mrf.mxu0
      %v3313 = vadd.f32 %v3284, %v3312
      %v3314 = vpop.f32.mrf.mxu0
      %v3315 = vadd.f32 %v3286, %v3314
      %3316 = vmatmul.bf16.gmra.mxu0 %v2640
      %v3317 = vpop.f32.mrf.mxu0
      %v3318 = vadd.f32 %v3289, %v3317
      %v3319 = vpop.f32.mrf.mxu0
      %v3320 = vadd.f32 %v3291, %v3319
      %3321 = vmatmul.bf16.gmra.mxu0 %v2649
      %v3322 = vpop.f32.mrf.mxu0
      %v3323 = vadd.f32 %v3294, %v3322
      %v3324 = vpop.f32.mrf.mxu0
      %v3325 = vadd.f32 %v3296, %v3324
      %3326 = vmatmul.bf16.gmra.mxu0 %v2658
      %v3327 = vpop.f32.mrf.mxu0
      %v3328 = vadd.f32 %v3299, %v3327
      %v3329 = vpop.f32.mrf.mxu0
      %v3330 = vadd.f32 %v3301, %v3329
      %3331 = vdwg.mxu0
      %3332 = vmatpush.bf16.msra.mxu0 %v3048
      %3333 = vmatpush.bf16.msra.mxu0 %v3047
      %3334 = vmatpush.bf16.msra.mxu0 %v3046
      %3335 = vmatpush.bf16.msra.mxu0 %v3045
      %3336 = vmatpush.bf16.msra.mxu0 %v3044
      %3337 = vmatpush.bf16.msra.mxu0 %v3043
      %3338 = vmatpush.bf16.msra.mxu0 %v3042
      %3339 = vmatpush.bf16.msra.mxu0 %v3041
      %3340 = vmatmul.bf16.gmra.mxu0 %v2632
      %v3341 = vpop.f32.mrf.mxu0
      %v3342 = vadd.f32 %v3313, %v3341
      %v3343 = vpop.f32.mrf.mxu0
      %v3344 = vadd.f32 %v3315, %v3343
      %3345 = vmatmul.bf16.gmra.mxu0 %v2641
      %v3346 = vpop.f32.mrf.mxu0
      %v3347 = vadd.f32 %v3318, %v3346
      %v3348 = vpop.f32.mrf.mxu0
      %v3349 = vadd.f32 %v3320, %v3348
      %3350 = vmatmul.bf16.gmra.mxu0 %v2650
      %v3351 = vpop.f32.mrf.mxu0
      %v3352 = vadd.f32 %v3323, %v3351
      %v3353 = vpop.f32.mrf.mxu0
      %v3354 = vadd.f32 %v3325, %v3353
      %3355 = vmatmul.bf16.gmra.mxu0 %v2659
      %v3356 = vpop.f32.mrf.mxu0
      %v3357 = vadd.f32 %v3328, %v3356
      %v3358 = vpop.f32.mrf.mxu0
      %v3359 = vadd.f32 %v3330, %v3358
      %3360 = vdwg.mxu0
      %3361 = vmatpush.bf16.msra.mxu0 %v3056
      %3362 = vmatpush.bf16.msra.mxu0 %v3055
      %3363 = vmatpush.bf16.msra.mxu0 %v3054
      %3364 = vmatpush.bf16.msra.mxu0 %v3053
      %3365 = vmatpush.bf16.msra.mxu0 %v3052
      %3366 = vmatpush.bf16.msra.mxu0 %v3051
      %3367 = vmatpush.bf16.msra.mxu0 %v3050
      %3368 = vmatpush.bf16.msra.mxu0 %v3049
      %3369 = vmatmul.bf16.gmra.mxu0 %v2633
      %v3370 = vpop.f32.mrf.mxu0
      %v3371 = vadd.f32 %v3342, %v3370
      %v3372 = vpop.f32.mrf.mxu0
      %v3373 = vadd.f32 %v3344, %v3372
      %3374 = vmatmul.bf16.gmra.mxu0 %v2642
      %v3375 = vpop.f32.mrf.mxu0
      %v3376 = vadd.f32 %v3347, %v3375
      %v3377 = vpop.f32.mrf.mxu0
      %v3378 = vadd.f32 %v3349, %v3377
      %3379 = vmatmul.bf16.gmra.mxu0 %v2651
      %v3380 = vpop.f32.mrf.mxu0
      %v3381 = vadd.f32 %v3352, %v3380
      %v3382 = vpop.f32.mrf.mxu0
      %v3383 = vadd.f32 %v3354, %v3382
      %3384 = vmatmul.bf16.gmra.mxu0 %v2660
      %v3385 = vpop.f32.mrf.mxu0
      %v3386 = vadd.f32 %v3357, %v3385
      %v3387 = vpop.f32.mrf.mxu0
      %v3388 = vadd.f32 %v3359, %v3387
      %3389 = vdwg.mxu0
      %v3390 = vpack.c.bf16 %v3371, %v3371
      %v3391 = vpack.c.bf16 %v3373, %v3373
      %v3392 = vpack.c.bf16 %v3376, %v3376
      %v3393 = vpack.c.bf16 %v3378, %v3378
      %v3394 = vpack.c.bf16 %v3381, %v3381
      %v3395 = vpack.c.bf16 %v3383, %v3383
      %v3396 = vpack.c.bf16 %v3386, %v3386
      %v3397 = vpack.c.bf16 %v3388, %v3388
      %3398 = vst [vmem:[%s328] sm:$0xf] %v3390
      %3399 = vst [vmem:[%s328 + $0x4] sm:$0xf] %v3391
      %3400 = vst [vmem:[%s328 + $0x8] sm:$0xf] %v3392
      %3401 = vst [vmem:[%s328 + $0xc] sm:$0xf] %v3393
      %3402 = vst [vmem:[%s328 + $0x10] sm:$0xf] %v3394
      %3403 = vst [vmem:[%s328 + $0x14] sm:$0xf] %v3395
      %3404 = vst [vmem:[%s328 + $0x18] sm:$0xf] %v3396
      %3405 = vst [vmem:[%s328 + $0x1c] sm:$0xf] %v3397
      %v3406 = vld [vmem:[%s1663] sm:$0xf]
      %v3407 = vld [vmem:[%s1663 + $0x10] sm:$0xf]
      %v3408 = vld [vmem:[%s1663 + $0x20] sm:$0xf]
      %v3409 = vld [vmem:[%s1663 + $0x30] sm:$0xf]
      %v3410 = vld [vmem:[%s1663 + $0x40] sm:$0xf]
      %v3411 = vld [vmem:[%s1663 + $0x50] sm:$0xf]
      %v3412 = vld [vmem:[%s1663 + $0x60] sm:$0xf]
      %v3413 = vld [vmem:[%s1663 + $0x70] sm:$0xf]
      %v3414 = vld [vmem:[%s1663 + $0x4] sm:$0x1]
      %v3415 = vld [vmem:[%s1663 + $0x14] sm:$0x1]
      %v3416 = vld [vmem:[%s1663 + $0x24] sm:$0x1]
      %v3417 = vld [vmem:[%s1663 + $0x34] sm:$0x1]
      %v3418 = vld [vmem:[%s1663 + $0x44] sm:$0x1]
      %v3419 = vld [vmem:[%s1663 + $0x54] sm:$0x1]
      %v3420 = vld [vmem:[%s1663 + $0x64] sm:$0x1]
      %v3421 = vld [vmem:[%s1663 + $0x74] sm:$0x1]
      %v3423 = vshrl.u32 %v3406, 16
      %v3425 = vrot.slane %v3423, 4
      %v3426 = vshll.u32 %v3406, 16
      %v3428 = vrot.slane %v3426, 5
      %v3429 = vor.u32 %v3425, %v3428
      %v3430 = vrot.slane %v3429, 4
      %v3432 = vshll.u32 %v3414, 16
      %v3434 = vrot.slane %v3432, 5
      %v3435 = vsel %vm350, %v3430, %v3434
      %v3437 = vshrl.u32 %v3407, 16
      %v3439 = vrot.slane %v3437, 4
      %v3440 = vshll.u32 %v3407, 16
      %v3442 = vrot.slane %v3440, 5
      %v3443 = vor.u32 %v3439, %v3442
      %v3444 = vrot.slane %v3443, 4
      %v3446 = vshll.u32 %v3415, 16
      %v3448 = vrot.slane %v3446, 5
      %v3449 = vsel %vm350, %v3444, %v3448
      %v3451 = vshrl.u32 %v3408, 16
      %v3453 = vrot.slane %v3451, 4
      %v3454 = vshll.u32 %v3408, 16
      %v3456 = vrot.slane %v3454, 5
      %v3457 = vor.u32 %v3453, %v3456
      %v3458 = vrot.slane %v3457, 4
      %v3460 = vshll.u32 %v3416, 16
      %v3462 = vrot.slane %v3460, 5
      %v3463 = vsel %vm350, %v3458, %v3462
      %v3465 = vshrl.u32 %v3409, 16
      %v3467 = vrot.slane %v3465, 4
      %v3468 = vshll.u32 %v3409, 16
      %v3470 = vrot.slane %v3468, 5
      %v3471 = vor.u32 %v3467, %v3470
      %v3472 = vrot.slane %v3471, 4
      %v3474 = vshll.u32 %v3417, 16
      %v3476 = vrot.slane %v3474, 5
      %v3477 = vsel %vm350, %v3472, %v3476
      %v3479 = vshrl.u32 %v3410, 16
      %v3481 = vrot.slane %v3479, 4
      %v3482 = vshll.u32 %v3410, 16
      %v3484 = vrot.slane %v3482, 5
      %v3485 = vor.u32 %v3481, %v3484
      %v3486 = vrot.slane %v3485, 4
      %v3488 = vshll.u32 %v3418, 16
      %v3490 = vrot.slane %v3488, 5
      %v3491 = vsel %vm350, %v3486, %v3490
      %v3493 = vshrl.u32 %v3411, 16
      %v3495 = vrot.slane %v3493, 4
      %v3496 = vshll.u32 %v3411, 16
      %v3498 = vrot.slane %v3496, 5
      %v3499 = vor.u32 %v3495, %v3498
      %v3500 = vrot.slane %v3499, 4
      %v3502 = vshll.u32 %v3419, 16
      %v3504 = vrot.slane %v3502, 5
      %v3505 = vsel %vm350, %v3500, %v3504
      %v3507 = vshrl.u32 %v3412, 16
      %v3509 = vrot.slane %v3507, 4
      %v3510 = vshll.u32 %v3412, 16
      %v3512 = vrot.slane %v3510, 5
      %v3513 = vor.u32 %v3509, %v3512
      %v3514 = vrot.slane %v3513, 4
      %v3516 = vshll.u32 %v3420, 16
      %v3518 = vrot.slane %v3516, 5
      %v3519 = vsel %vm350, %v3514, %v3518
      %v3521 = vshrl.u32 %v3413, 16
      %v3523 = vrot.slane %v3521, 4
      %v3524 = vshll.u32 %v3413, 16
      %v3526 = vrot.slane %v3524, 5
      %v3527 = vor.u32 %v3523, %v3526
      %v3528 = vrot.slane %v3527, 4
      %v3530 = vshll.u32 %v3421, 16
      %v3532 = vrot.slane %v3530, 5
      %v3533 = vsel %vm350, %v3528, %v3532
      %v3542 = vunpack.c.l.b16 %v3406
      %v3543 = vunpack.c.l.b16 %v3407
      %v3544 = vunpack.c.l.b16 %v3408
      %v3545 = vunpack.c.l.b16 %v3409
      %v3546 = vunpack.c.l.b16 %v3410
      %v3547 = vunpack.c.l.b16 %v3411
      %v3548 = vunpack.c.l.b16 %v3412
      %v3549 = vunpack.c.l.b16 %v3413
      %v3550 = vpack.c.b16 %v3543, %v3542
      %v3551 = vpack.c.b16 %v3545, %v3544
      %v3552 = vpack.c.b16 %v3547, %v3546
      %v3553 = vpack.c.b16 %v3549, %v3548
      %v3554 = vunpack.c.l.b16 %v3435
      %v3555 = vunpack.c.l.b16 %v3449
      %v3556 = vunpack.c.l.b16 %v3463
      %v3557 = vunpack.c.l.b16 %v3477
      %v3558 = vunpack.c.l.b16 %v3491
      %v3559 = vunpack.c.l.b16 %v3505
      %v3560 = vunpack.c.l.b16 %v3519
      %v3561 = vunpack.c.l.b16 %v3533
      %v3562 = vpack.c.b16 %v3555, %v3554
      %v3563 = vpack.c.b16 %v3557, %v3556
      %v3564 = vpack.c.b16 %v3559, %v3558
      %v3565 = vpack.c.b16 %v3561, %v3560
      %3566 = vrot.lane.b32.xlu0 %v3562, 32
      %v3567 = vpop.permute.xlu0 %3566
      %3568 = vrot.lane.b32.xlu0 %v3563, 32
      %v3569 = vpop.permute.xlu0 %3568
      %3570 = vrot.lane.b32.xlu0 %v3564, 32
      %v3571 = vpop.permute.xlu0 %3570
      %3572 = vrot.lane.b32.xlu0 %v3565, 32
      %v3573 = vpop.permute.xlu0 %3572
      %v3576 = vsel %vm503, %v3550, %v3567
      %v3579 = vsel %vm503, %v3551, %v3569
      %v3582 = vsel %vm503, %v3552, %v3571
      %v3585 = vsel %vm503, %v3553, %v3573
      %v3586 = vsel %vm516, %v3576, 0
      %v3587 = vsel %vm516, %v3579, 0
      %v3588 = vsel %vm516, %v3582, 0
      %v3589 = vsel %vm516, %v3585, 0
      %v3594 = vunpack.c.l.b16 %v3586
      %v3595 = vunpack.c.h.b16 %v3586
      %v3596 = vunpack.c.l.b16 %v3587
      %v3597 = vunpack.c.h.b16 %v3587
      %v3598 = vunpack.c.l.b16 %v3588
      %v3599 = vunpack.c.h.b16 %v3588
      %v3600 = vunpack.c.l.b16 %v3589
      %v3601 = vunpack.c.h.b16 %v3589
      %v3602 = vpack.c.b16 %v3594, %v3594
      %v3603 = vpack.c.b16 %v3595, %v3595
      %v3604 = vpack.c.b16 %v3596, %v3596
      %v3605 = vpack.c.b16 %v3597, %v3597
      %v3606 = vpack.c.b16 %v3598, %v3598
      %v3607 = vpack.c.b16 %v3599, %v3599
      %v3608 = vpack.c.b16 %v3600, %v3600
      %v3609 = vpack.c.b16 %v3601, %v3601
      %s3618 = scalar_lea.vmem [#allocation2], 288
      %3619 = vst [vmem:[%s3618] sm:$0xf] %v3602
      %3620 = vst [vmem:[%s3618 + $0x24] sm:$0xf] %v3603
      %3621 = vst [vmem:[%s3618 + $0x48] sm:$0xf] %v3604
      %3622 = vst [vmem:[%s3618 + $0x6c] sm:$0xf] %v3605
      %3623 = vst [vmem:[%s3618 + $0x90] sm:$0xf] %v3606
      %3624 = vst [vmem:[%s3618 + $0xb4] sm:$0xf] %v3607
      %3625 = vst [vmem:[%s3618 + $0xd8] sm:$0xf] %v3608
      %3626 = vst [vmem:[%s3618 + $0xfc] sm:$0xf] %v3609
      %v3627 = vld [vmem:[%s1884] sm:$0xf]
      %v3628 = vld [vmem:[%s1884 + $0x10] sm:$0xf]
      %v3629 = vld [vmem:[%s1884 + $0x20] sm:$0xf]
      %v3630 = vld [vmem:[%s1884 + $0x30] sm:$0xf]
      %v3631 = vld [vmem:[%s1884 + $0x40] sm:$0xf]
      %v3632 = vld [vmem:[%s1884 + $0x50] sm:$0xf]
      %v3633 = vld [vmem:[%s1884 + $0x60] sm:$0xf]
      %v3634 = vld [vmem:[%s1884 + $0x70] sm:$0xf]
      %v3635 = vld [vmem:[%s1884 + $0x4] sm:$0x1]
      %v3636 = vld [vmem:[%s1884 + $0x14] sm:$0x1]
      %v3637 = vld [vmem:[%s1884 + $0x24] sm:$0x1]
      %v3638 = vld [vmem:[%s1884 + $0x34] sm:$0x1]
      %v3639 = vld [vmem:[%s1884 + $0x44] sm:$0x1]
      %v3640 = vld [vmem:[%s1884 + $0x54] sm:$0x1]
      %v3641 = vld [vmem:[%s1884 + $0x64] sm:$0x1]
      %v3642 = vld [vmem:[%s1884 + $0x74] sm:$0x1]
      %v3644 = vshrl.u32 %v3627, 16
      %v3646 = vrot.slane %v3644, 4
      %v3647 = vshll.u32 %v3627, 16
      %v3649 = vrot.slane %v3647, 5
      %v3650 = vor.u32 %v3646, %v3649
      %v3651 = vrot.slane %v3650, 4
      %v3653 = vshll.u32 %v3635, 16
      %v3655 = vrot.slane %v3653, 5
      %v3656 = vsel %vm350, %v3651, %v3655
      %v3658 = vshrl.u32 %v3628, 16
      %v3660 = vrot.slane %v3658, 4
      %v3661 = vshll.u32 %v3628, 16
      %v3663 = vrot.slane %v3661, 5
      %v3664 = vor.u32 %v3660, %v3663
      %v3665 = vrot.slane %v3664, 4
      %v3667 = vshll.u32 %v3636, 16
      %v3669 = vrot.slane %v3667, 5
      %v3670 = vsel %vm350, %v3665, %v3669
      %v3672 = vshrl.u32 %v3629, 16
      %v3674 = vrot.slane %v3672, 4
      %v3675 = vshll.u32 %v3629, 16
      %v3677 = vrot.slane %v3675, 5
      %v3678 = vor.u32 %v3674, %v3677
      %v3679 = vrot.slane %v3678, 4
      %v3681 = vshll.u32 %v3637, 16
      %v3683 = vrot.slane %v3681, 5
      %v3684 = vsel %vm350, %v3679, %v3683
      %v3686 = vshrl.u32 %v3630, 16
      %v3688 = vrot.slane %v3686, 4
      %v3689 = vshll.u32 %v3630, 16
      %v3691 = vrot.slane %v3689, 5
      %v3692 = vor.u32 %v3688, %v3691
      %v3693 = vrot.slane %v3692, 4
      %v3695 = vshll.u32 %v3638, 16
      %v3697 = vrot.slane %v3695, 5
      %v3698 = vsel %vm350, %v3693, %v3697
      %v3700 = vshrl.u32 %v3631, 16
      %v3702 = vrot.slane %v3700, 4
      %v3703 = vshll.u32 %v3631, 16
      %v3705 = vrot.slane %v3703, 5
      %v3706 = vor.u32 %v3702, %v3705
      %v3707 = vrot.slane %v3706, 4
      %v3709 = vshll.u32 %v3639, 16
      %v3711 = vrot.slane %v3709, 5
      %v3712 = vsel %vm350, %v3707, %v3711
      %v3714 = vshrl.u32 %v3632, 16
      %v3716 = vrot.slane %v3714, 4
      %v3717 = vshll.u32 %v3632, 16
      %v3719 = vrot.slane %v3717, 5
      %v3720 = vor.u32 %v3716, %v3719
      %v3721 = vrot.slane %v3720, 4
      %v3723 = vshll.u32 %v3640, 16
      %v3725 = vrot.slane %v3723, 5
      %v3726 = vsel %vm350, %v3721, %v3725
      %v3728 = vshrl.u32 %v3633, 16
      %v3730 = vrot.slane %v3728, 4
      %v3731 = vshll.u32 %v3633, 16
      %v3733 = vrot.slane %v3731, 5
      %v3734 = vor.u32 %v3730, %v3733
      %v3735 = vrot.slane %v3734, 4
      %v3737 = vshll.u32 %v3641, 16
      %v3739 = vrot.slane %v3737, 5
      %v3740 = vsel %vm350, %v3735, %v3739
      %v3742 = vshrl.u32 %v3634, 16
      %v3744 = vrot.slane %v3742, 4
      %v3745 = vshll.u32 %v3634, 16
      %v3747 = vrot.slane %v3745, 5
      %v3748 = vor.u32 %v3744, %v3747
      %v3749 = vrot.slane %v3748, 4
      %v3751 = vshll.u32 %v3642, 16
      %v3753 = vrot.slane %v3751, 5
      %v3754 = vsel %vm350, %v3749, %v3753
      %v3763 = vunpack.c.l.b16 %v3627
      %v3764 = vunpack.c.l.b16 %v3628
      %v3765 = vunpack.c.l.b16 %v3629
      %v3766 = vunpack.c.l.b16 %v3630
      %v3767 = vunpack.c.l.b16 %v3631
      %v3768 = vunpack.c.l.b16 %v3632
      %v3769 = vunpack.c.l.b16 %v3633
      %v3770 = vunpack.c.l.b16 %v3634
      %v3771 = vpack.c.b16 %v3764, %v3763
      %v3772 = vpack.c.b16 %v3766, %v3765
      %v3773 = vpack.c.b16 %v3768, %v3767
      %v3774 = vpack.c.b16 %v3770, %v3769
      %v3775 = vunpack.c.l.b16 %v3656
      %v3776 = vunpack.c.l.b16 %v3670
      %v3777 = vunpack.c.l.b16 %v3684
      %v3778 = vunpack.c.l.b16 %v3698
      %v3779 = vunpack.c.l.b16 %v3712
      %v3780 = vunpack.c.l.b16 %v3726
      %v3781 = vunpack.c.l.b16 %v3740
      %v3782 = vunpack.c.l.b16 %v3754
      %v3783 = vpack.c.b16 %v3776, %v3775
      %v3784 = vpack.c.b16 %v3778, %v3777
      %v3785 = vpack.c.b16 %v3780, %v3779
      %v3786 = vpack.c.b16 %v3782, %v3781
      %3787 = vrot.lane.b32.xlu0 %v3783, 32
      %v3788 = vpop.permute.xlu0 %3787
      %3789 = vrot.lane.b32.xlu0 %v3784, 32
      %v3790 = vpop.permute.xlu0 %3789
      %3791 = vrot.lane.b32.xlu0 %v3785, 32
      %v3792 = vpop.permute.xlu0 %3791
      %3793 = vrot.lane.b32.xlu0 %v3786, 32
      %v3794 = vpop.permute.xlu0 %3793
      %v3797 = vsel %vm503, %v3771, %v3788
      %v3800 = vsel %vm503, %v3772, %v3790
      %v3803 = vsel %vm503, %v3773, %v3792
      %v3806 = vsel %vm503, %v3774, %v3794
      %v3807 = vsel %vm516, %v3797, 0
      %v3808 = vsel %vm516, %v3800, 0
      %v3809 = vsel %vm516, %v3803, 0
      %v3810 = vsel %vm516, %v3806, 0
      %v3815 = vunpack.c.l.b16 %v3807
      %v3816 = vunpack.c.h.b16 %v3807
      %v3817 = vunpack.c.l.b16 %v3808
      %v3818 = vunpack.c.h.b16 %v3808
      %v3819 = vunpack.c.l.b16 %v3809
      %v3820 = vunpack.c.h.b16 %v3809
      %v3821 = vunpack.c.l.b16 %v3810
      %v3822 = vunpack.c.h.b16 %v3810
      %v3823 = vpack.c.b16 %v3815, %v3815
      %v3824 = vpack.c.b16 %v3816, %v3816
      %v3825 = vpack.c.b16 %v3817, %v3817
      %v3826 = vpack.c.b16 %v3818, %v3818
      %v3827 = vpack.c.b16 %v3819, %v3819
      %v3828 = vpack.c.b16 %v3820, %v3820
      %v3829 = vpack.c.b16 %v3821, %v3821
      %v3830 = vpack.c.b16 %v3822, %v3822
      %3839 = vst [vmem:[%s3618 + $0x4] sm:$0xf] %v3823
      %3840 = vst [vmem:[%s3618 + $0x28] sm:$0xf] %v3824
      %3841 = vst [vmem:[%s3618 + $0x4c] sm:$0xf] %v3825
      %3842 = vst [vmem:[%s3618 + $0x70] sm:$0xf] %v3826
      %3843 = vst [vmem:[%s3618 + $0x94] sm:$0xf] %v3827
      %3844 = vst [vmem:[%s3618 + $0xb8] sm:$0xf] %v3828
      %3845 = vst [vmem:[%s3618 + $0xdc] sm:$0xf] %v3829
      %3846 = vst [vmem:[%s3618 + $0x100] sm:$0xf] %v3830
      %v3847 = vld [vmem:[%s2105] sm:$0xf]
      %v3848 = vld [vmem:[%s2105 + $0x10] sm:$0xf]
      %v3849 = vld [vmem:[%s2105 + $0x20] sm:$0xf]
      %v3850 = vld [vmem:[%s2105 + $0x30] sm:$0xf]
      %v3851 = vld [vmem:[%s2105 + $0x40] sm:$0xf]
      %v3852 = vld [vmem:[%s2105 + $0x50] sm:$0xf]
      %v3853 = vld [vmem:[%s2105 + $0x60] sm:$0xf]
      %v3854 = vld [vmem:[%s2105 + $0x70] sm:$0xf]
      %v3855 = vld [vmem:[%s2105 + $0x4] sm:$0x1]
      %v3856 = vld [vmem:[%s2105 + $0x14] sm:$0x1]
      %v3857 = vld [vmem:[%s2105 + $0x24] sm:$0x1]
      %v3858 = vld [vmem:[%s2105 + $0x34] sm:$0x1]
      %v3859 = vld [vmem:[%s2105 + $0x44] sm:$0x1]
      %v3860 = vld [vmem:[%s2105 + $0x54] sm:$0x1]
      %v3861 = vld [vmem:[%s2105 + $0x64] sm:$0x1]
      %v3862 = vld [vmem:[%s2105 + $0x74] sm:$0x1]
      %v3864 = vshrl.u32 %v3847, 16
      %v3866 = vrot.slane %v3864, 4
      %v3867 = vshll.u32 %v3847, 16
      %v3869 = vrot.slane %v3867, 5
      %v3870 = vor.u32 %v3866, %v3869
      %v3871 = vrot.slane %v3870, 4
      %v3873 = vshll.u32 %v3855, 16
      %v3875 = vrot.slane %v3873, 5
      %v3876 = vsel %vm350, %v3871, %v3875
      %v3878 = vshrl.u32 %v3848, 16
      %v3880 = vrot.slane %v3878, 4
      %v3881 = vshll.u32 %v3848, 16
      %v3883 = vrot.slane %v3881, 5
      %v3884 = vor.u32 %v3880, %v3883
      %v3885 = vrot.slane %v3884, 4
      %v3887 = vshll.u32 %v3856, 16
      %v3889 = vrot.slane %v3887, 5
      %v3890 = vsel %vm350, %v3885, %v3889
      %v3892 = vshrl.u32 %v3849, 16
      %v3894 = vrot.slane %v3892, 4
      %v3895 = vshll.u32 %v3849, 16
      %v3897 = vrot.slane %v3895, 5
      %v3898 = vor.u32 %v3894, %v3897
      %v3899 = vrot.slane %v3898, 4
      %v3901 = vshll.u32 %v3857, 16
      %v3903 = vrot.slane %v3901, 5
      %v3904 = vsel %vm350, %v3899, %v3903
      %v3906 = vshrl.u32 %v3850, 16
      %v3908 = vrot.slane %v3906, 4
      %v3909 = vshll.u32 %v3850, 16
      %v3911 = vrot.slane %v3909, 5
      %v3912 = vor.u32 %v3908, %v3911
      %v3913 = vrot.slane %v3912, 4
      %v3915 = vshll.u32 %v3858, 16
      %v3917 = vrot.slane %v3915, 5
      %v3918 = vsel %vm350, %v3913, %v3917
      %v3920 = vshrl.u32 %v3851, 16
      %v3922 = vrot.slane %v3920, 4
      %v3923 = vshll.u32 %v3851, 16
      %v3925 = vrot.slane %v3923, 5
      %v3926 = vor.u32 %v3922, %v3925
      %v3927 = vrot.slane %v3926, 4
      %v3929 = vshll.u32 %v3859, 16
      %v3931 = vrot.slane %v3929, 5
      %v3932 = vsel %vm350, %v3927, %v3931
      %v3934 = vshrl.u32 %v3852, 16
      %v3936 = vrot.slane %v3934, 4
      %v3937 = vshll.u32 %v3852, 16
      %v3939 = vrot.slane %v3937, 5
      %v3940 = vor.u32 %v3936, %v3939
      %v3941 = vrot.slane %v3940, 4
      %v3943 = vshll.u32 %v3860, 16
      %v3945 = vrot.slane %v3943, 5
      %v3946 = vsel %vm350, %v3941, %v3945
      %v3948 = vshrl.u32 %v3853, 16
      %v3950 = vrot.slane %v3948, 4
      %v3951 = vshll.u32 %v3853, 16
      %v3953 = vrot.slane %v3951, 5
      %v3954 = vor.u32 %v3950, %v3953
      %v3955 = vrot.slane %v3954, 4
      %v3957 = vshll.u32 %v3861, 16
      %v3959 = vrot.slane %v3957, 5
      %v3960 = vsel %vm350, %v3955, %v3959
      %v3962 = vshrl.u32 %v3854, 16
      %v3964 = vrot.slane %v3962, 4
      %v3965 = vshll.u32 %v3854, 16
      %v3967 = vrot.slane %v3965, 5
      %v3968 = vor.u32 %v3964, %v3967
      %v3969 = vrot.slane %v3968, 4
      %v3971 = vshll.u32 %v3862, 16
      %v3973 = vrot.slane %v3971, 5
      %v3974 = vsel %vm350, %v3969, %v3973
      %v3983 = vunpack.c.l.b16 %v3847
      %v3984 = vunpack.c.l.b16 %v3848
      %v3985 = vunpack.c.l.b16 %v3849
      %v3986 = vunpack.c.l.b16 %v3850
      %v3987 = vunpack.c.l.b16 %v3851
      %v3988 = vunpack.c.l.b16 %v3852
      %v3989 = vunpack.c.l.b16 %v3853
      %v3990 = vunpack.c.l.b16 %v3854
      %v3991 = vpack.c.b16 %v3984, %v3983
      %v3992 = vpack.c.b16 %v3986, %v3985
      %v3993 = vpack.c.b16 %v3988, %v3987
      %v3994 = vpack.c.b16 %v3990, %v3989
      %v3995 = vunpack.c.l.b16 %v3876
      %v3996 = vunpack.c.l.b16 %v3890
      %v3997 = vunpack.c.l.b16 %v3904
      %v3998 = vunpack.c.l.b16 %v3918
      %v3999 = vunpack.c.l.b16 %v3932
      %v4000 = vunpack.c.l.b16 %v3946
      %v4001 = vunpack.c.l.b16 %v3960
      %v4002 = vunpack.c.l.b16 %v3974
      %v4003 = vpack.c.b16 %v3996, %v3995
      %v4004 = vpack.c.b16 %v3998, %v3997
      %v4005 = vpack.c.b16 %v4000, %v3999
      %v4006 = vpack.c.b16 %v4002, %v4001
      %4007 = vrot.lane.b32.xlu0 %v4003, 32
      %v4008 = vpop.permute.xlu0 %4007
      %4009 = vrot.lane.b32.xlu0 %v4004, 32
      %v4010 = vpop.permute.xlu0 %4009
      %4011 = vrot.lane.b32.xlu0 %v4005, 32
      %v4012 = vpop.permute.xlu0 %4011
      %4013 = vrot.lane.b32.xlu0 %v4006, 32
      %v4014 = vpop.permute.xlu0 %4013
      %v4017 = vsel %vm503, %v3991, %v4008
      %v4020 = vsel %vm503, %v3992, %v4010
      %v4023 = vsel %vm503, %v3993, %v4012
      %v4026 = vsel %vm503, %v3994, %v4014
      %v4027 = vsel %vm516, %v4017, 0
      %v4028 = vsel %vm516, %v4020, 0
      %v4029 = vsel %vm516, %v4023, 0
      %v4030 = vsel %vm516, %v4026, 0
      %v4035 = vunpack.c.l.b16 %v4027
      %v4036 = vunpack.c.h.b16 %v4027
      %v4037 = vunpack.c.l.b16 %v4028
      %v4038 = vunpack.c.h.b16 %v4028
      %v4039 = vunpack.c.l.b16 %v4029
      %v4040 = vunpack.c.h.b16 %v4029
      %v4041 = vunpack.c.l.b16 %v4030
      %v4042 = vunpack.c.h.b16 %v4030
      %v4043 = vpack.c.b16 %v4035, %v4035
      %v4044 = vpack.c.b16 %v4036, %v4036
      %v4045 = vpack.c.b16 %v4037, %v4037
      %v4046 = vpack.c.b16 %v4038, %v4038
      %v4047 = vpack.c.b16 %v4039, %v4039
      %v4048 = vpack.c.b16 %v4040, %v4040
      %v4049 = vpack.c.b16 %v4041, %v4041
      %v4050 = vpack.c.b16 %v4042, %v4042
      %4059 = vst [vmem:[%s3618 + $0x8] sm:$0xf] %v4043
      %4060 = vst [vmem:[%s3618 + $0x2c] sm:$0xf] %v4044
      %4061 = vst [vmem:[%s3618 + $0x50] sm:$0xf] %v4045
      %4062 = vst [vmem:[%s3618 + $0x74] sm:$0xf] %v4046
      %4063 = vst [vmem:[%s3618 + $0x98] sm:$0xf] %v4047
      %4064 = vst [vmem:[%s3618 + $0xbc] sm:$0xf] %v4048
      %4065 = vst [vmem:[%s3618 + $0xe0] sm:$0xf] %v4049
      %4066 = vst [vmem:[%s3618 + $0x104] sm:$0xf] %v4050
      %s4067 = scalar_lea.vmem %s296, 432
      %v4068 = vld [vmem:[%s4067] sm:$0xf]
      %v4069 = vld [vmem:[%s4067 + $0x10] sm:$0xf]
      %v4070 = vld [vmem:[%s4067 + $0x20] sm:$0xf]
      %v4071 = vld [vmem:[%s4067 + $0x30] sm:$0xf]
      %v4072 = vld [vmem:[%s4067 + $0x40] sm:$0xf]
      %v4073 = vld [vmem:[%s4067 + $0x50] sm:$0xf]
      %v4074 = vld [vmem:[%s4067 + $0x60] sm:$0xf]
      %v4075 = vld [vmem:[%s4067 + $0x70] sm:$0xf]
      %v4076 = vld [vmem:[%s4067 + $0x4] sm:$0x1]
      %v4077 = vld [vmem:[%s4067 + $0x14] sm:$0x1]
      %v4078 = vld [vmem:[%s4067 + $0x24] sm:$0x1]
      %v4079 = vld [vmem:[%s4067 + $0x34] sm:$0x1]
      %v4080 = vld [vmem:[%s4067 + $0x44] sm:$0x1]
      %v4081 = vld [vmem:[%s4067 + $0x54] sm:$0x1]
      %v4082 = vld [vmem:[%s4067 + $0x64] sm:$0x1]
      %v4083 = vld [vmem:[%s4067 + $0x74] sm:$0x1]
      %v4085 = vshrl.u32 %v4068, 16
      %v4087 = vrot.slane %v4085, 4
      %v4088 = vshll.u32 %v4068, 16
      %v4090 = vrot.slane %v4088, 5
      %v4091 = vor.u32 %v4087, %v4090
      %v4092 = vrot.slane %v4091, 4
      %v4094 = vshll.u32 %v4076, 16
      %v4096 = vrot.slane %v4094, 5
      %v4097 = vsel %vm350, %v4092, %v4096
      %v4099 = vshrl.u32 %v4069, 16
      %v4101 = vrot.slane %v4099, 4
      %v4102 = vshll.u32 %v4069, 16
      %v4104 = vrot.slane %v4102, 5
      %v4105 = vor.u32 %v4101, %v4104
      %v4106 = vrot.slane %v4105, 4
      %v4108 = vshll.u32 %v4077, 16
      %v4110 = vrot.slane %v4108, 5
      %v4111 = vsel %vm350, %v4106, %v4110
      %v4113 = vshrl.u32 %v4070, 16
      %v4115 = vrot.slane %v4113, 4
      %v4116 = vshll.u32 %v4070, 16
      %v4118 = vrot.slane %v4116, 5
      %v4119 = vor.u32 %v4115, %v4118
      %v4120 = vrot.slane %v4119, 4
      %v4122 = vshll.u32 %v4078, 16
      %v4124 = vrot.slane %v4122, 5
      %v4125 = vsel %vm350, %v4120, %v4124
      %v4127 = vshrl.u32 %v4071, 16
      %v4129 = vrot.slane %v4127, 4
      %v4130 = vshll.u32 %v4071, 16
      %v4132 = vrot.slane %v4130, 5
      %v4133 = vor.u32 %v4129, %v4132
      %v4134 = vrot.slane %v4133, 4
      %v4136 = vshll.u32 %v4079, 16
      %v4138 = vrot.slane %v4136, 5
      %v4139 = vsel %vm350, %v4134, %v4138
      %v4141 = vshrl.u32 %v4072, 16
      %v4143 = vrot.slane %v4141, 4
      %v4144 = vshll.u32 %v4072, 16
      %v4146 = vrot.slane %v4144, 5
      %v4147 = vor.u32 %v4143, %v4146
      %v4148 = vrot.slane %v4147, 4
      %v4150 = vshll.u32 %v4080, 16
      %v4152 = vrot.slane %v4150, 5
      %v4153 = vsel %vm350, %v4148, %v4152
      %v4155 = vshrl.u32 %v4073, 16
      %v4157 = vrot.slane %v4155, 4
      %v4158 = vshll.u32 %v4073, 16
      %v4160 = vrot.slane %v4158, 5
      %v4161 = vor.u32 %v4157, %v4160
      %v4162 = vrot.slane %v4161, 4
      %v4164 = vshll.u32 %v4081, 16
      %v4166 = vrot.slane %v4164, 5
      %v4167 = vsel %vm350, %v4162, %v4166
      %v4169 = vshrl.u32 %v4074, 16
      %v4171 = vrot.slane %v4169, 4
      %v4172 = vshll.u32 %v4074, 16
      %v4174 = vrot.slane %v4172, 5
      %v4175 = vor.u32 %v4171, %v4174
      %v4176 = vrot.slane %v4175, 4
      %v4178 = vshll.u32 %v4082, 16
      %v4180 = vrot.slane %v4178, 5
      %v4181 = vsel %vm350, %v4176, %v4180
      %v4183 = vshrl.u32 %v4075, 16
      %v4185 = vrot.slane %v4183, 4
      %v4186 = vshll.u32 %v4075, 16
      %v4188 = vrot.slane %v4186, 5
      %v4189 = vor.u32 %v4185, %v4188
      %v4190 = vrot.slane %v4189, 4
      %v4192 = vshll.u32 %v4083, 16
      %v4194 = vrot.slane %v4192, 5
      %v4195 = vsel %vm350, %v4190, %v4194
      %v4204 = vunpack.c.l.b16 %v4068
      %v4205 = vunpack.c.l.b16 %v4069
      %v4206 = vunpack.c.l.b16 %v4070
      %v4207 = vunpack.c.l.b16 %v4071
      %v4208 = vunpack.c.l.b16 %v4072
      %v4209 = vunpack.c.l.b16 %v4073
      %v4210 = vunpack.c.l.b16 %v4074
      %v4211 = vunpack.c.l.b16 %v4075
      %v4212 = vpack.c.b16 %v4205, %v4204
      %v4213 = vpack.c.b16 %v4207, %v4206
      %v4214 = vpack.c.b16 %v4209, %v4208
      %v4215 = vpack.c.b16 %v4211, %v4210
      %v4216 = vunpack.c.l.b16 %v4097
      %v4217 = vunpack.c.l.b16 %v4111
      %v4218 = vunpack.c.l.b16 %v4125
      %v4219 = vunpack.c.l.b16 %v4139
      %v4220 = vunpack.c.l.b16 %v4153
      %v4221 = vunpack.c.l.b16 %v4167
      %v4222 = vunpack.c.l.b16 %v4181
      %v4223 = vunpack.c.l.b16 %v4195
      %v4224 = vpack.c.b16 %v4217, %v4216
      %v4225 = vpack.c.b16 %v4219, %v4218
      %v4226 = vpack.c.b16 %v4221, %v4220
      %v4227 = vpack.c.b16 %v4223, %v4222
      %4228 = vrot.lane.b32.xlu0 %v4224, 32
      %v4229 = vpop.permute.xlu0 %4228
      %4230 = vrot.lane.b32.xlu0 %v4225, 32
      %v4231 = vpop.permute.xlu0 %4230
      %4232 = vrot.lane.b32.xlu0 %v4226, 32
      %v4233 = vpop.permute.xlu0 %4232
      %4234 = vrot.lane.b32.xlu0 %v4227, 32
      %v4235 = vpop.permute.xlu0 %4234
      %v4238 = vsel %vm503, %v4212, %v4229
      %v4241 = vsel %vm503, %v4213, %v4231
      %v4244 = vsel %vm503, %v4214, %v4233
      %v4247 = vsel %vm503, %v4215, %v4235
      %v4248 = vsel %vm516, %v4238, 0
      %v4249 = vsel %vm516, %v4241, 0
      %v4250 = vsel %vm516, %v4244, 0
      %v4251 = vsel %vm516, %v4247, 0
      %v4256 = vunpack.c.l.b16 %v4248
      %v4257 = vunpack.c.h.b16 %v4248
      %v4258 = vunpack.c.l.b16 %v4249
      %v4259 = vunpack.c.h.b16 %v4249
      %v4260 = vunpack.c.l.b16 %v4250
      %v4261 = vunpack.c.h.b16 %v4250
      %v4262 = vunpack.c.l.b16 %v4251
      %v4263 = vunpack.c.h.b16 %v4251
      %v4264 = vpack.c.b16 %v4256, %v4256
      %v4265 = vpack.c.b16 %v4257, %v4257
      %v4266 = vpack.c.b16 %v4258, %v4258
      %v4267 = vpack.c.b16 %v4259, %v4259
      %v4268 = vpack.c.b16 %v4260, %v4260
      %v4269 = vpack.c.b16 %v4261, %v4261
      %v4270 = vpack.c.b16 %v4262, %v4262
      %v4271 = vpack.c.b16 %v4263, %v4263
      %4280 = vst [vmem:[%s3618 + $0xc] sm:$0xf] %v4264
      %4281 = vst [vmem:[%s3618 + $0x30] sm:$0xf] %v4265
      %4282 = vst [vmem:[%s3618 + $0x54] sm:$0xf] %v4266
      %4283 = vst [vmem:[%s3618 + $0x78] sm:$0xf] %v4267
      %4284 = vst [vmem:[%s3618 + $0x9c] sm:$0xf] %v4268
      %4285 = vst [vmem:[%s3618 + $0xc0] sm:$0xf] %v4269
      %4286 = vst [vmem:[%s3618 + $0xe4] sm:$0xf] %v4270
      %4287 = vst [vmem:[%s3618 + $0x108] sm:$0xf] %v4271
      %s4288 = scalar_lea.vmem %s296, 440
      %v4289 = vld [vmem:[%s4288] sm:$0xf]
      %v4290 = vld [vmem:[%s4288 + $0x10] sm:$0xf]
      %v4291 = vld [vmem:[%s4288 + $0x20] sm:$0xf]
      %v4292 = vld [vmem:[%s4288 + $0x30] sm:$0xf]
      %v4293 = vld [vmem:[%s4288 + $0x40] sm:$0xf]
      %v4294 = vld [vmem:[%s4288 + $0x50] sm:$0xf]
      %v4295 = vld [vmem:[%s4288 + $0x60] sm:$0xf]
      %v4296 = vld [vmem:[%s4288 + $0x70] sm:$0xf]
      %v4297 = vld [vmem:[%s4288 + $0x4] sm:$0x1]
      %v4298 = vld [vmem:[%s4288 + $0x14] sm:$0x1]
      %v4299 = vld [vmem:[%s4288 + $0x24] sm:$0x1]
      %v4300 = vld [vmem:[%s4288 + $0x34] sm:$0x1]
      %v4301 = vld [vmem:[%s4288 + $0x44] sm:$0x1]
      %v4302 = vld [vmem:[%s4288 + $0x54] sm:$0x1]
      %v4303 = vld [vmem:[%s4288 + $0x64] sm:$0x1]
      %v4304 = vld [vmem:[%s4288 + $0x74] sm:$0x1]
      %v4306 = vshrl.u32 %v4289, 16
      %v4308 = vrot.slane %v4306, 4
      %v4309 = vshll.u32 %v4289, 16
      %v4311 = vrot.slane %v4309, 5
      %v4312 = vor.u32 %v4308, %v4311
      %v4313 = vrot.slane %v4312, 4
      %v4315 = vshll.u32 %v4297, 16
      %v4317 = vrot.slane %v4315, 5
      %v4318 = vsel %vm350, %v4313, %v4317
      %v4320 = vshrl.u32 %v4290, 16
      %v4322 = vrot.slane %v4320, 4
      %v4323 = vshll.u32 %v4290, 16
      %v4325 = vrot.slane %v4323, 5
      %v4326 = vor.u32 %v4322, %v4325
      %v4327 = vrot.slane %v4326, 4
      %v4329 = vshll.u32 %v4298, 16
      %v4331 = vrot.slane %v4329, 5
      %v4332 = vsel %vm350, %v4327, %v4331
      %v4334 = vshrl.u32 %v4291, 16
      %v4336 = vrot.slane %v4334, 4
      %v4337 = vshll.u32 %v4291, 16
      %v4339 = vrot.slane %v4337, 5
      %v4340 = vor.u32 %v4336, %v4339
      %v4341 = vrot.slane %v4340, 4
      %v4343 = vshll.u32 %v4299, 16
      %v4345 = vrot.slane %v4343, 5
      %v4346 = vsel %vm350, %v4341, %v4345
      %v4348 = vshrl.u32 %v4292, 16
      %v4350 = vrot.slane %v4348, 4
      %v4351 = vshll.u32 %v4292, 16
      %v4353 = vrot.slane %v4351, 5
      %v4354 = vor.u32 %v4350, %v4353
      %v4355 = vrot.slane %v4354, 4
      %v4357 = vshll.u32 %v4300, 16
      %v4359 = vrot.slane %v4357, 5
      %v4360 = vsel %vm350, %v4355, %v4359
      %v4362 = vshrl.u32 %v4293, 16
      %v4364 = vrot.slane %v4362, 4
      %v4365 = vshll.u32 %v4293, 16
      %v4367 = vrot.slane %v4365, 5
      %v4368 = vor.u32 %v4364, %v4367
      %v4369 = vrot.slane %v4368, 4
      %v4371 = vshll.u32 %v4301, 16
      %v4373 = vrot.slane %v4371, 5
      %v4374 = vsel %vm350, %v4369, %v4373
      %v4376 = vshrl.u32 %v4294, 16
      %v4378 = vrot.slane %v4376, 4
      %v4379 = vshll.u32 %v4294, 16
      %v4381 = vrot.slane %v4379, 5
      %v4382 = vor.u32 %v4378, %v4381
      %v4383 = vrot.slane %v4382, 4
      %v4385 = vshll.u32 %v4302, 16
      %v4387 = vrot.slane %v4385, 5
      %v4388 = vsel %vm350, %v4383, %v4387
      %v4390 = vshrl.u32 %v4295, 16
      %v4392 = vrot.slane %v4390, 4
      %v4393 = vshll.u32 %v4295, 16
      %v4395 = vrot.slane %v4393, 5
      %v4396 = vor.u32 %v4392, %v4395
      %v4397 = vrot.slane %v4396, 4
      %v4399 = vshll.u32 %v4303, 16
      %v4401 = vrot.slane %v4399, 5
      %v4402 = vsel %vm350, %v4397, %v4401
      %v4404 = vshrl.u32 %v4296, 16
      %v4406 = vrot.slane %v4404, 4
      %v4407 = vshll.u32 %v4296, 16
      %v4409 = vrot.slane %v4407, 5
      %v4410 = vor.u32 %v4406, %v4409
      %v4411 = vrot.slane %v4410, 4
      %v4413 = vshll.u32 %v4304, 16
      %v4415 = vrot.slane %v4413, 5
      %v4416 = vsel %vm350, %v4411, %v4415
      %v4425 = vunpack.c.l.b16 %v4289
      %v4426 = vunpack.c.l.b16 %v4290
      %v4427 = vunpack.c.l.b16 %v4291
      %v4428 = vunpack.c.l.b16 %v4292
      %v4429 = vunpack.c.l.b16 %v4293
      %v4430 = vunpack.c.l.b16 %v4294
      %v4431 = vunpack.c.l.b16 %v4295
      %v4432 = vunpack.c.l.b16 %v4296
      %v4433 = vpack.c.b16 %v4426, %v4425
      %v4434 = vpack.c.b16 %v4428, %v4427
      %v4435 = vpack.c.b16 %v4430, %v4429
      %v4436 = vpack.c.b16 %v4432, %v4431
      %v4437 = vunpack.c.l.b16 %v4318
      %v4438 = vunpack.c.l.b16 %v4332
      %v4439 = vunpack.c.l.b16 %v4346
      %v4440 = vunpack.c.l.b16 %v4360
      %v4441 = vunpack.c.l.b16 %v4374
      %v4442 = vunpack.c.l.b16 %v4388
      %v4443 = vunpack.c.l.b16 %v4402
      %v4444 = vunpack.c.l.b16 %v4416
      %v4445 = vpack.c.b16 %v4438, %v4437
      %v4446 = vpack.c.b16 %v4440, %v4439
      %v4447 = vpack.c.b16 %v4442, %v4441
      %v4448 = vpack.c.b16 %v4444, %v4443
      %4449 = vrot.lane.b32.xlu0 %v4445, 32
      %v4450 = vpop.permute.xlu0 %4449
      %4451 = vrot.lane.b32.xlu0 %v4446, 32
      %v4452 = vpop.permute.xlu0 %4451
      %4453 = vrot.lane.b32.xlu0 %v4447, 32
      %v4454 = vpop.permute.xlu0 %4453
      %4455 = vrot.lane.b32.xlu0 %v4448, 32
      %v4456 = vpop.permute.xlu0 %4455
      %v4459 = vsel %vm503, %v4433, %v4450
      %v4462 = vsel %vm503, %v4434, %v4452
      %v4465 = vsel %vm503, %v4435, %v4454
      %v4468 = vsel %vm503, %v4436, %v4456
      %v4469 = vsel %vm516, %v4459, 0
      %v4470 = vsel %vm516, %v4462, 0
      %v4471 = vsel %vm516, %v4465, 0
      %v4472 = vsel %vm516, %v4468, 0
      %v4477 = vunpack.c.l.b16 %v4469
      %v4478 = vunpack.c.h.b16 %v4469
      %v4479 = vunpack.c.l.b16 %v4470
      %v4480 = vunpack.c.h.b16 %v4470
      %v4481 = vunpack.c.l.b16 %v4471
      %v4482 = vunpack.c.h.b16 %v4471
      %v4483 = vunpack.c.l.b16 %v4472
      %v4484 = vunpack.c.h.b16 %v4472
      %v4485 = vpack.c.b16 %v4477, %v4477
      %v4486 = vpack.c.b16 %v4478, %v4478
      %v4487 = vpack.c.b16 %v4479, %v4479
      %v4488 = vpack.c.b16 %v4480, %v4480
      %v4489 = vpack.c.b16 %v4481, %v4481
      %v4490 = vpack.c.b16 %v4482, %v4482
      %v4491 = vpack.c.b16 %v4483, %v4483
      %v4492 = vpack.c.b16 %v4484, %v4484
      %4501 = vst [vmem:[%s3618 + $0x10] sm:$0xf] %v4485
      %4502 = vst [vmem:[%s3618 + $0x34] sm:$0xf] %v4486
      %4503 = vst [vmem:[%s3618 + $0x58] sm:$0xf] %v4487
      %4504 = vst [vmem:[%s3618 + $0x7c] sm:$0xf] %v4488
      %4505 = vst [vmem:[%s3618 + $0xa0] sm:$0xf] %v4489
      %4506 = vst [vmem:[%s3618 + $0xc4] sm:$0xf] %v4490
      %4507 = vst [vmem:[%s3618 + $0xe8] sm:$0xf] %v4491
      %4508 = vst [vmem:[%s3618 + $0x10c] sm:$0xf] %v4492
      %s4509 = scalar_lea.vmem %s296, 448
      %v4510 = vld [vmem:[%s4509] sm:$0xf]
      %v4511 = vld [vmem:[%s4509 + $0x10] sm:$0xf]
      %v4512 = vld [vmem:[%s4509 + $0x20] sm:$0xf]
      %v4513 = vld [vmem:[%s4509 + $0x30] sm:$0xf]
      %v4514 = vld [vmem:[%s4509 + $0x40] sm:$0xf]
      %v4515 = vld [vmem:[%s4509 + $0x50] sm:$0xf]
      %v4516 = vld [vmem:[%s4509 + $0x60] sm:$0xf]
      %v4517 = vld [vmem:[%s4509 + $0x70] sm:$0xf]
      %v4518 = vld [vmem:[%s4509 + $0x4] sm:$0x1]
      %v4519 = vld [vmem:[%s4509 + $0x14] sm:$0x1]
      %v4520 = vld [vmem:[%s4509 + $0x24] sm:$0x1]
      %v4521 = vld [vmem:[%s4509 + $0x34] sm:$0x1]
      %v4522 = vld [vmem:[%s4509 + $0x44] sm:$0x1]
      %v4523 = vld [vmem:[%s4509 + $0x54] sm:$0x1]
      %v4524 = vld [vmem:[%s4509 + $0x64] sm:$0x1]
      %v4525 = vld [vmem:[%s4509 + $0x74] sm:$0x1]
      %v4527 = vshrl.u32 %v4510, 16
      %v4529 = vrot.slane %v4527, 4
      %v4530 = vshll.u32 %v4510, 16
      %v4532 = vrot.slane %v4530, 5
      %v4533 = vor.u32 %v4529, %v4532
      %v4534 = vrot.slane %v4533, 4
      %v4536 = vshll.u32 %v4518, 16
      %v4538 = vrot.slane %v4536, 5
      %v4539 = vsel %vm350, %v4534, %v4538
      %v4541 = vshrl.u32 %v4511, 16
      %v4543 = vrot.slane %v4541, 4
      %v4544 = vshll.u32 %v4511, 16
      %v4546 = vrot.slane %v4544, 5
      %v4547 = vor.u32 %v4543, %v4546
      %v4548 = vrot.slane %v4547, 4
      %v4550 = vshll.u32 %v4519, 16
      %v4552 = vrot.slane %v4550, 5
      %v4553 = vsel %vm350, %v4548, %v4552
      %v4555 = vshrl.u32 %v4512, 16
      %v4557 = vrot.slane %v4555, 4
      %v4558 = vshll.u32 %v4512, 16
      %v4560 = vrot.slane %v4558, 5
      %v4561 = vor.u32 %v4557, %v4560
      %v4562 = vrot.slane %v4561, 4
      %v4564 = vshll.u32 %v4520, 16
      %v4566 = vrot.slane %v4564, 5
      %v4567 = vsel %vm350, %v4562, %v4566
      %v4569 = vshrl.u32 %v4513, 16
      %v4571 = vrot.slane %v4569, 4
      %v4572 = vshll.u32 %v4513, 16
      %v4574 = vrot.slane %v4572, 5
      %v4575 = vor.u32 %v4571, %v4574
      %v4576 = vrot.slane %v4575, 4
      %v4578 = vshll.u32 %v4521, 16
      %v4580 = vrot.slane %v4578, 5
      %v4581 = vsel %vm350, %v4576, %v4580
      %v4583 = vshrl.u32 %v4514, 16
      %v4585 = vrot.slane %v4583, 4
      %v4586 = vshll.u32 %v4514, 16
      %v4588 = vrot.slane %v4586, 5
      %v4589 = vor.u32 %v4585, %v4588
      %v4590 = vrot.slane %v4589, 4
      %v4592 = vshll.u32 %v4522, 16
      %v4594 = vrot.slane %v4592, 5
      %v4595 = vsel %vm350, %v4590, %v4594
      %v4597 = vshrl.u32 %v4515, 16
      %v4599 = vrot.slane %v4597, 4
      %v4600 = vshll.u32 %v4515, 16
      %v4602 = vrot.slane %v4600, 5
      %v4603 = vor.u32 %v4599, %v4602
      %v4604 = vrot.slane %v4603, 4
      %v4606 = vshll.u32 %v4523, 16
      %v4608 = vrot.slane %v4606, 5
      %v4609 = vsel %vm350, %v4604, %v4608
      %v4611 = vshrl.u32 %v4516, 16
      %v4613 = vrot.slane %v4611, 4
      %v4614 = vshll.u32 %v4516, 16
      %v4616 = vrot.slane %v4614, 5
      %v4617 = vor.u32 %v4613, %v4616
      %v4618 = vrot.slane %v4617, 4
      %v4620 = vshll.u32 %v4524, 16
      %v4622 = vrot.slane %v4620, 5
      %v4623 = vsel %vm350, %v4618, %v4622
      %v4625 = vshrl.u32 %v4517, 16
      %v4627 = vrot.slane %v4625, 4
      %v4628 = vshll.u32 %v4517, 16
      %v4630 = vrot.slane %v4628, 5
      %v4631 = vor.u32 %v4627, %v4630
      %v4632 = vrot.slane %v4631, 4
      %v4634 = vshll.u32 %v4525, 16
      %v4636 = vrot.slane %v4634, 5
      %v4637 = vsel %vm350, %v4632, %v4636
      %v4646 = vunpack.c.l.b16 %v4510
      %v4647 = vunpack.c.l.b16 %v4511
      %v4648 = vunpack.c.l.b16 %v4512
      %v4649 = vunpack.c.l.b16 %v4513
      %v4650 = vunpack.c.l.b16 %v4514
      %v4651 = vunpack.c.l.b16 %v4515
      %v4652 = vunpack.c.l.b16 %v4516
      %v4653 = vunpack.c.l.b16 %v4517
      %v4654 = vpack.c.b16 %v4647, %v4646
      %v4655 = vpack.c.b16 %v4649, %v4648
      %v4656 = vpack.c.b16 %v4651, %v4650
      %v4657 = vpack.c.b16 %v4653, %v4652
      %v4658 = vunpack.c.l.b16 %v4539
      %v4659 = vunpack.c.l.b16 %v4553
      %v4660 = vunpack.c.l.b16 %v4567
      %v4661 = vunpack.c.l.b16 %v4581
      %v4662 = vunpack.c.l.b16 %v4595
      %v4663 = vunpack.c.l.b16 %v4609
      %v4664 = vunpack.c.l.b16 %v4623
      %v4665 = vunpack.c.l.b16 %v4637
      %v4666 = vpack.c.b16 %v4659, %v4658
      %v4667 = vpack.c.b16 %v4661, %v4660
      %v4668 = vpack.c.b16 %v4663, %v4662
      %v4669 = vpack.c.b16 %v4665, %v4664
      %4670 = vrot.lane.b32.xlu0 %v4666, 32
      %v4671 = vpop.permute.xlu0 %4670
      %4672 = vrot.lane.b32.xlu0 %v4667, 32
      %v4673 = vpop.permute.xlu0 %4672
      %4674 = vrot.lane.b32.xlu0 %v4668, 32
      %v4675 = vpop.permute.xlu0 %4674
      %4676 = vrot.lane.b32.xlu0 %v4669, 32
      %v4677 = vpop.permute.xlu0 %4676
      %v4680 = vsel %vm503, %v4654, %v4671
      %v4683 = vsel %vm503, %v4655, %v4673
      %v4686 = vsel %vm503, %v4656, %v4675
      %v4689 = vsel %vm503, %v4657, %v4677
      %v4690 = vsel %vm516, %v4680, 0
      %v4691 = vsel %vm516, %v4683, 0
      %v4692 = vsel %vm516, %v4686, 0
      %v4693 = vsel %vm516, %v4689, 0
      %v4698 = vunpack.c.l.b16 %v4690
      %v4699 = vunpack.c.h.b16 %v4690
      %v4700 = vunpack.c.l.b16 %v4691
      %v4701 = vunpack.c.h.b16 %v4691
      %v4702 = vunpack.c.l.b16 %v4692
      %v4703 = vunpack.c.h.b16 %v4692
      %v4704 = vunpack.c.l.b16 %v4693
      %v4705 = vunpack.c.h.b16 %v4693
      %v4706 = vpack.c.b16 %v4698, %v4698
      %v4707 = vpack.c.b16 %v4699, %v4699
      %v4708 = vpack.c.b16 %v4700, %v4700
      %v4709 = vpack.c.b16 %v4701, %v4701
      %v4710 = vpack.c.b16 %v4702, %v4702
      %v4711 = vpack.c.b16 %v4703, %v4703
      %v4712 = vpack.c.b16 %v4704, %v4704
      %v4713 = vpack.c.b16 %v4705, %v4705
      %4722 = vst [vmem:[%s3618 + $0x14] sm:$0xf] %v4706
      %4723 = vst [vmem:[%s3618 + $0x38] sm:$0xf] %v4707
      %4724 = vst [vmem:[%s3618 + $0x5c] sm:$0xf] %v4708
      %4725 = vst [vmem:[%s3618 + $0x80] sm:$0xf] %v4709
      %4726 = vst [vmem:[%s3618 + $0xa4] sm:$0xf] %v4710
      %4727 = vst [vmem:[%s3618 + $0xc8] sm:$0xf] %v4711
      %4728 = vst [vmem:[%s3618 + $0xec] sm:$0xf] %v4712
      %4729 = vst [vmem:[%s3618 + $0x110] sm:$0xf] %v4713
      %v4730 = vld [vmem:[%s316] sm:$0xf]
      %v4731 = vld [vmem:[%s316 + $0x10] sm:$0xf]
      %v4732 = vld [vmem:[%s316 + $0x20] sm:$0xf]
      %v4733 = vld [vmem:[%s316 + $0x30] sm:$0xf]
      %v4734 = vld [vmem:[%s316 + $0x40] sm:$0xf]
      %v4735 = vld [vmem:[%s316 + $0x50] sm:$0xf]
      %v4736 = vld [vmem:[%s316 + $0x60] sm:$0xf]
      %v4737 = vld [vmem:[%s316 + $0x70] sm:$0xf]
      %v4738 = vld [vmem:[%s316 + $0x4] sm:$0x1]
      %v4739 = vld [vmem:[%s316 + $0x14] sm:$0x1]
      %v4740 = vld [vmem:[%s316 + $0x24] sm:$0x1]
      %v4741 = vld [vmem:[%s316 + $0x34] sm:$0x1]
      %v4742 = vld [vmem:[%s316 + $0x44] sm:$0x1]
      %v4743 = vld [vmem:[%s316 + $0x54] sm:$0x1]
      %v4744 = vld [vmem:[%s316 + $0x64] sm:$0x1]
      %v4745 = vld [vmem:[%s316 + $0x74] sm:$0x1]
      %v4747 = vshrl.u32 %v4730, 16
      %v4749 = vrot.slane %v4747, 4
      %v4750 = vshll.u32 %v4730, 16
      %v4752 = vrot.slane %v4750, 5
      %v4753 = vor.u32 %v4749, %v4752
      %v4754 = vrot.slane %v4753, 4
      %v4756 = vshll.u32 %v4738, 16
      %v4758 = vrot.slane %v4756, 5
      %v4759 = vsel %vm350, %v4754, %v4758
      %v4761 = vshrl.u32 %v4731, 16
      %v4763 = vrot.slane %v4761, 4
      %v4764 = vshll.u32 %v4731, 16
      %v4766 = vrot.slane %v4764, 5
      %v4767 = vor.u32 %v4763, %v4766
      %v4768 = vrot.slane %v4767, 4
      %v4770 = vshll.u32 %v4739, 16
      %v4772 = vrot.slane %v4770, 5
      %v4773 = vsel %vm350, %v4768, %v4772
      %v4775 = vshrl.u32 %v4732, 16
      %v4777 = vrot.slane %v4775, 4
      %v4778 = vshll.u32 %v4732, 16
      %v4780 = vrot.slane %v4778, 5
      %v4781 = vor.u32 %v4777, %v4780
      %v4782 = vrot.slane %v4781, 4
      %v4784 = vshll.u32 %v4740, 16
      %v4786 = vrot.slane %v4784, 5
      %v4787 = vsel %vm350, %v4782, %v4786
      %v4789 = vshrl.u32 %v4733, 16
      %v4791 = vrot.slane %v4789, 4
      %v4792 = vshll.u32 %v4733, 16
      %v4794 = vrot.slane %v4792, 5
      %v4795 = vor.u32 %v4791, %v4794
      %v4796 = vrot.slane %v4795, 4
      %v4798 = vshll.u32 %v4741, 16
      %v4800 = vrot.slane %v4798, 5
      %v4801 = vsel %vm350, %v4796, %v4800
      %v4803 = vshrl.u32 %v4734, 16
      %v4805 = vrot.slane %v4803, 4
      %v4806 = vshll.u32 %v4734, 16
      %v4808 = vrot.slane %v4806, 5
      %v4809 = vor.u32 %v4805, %v4808
      %v4810 = vrot.slane %v4809, 4
      %v4812 = vshll.u32 %v4742, 16
      %v4814 = vrot.slane %v4812, 5
      %v4815 = vsel %vm350, %v4810, %v4814
      %v4817 = vshrl.u32 %v4735, 16
      %v4819 = vrot.slane %v4817, 4
      %v4820 = vshll.u32 %v4735, 16
      %v4822 = vrot.slane %v4820, 5
      %v4823 = vor.u32 %v4819, %v4822
      %v4824 = vrot.slane %v4823, 4
      %v4826 = vshll.u32 %v4743, 16
      %v4828 = vrot.slane %v4826, 5
      %v4829 = vsel %vm350, %v4824, %v4828
      %v4831 = vshrl.u32 %v4736, 16
      %v4833 = vrot.slane %v4831, 4
      %v4834 = vshll.u32 %v4736, 16
      %v4836 = vrot.slane %v4834, 5
      %v4837 = vor.u32 %v4833, %v4836
      %v4838 = vrot.slane %v4837, 4
      %v4840 = vshll.u32 %v4744, 16
      %v4842 = vrot.slane %v4840, 5
      %v4843 = vsel %vm350, %v4838, %v4842
      %v4845 = vshrl.u32 %v4737, 16
      %v4847 = vrot.slane %v4845, 4
      %v4848 = vshll.u32 %v4737, 16
      %v4850 = vrot.slane %v4848, 5
      %v4851 = vor.u32 %v4847, %v4850
      %v4852 = vrot.slane %v4851, 4
      %v4854 = vshll.u32 %v4745, 16
      %v4856 = vrot.slane %v4854, 5
      %v4857 = vsel %vm350, %v4852, %v4856
      %v4866 = vunpack.c.l.b16 %v4730
      %v4867 = vunpack.c.l.b16 %v4731
      %v4868 = vunpack.c.l.b16 %v4732
      %v4869 = vunpack.c.l.b16 %v4733
      %v4870 = vunpack.c.l.b16 %v4734
      %v4871 = vunpack.c.l.b16 %v4735
      %v4872 = vunpack.c.l.b16 %v4736
      %v4873 = vunpack.c.l.b16 %v4737
      %v4874 = vpack.c.b16 %v4867, %v4866
      %v4875 = vpack.c.b16 %v4869, %v4868
      %v4876 = vpack.c.b16 %v4871, %v4870
      %v4877 = vpack.c.b16 %v4873, %v4872
      %v4878 = vunpack.c.l.b16 %v4759
      %v4879 = vunpack.c.l.b16 %v4773
      %v4880 = vunpack.c.l.b16 %v4787
      %v4881 = vunpack.c.l.b16 %v4801
      %v4882 = vunpack.c.l.b16 %v4815
      %v4883 = vunpack.c.l.b16 %v4829
      %v4884 = vunpack.c.l.b16 %v4843
      %v4885 = vunpack.c.l.b16 %v4857
      %v4886 = vpack.c.b16 %v4879, %v4878
      %v4887 = vpack.c.b16 %v4881, %v4880
      %v4888 = vpack.c.b16 %v4883, %v4882
      %v4889 = vpack.c.b16 %v4885, %v4884
      %4890 = vrot.lane.b32.xlu0 %v4886, 32
      %v4891 = vpop.permute.xlu0 %4890
      %4892 = vrot.lane.b32.xlu0 %v4887, 32
      %v4893 = vpop.permute.xlu0 %4892
      %4894 = vrot.lane.b32.xlu0 %v4888, 32
      %v4895 = vpop.permute.xlu0 %4894
      %4896 = vrot.lane.b32.xlu0 %v4889, 32
      %v4897 = vpop.permute.xlu0 %4896
      %v4900 = vsel %vm503, %v4874, %v4891
      %v4903 = vsel %vm503, %v4875, %v4893
      %v4906 = vsel %vm503, %v4876, %v4895
      %v4909 = vsel %vm503, %v4877, %v4897
      %v4910 = vsel %vm516, %v4900, 0
      %v4911 = vsel %vm516, %v4903, 0
      %v4912 = vsel %vm516, %v4906, 0
      %v4913 = vsel %vm516, %v4909, 0
      %v4918 = vunpack.c.l.b16 %v4910
      %v4919 = vunpack.c.h.b16 %v4910
      %v4920 = vunpack.c.l.b16 %v4911
      %v4921 = vunpack.c.h.b16 %v4911
      %v4922 = vunpack.c.l.b16 %v4912
      %v4923 = vunpack.c.h.b16 %v4912
      %v4924 = vunpack.c.l.b16 %v4913
      %v4925 = vunpack.c.h.b16 %v4913
      %v4926 = vpack.c.b16 %v4918, %v4918
      %v4927 = vpack.c.b16 %v4919, %v4919
      %v4928 = vpack.c.b16 %v4920, %v4920
      %v4929 = vpack.c.b16 %v4921, %v4921
      %v4930 = vpack.c.b16 %v4922, %v4922
      %v4931 = vpack.c.b16 %v4923, %v4923
      %v4932 = vpack.c.b16 %v4924, %v4924
      %v4933 = vpack.c.b16 %v4925, %v4925
      %4942 = vst [vmem:[%s3618 + $0x18] sm:$0xf] %v4926
      %4943 = vst [vmem:[%s3618 + $0x3c] sm:$0xf] %v4927
      %4944 = vst [vmem:[%s3618 + $0x60] sm:$0xf] %v4928
      %4945 = vst [vmem:[%s3618 + $0x84] sm:$0xf] %v4929
      %4946 = vst [vmem:[%s3618 + $0xa8] sm:$0xf] %v4930
      %4947 = vst [vmem:[%s3618 + $0xcc] sm:$0xf] %v4931
      %4948 = vst [vmem:[%s3618 + $0xf0] sm:$0xf] %v4932
      %4949 = vst [vmem:[%s3618 + $0x114] sm:$0xf] %v4933
      %s4950 = scalar_lea.vmem %s316, 8
      %v4951 = vld [vmem:[%s4950] sm:$0xf]
      %v4952 = vld [vmem:[%s4950 + $0x10] sm:$0xf]
      %v4953 = vld [vmem:[%s4950 + $0x20] sm:$0xf]
      %v4954 = vld [vmem:[%s4950 + $0x30] sm:$0xf]
      %v4955 = vld [vmem:[%s4950 + $0x40] sm:$0xf]
      %v4956 = vld [vmem:[%s4950 + $0x50] sm:$0xf]
      %v4957 = vld [vmem:[%s4950 + $0x60] sm:$0xf]
      %v4958 = vld [vmem:[%s4950 + $0x70] sm:$0xf]
      %v4959 = vld [vmem:[%s4950 + $0x4] sm:$0x1]
      %v4960 = vld [vmem:[%s4950 + $0x14] sm:$0x1]
      %v4961 = vld [vmem:[%s4950 + $0x24] sm:$0x1]
      %v4962 = vld [vmem:[%s4950 + $0x34] sm:$0x1]
      %v4963 = vld [vmem:[%s4950 + $0x44] sm:$0x1]
      %v4964 = vld [vmem:[%s4950 + $0x54] sm:$0x1]
      %v4965 = vld [vmem:[%s4950 + $0x64] sm:$0x1]
      %v4966 = vld [vmem:[%s4950 + $0x74] sm:$0x1]
      %v4968 = vshrl.u32 %v4951, 16
      %v4970 = vrot.slane %v4968, 4
      %v4971 = vshll.u32 %v4951, 16
      %v4973 = vrot.slane %v4971, 5
      %v4974 = vor.u32 %v4970, %v4973
      %v4975 = vrot.slane %v4974, 4
      %v4977 = vshll.u32 %v4959, 16
      %v4979 = vrot.slane %v4977, 5
      %v4980 = vsel %vm350, %v4975, %v4979
      %v4982 = vshrl.u32 %v4952, 16
      %v4984 = vrot.slane %v4982, 4
      %v4985 = vshll.u32 %v4952, 16
      %v4987 = vrot.slane %v4985, 5
      %v4988 = vor.u32 %v4984, %v4987
      %v4989 = vrot.slane %v4988, 4
      %v4991 = vshll.u32 %v4960, 16
      %v4993 = vrot.slane %v4991, 5
      %v4994 = vsel %vm350, %v4989, %v4993
      %v4996 = vshrl.u32 %v4953, 16
      %v4998 = vrot.slane %v4996, 4
      %v4999 = vshll.u32 %v4953, 16
      %v5001 = vrot.slane %v4999, 5
      %v5002 = vor.u32 %v4998, %v5001
      %v5003 = vrot.slane %v5002, 4
      %v5005 = vshll.u32 %v4961, 16
      %v5007 = vrot.slane %v5005, 5
      %v5008 = vsel %vm350, %v5003, %v5007
      %v5010 = vshrl.u32 %v4954, 16
      %v5012 = vrot.slane %v5010, 4
      %v5013 = vshll.u32 %v4954, 16
      %v5015 = vrot.slane %v5013, 5
      %v5016 = vor.u32 %v5012, %v5015
      %v5017 = vrot.slane %v5016, 4
      %v5019 = vshll.u32 %v4962, 16
      %v5021 = vrot.slane %v5019, 5
      %v5022 = vsel %vm350, %v5017, %v5021
      %v5024 = vshrl.u32 %v4955, 16
      %v5026 = vrot.slane %v5024, 4
      %v5027 = vshll.u32 %v4955, 16
      %v5029 = vrot.slane %v5027, 5
      %v5030 = vor.u32 %v5026, %v5029
      %v5031 = vrot.slane %v5030, 4
      %v5033 = vshll.u32 %v4963, 16
      %v5035 = vrot.slane %v5033, 5
      %v5036 = vsel %vm350, %v5031, %v5035
      %v5038 = vshrl.u32 %v4956, 16
      %v5040 = vrot.slane %v5038, 4
      %v5041 = vshll.u32 %v4956, 16
      %v5043 = vrot.slane %v5041, 5
      %v5044 = vor.u32 %v5040, %v5043
      %v5045 = vrot.slane %v5044, 4
      %v5047 = vshll.u32 %v4964, 16
      %v5049 = vrot.slane %v5047, 5
      %v5050 = vsel %vm350, %v5045, %v5049
      %v5052 = vshrl.u32 %v4957, 16
      %v5054 = vrot.slane %v5052, 4
      %v5055 = vshll.u32 %v4957, 16
      %v5057 = vrot.slane %v5055, 5
      %v5058 = vor.u32 %v5054, %v5057
      %v5059 = vrot.slane %v5058, 4
      %v5061 = vshll.u32 %v4965, 16
      %v5063 = vrot.slane %v5061, 5
      %v5064 = vsel %vm350, %v5059, %v5063
      %v5066 = vshrl.u32 %v4958, 16
      %v5068 = vrot.slane %v5066, 4
      %v5069 = vshll.u32 %v4958, 16
      %v5071 = vrot.slane %v5069, 5
      %v5072 = vor.u32 %v5068, %v5071
      %v5073 = vrot.slane %v5072, 4
      %v5075 = vshll.u32 %v4966, 16
      %v5077 = vrot.slane %v5075, 5
      %v5078 = vsel %vm350, %v5073, %v5077
      %v5087 = vunpack.c.l.b16 %v4951
      %v5088 = vunpack.c.l.b16 %v4952
      %v5089 = vunpack.c.l.b16 %v4953
      %v5090 = vunpack.c.l.b16 %v4954
      %v5091 = vunpack.c.l.b16 %v4955
      %v5092 = vunpack.c.l.b16 %v4956
      %v5093 = vunpack.c.l.b16 %v4957
      %v5094 = vunpack.c.l.b16 %v4958
      %v5095 = vpack.c.b16 %v5088, %v5087
      %v5096 = vpack.c.b16 %v5090, %v5089
      %v5097 = vpack.c.b16 %v5092, %v5091
      %v5098 = vpack.c.b16 %v5094, %v5093
      %v5099 = vunpack.c.l.b16 %v4980
      %v5100 = vunpack.c.l.b16 %v4994
      %v5101 = vunpack.c.l.b16 %v5008
      %v5102 = vunpack.c.l.b16 %v5022
      %v5103 = vunpack.c.l.b16 %v5036
      %v5104 = vunpack.c.l.b16 %v5050
      %v5105 = vunpack.c.l.b16 %v5064
      %v5106 = vunpack.c.l.b16 %v5078
      %v5107 = vpack.c.b16 %v5100, %v5099
      %v5108 = vpack.c.b16 %v5102, %v5101
      %v5109 = vpack.c.b16 %v5104, %v5103
      %v5110 = vpack.c.b16 %v5106, %v5105
      %5111 = vrot.lane.b32.xlu0 %v5107, 32
      %v5112 = vpop.permute.xlu0 %5111
      %5113 = vrot.lane.b32.xlu0 %v5108, 32
      %v5114 = vpop.permute.xlu0 %5113
      %5115 = vrot.lane.b32.xlu0 %v5109, 32
      %v5116 = vpop.permute.xlu0 %5115
      %5117 = vrot.lane.b32.xlu0 %v5110, 32
      %v5118 = vpop.permute.xlu0 %5117
      %v5121 = vsel %vm503, %v5095, %v5112
      %v5124 = vsel %vm503, %v5096, %v5114
      %v5127 = vsel %vm503, %v5097, %v5116
      %v5130 = vsel %vm503, %v5098, %v5118
      %v5131 = vsel %vm516, %v5121, 0
      %v5132 = vsel %vm516, %v5124, 0
      %v5133 = vsel %vm516, %v5127, 0
      %v5134 = vsel %vm516, %v5130, 0
      %v5139 = vunpack.c.l.b16 %v5131
      %v5140 = vunpack.c.h.b16 %v5131
      %v5141 = vunpack.c.l.b16 %v5132
      %v5142 = vunpack.c.h.b16 %v5132
      %v5143 = vunpack.c.l.b16 %v5133
      %v5144 = vunpack.c.h.b16 %v5133
      %v5145 = vunpack.c.l.b16 %v5134
      %v5146 = vunpack.c.h.b16 %v5134
      %v5147 = vpack.c.b16 %v5139, %v5139
      %v5148 = vpack.c.b16 %v5140, %v5140
      %v5149 = vpack.c.b16 %v5141, %v5141
      %v5150 = vpack.c.b16 %v5142, %v5142
      %v5151 = vpack.c.b16 %v5143, %v5143
      %v5152 = vpack.c.b16 %v5144, %v5144
      %v5153 = vpack.c.b16 %v5145, %v5145
      %v5154 = vpack.c.b16 %v5146, %v5146
      %5163 = vst [vmem:[%s3618 + $0x1c] sm:$0xf] %v5147
      %5164 = vst [vmem:[%s3618 + $0x40] sm:$0xf] %v5148
      %5165 = vst [vmem:[%s3618 + $0x64] sm:$0xf] %v5149
      %5166 = vst [vmem:[%s3618 + $0x88] sm:$0xf] %v5150
      %5167 = vst [vmem:[%s3618 + $0xac] sm:$0xf] %v5151
      %5168 = vst [vmem:[%s3618 + $0xd0] sm:$0xf] %v5152
      %5169 = vst [vmem:[%s3618 + $0xf4] sm:$0xf] %v5153
      %5170 = vst [vmem:[%s3618 + $0x118] sm:$0xf] %v5154
      %s5171 = scalar_lea.vmem %s316, 16
      %v5172 = vld [vmem:[%s5171] sm:$0xf]
      %v5173 = vld [vmem:[%s5171 + $0x10] sm:$0xf]
      %v5174 = vld [vmem:[%s5171 + $0x20] sm:$0xf]
      %v5175 = vld [vmem:[%s5171 + $0x30] sm:$0xf]
      %v5176 = vld [vmem:[%s5171 + $0x40] sm:$0xf]
      %v5177 = vld [vmem:[%s5171 + $0x50] sm:$0xf]
      %v5178 = vld [vmem:[%s5171 + $0x60] sm:$0xf]
      %v5179 = vld [vmem:[%s5171 + $0x70] sm:$0xf]
      %v5180 = vld [vmem:[%s5171 + $0x4] sm:$0x1]
      %v5181 = vld [vmem:[%s5171 + $0x14] sm:$0x1]
      %v5182 = vld [vmem:[%s5171 + $0x24] sm:$0x1]
      %v5183 = vld [vmem:[%s5171 + $0x34] sm:$0x1]
      %v5184 = vld [vmem:[%s5171 + $0x44] sm:$0x1]
      %v5185 = vld [vmem:[%s5171 + $0x54] sm:$0x1]
      %v5186 = vld [vmem:[%s5171 + $0x64] sm:$0x1]
      %v5187 = vld [vmem:[%s5171 + $0x74] sm:$0x1]
      %v5189 = vshrl.u32 %v5172, 16
      %v5191 = vrot.slane %v5189, 4
      %v5192 = vshll.u32 %v5172, 16
      %v5194 = vrot.slane %v5192, 5
      %v5195 = vor.u32 %v5191, %v5194
      %v5196 = vrot.slane %v5195, 4
      %v5198 = vshll.u32 %v5180, 16
      %v5200 = vrot.slane %v5198, 5
      %v5201 = vsel %vm350, %v5196, %v5200
      %v5203 = vshrl.u32 %v5173, 16
      %v5205 = vrot.slane %v5203, 4
      %v5206 = vshll.u32 %v5173, 16
      %v5208 = vrot.slane %v5206, 5
      %v5209 = vor.u32 %v5205, %v5208
      %v5210 = vrot.slane %v5209, 4
      %v5212 = vshll.u32 %v5181, 16
      %v5214 = vrot.slane %v5212, 5
      %v5215 = vsel %vm350, %v5210, %v5214
      %v5217 = vshrl.u32 %v5174, 16
      %v5219 = vrot.slane %v5217, 4
      %v5220 = vshll.u32 %v5174, 16
      %v5222 = vrot.slane %v5220, 5
      %v5223 = vor.u32 %v5219, %v5222
      %v5224 = vrot.slane %v5223, 4
      %v5226 = vshll.u32 %v5182, 16
      %v5228 = vrot.slane %v5226, 5
      %v5229 = vsel %vm350, %v5224, %v5228
      %v5231 = vshrl.u32 %v5175, 16
      %v5233 = vrot.slane %v5231, 4
      %v5234 = vshll.u32 %v5175, 16
      %v5236 = vrot.slane %v5234, 5
      %v5237 = vor.u32 %v5233, %v5236
      %v5238 = vrot.slane %v5237, 4
      %v5240 = vshll.u32 %v5183, 16
      %v5242 = vrot.slane %v5240, 5
      %v5243 = vsel %vm350, %v5238, %v5242
      %v5245 = vshrl.u32 %v5176, 16
      %v5247 = vrot.slane %v5245, 4
      %v5248 = vshll.u32 %v5176, 16
      %v5250 = vrot.slane %v5248, 5
      %v5251 = vor.u32 %v5247, %v5250
      %v5252 = vrot.slane %v5251, 4
      %v5254 = vshll.u32 %v5184, 16
      %v5256 = vrot.slane %v5254, 5
      %v5257 = vsel %vm350, %v5252, %v5256
      %v5259 = vshrl.u32 %v5177, 16
      %v5261 = vrot.slane %v5259, 4
      %v5262 = vshll.u32 %v5177, 16
      %v5264 = vrot.slane %v5262, 5
      %v5265 = vor.u32 %v5261, %v5264
      %v5266 = vrot.slane %v5265, 4
      %v5268 = vshll.u32 %v5185, 16
      %v5270 = vrot.slane %v5268, 5
      %v5271 = vsel %vm350, %v5266, %v5270
      %v5273 = vshrl.u32 %v5178, 16
      %v5275 = vrot.slane %v5273, 4
      %v5276 = vshll.u32 %v5178, 16
      %v5278 = vrot.slane %v5276, 5
      %v5279 = vor.u32 %v5275, %v5278
      %v5280 = vrot.slane %v5279, 4
      %v5282 = vshll.u32 %v5186, 16
      %v5284 = vrot.slane %v5282, 5
      %v5285 = vsel %vm350, %v5280, %v5284
      %v5287 = vshrl.u32 %v5179, 16
      %v5289 = vrot.slane %v5287, 4
      %v5290 = vshll.u32 %v5179, 16
      %v5292 = vrot.slane %v5290, 5
      %v5293 = vor.u32 %v5289, %v5292
      %v5294 = vrot.slane %v5293, 4
      %v5296 = vshll.u32 %v5187, 16
      %v5298 = vrot.slane %v5296, 5
      %v5299 = vsel %vm350, %v5294, %v5298
      %v5308 = vunpack.c.l.b16 %v5172
      %v5309 = vunpack.c.l.b16 %v5173
      %v5310 = vunpack.c.l.b16 %v5174
      %v5311 = vunpack.c.l.b16 %v5175
      %v5312 = vunpack.c.l.b16 %v5176
      %v5313 = vunpack.c.l.b16 %v5177
      %v5314 = vunpack.c.l.b16 %v5178
      %v5315 = vunpack.c.l.b16 %v5179
      %v5316 = vpack.c.b16 %v5309, %v5308
      %v5317 = vpack.c.b16 %v5311, %v5310
      %v5318 = vpack.c.b16 %v5313, %v5312
      %v5319 = vpack.c.b16 %v5315, %v5314
      %v5320 = vunpack.c.l.b16 %v5201
      %v5321 = vunpack.c.l.b16 %v5215
      %v5322 = vunpack.c.l.b16 %v5229
      %v5323 = vunpack.c.l.b16 %v5243
      %v5324 = vunpack.c.l.b16 %v5257
      %v5325 = vunpack.c.l.b16 %v5271
      %v5326 = vunpack.c.l.b16 %v5285
      %v5327 = vunpack.c.l.b16 %v5299
      %v5328 = vpack.c.b16 %v5321, %v5320
      %v5329 = vpack.c.b16 %v5323, %v5322
      %v5330 = vpack.c.b16 %v5325, %v5324
      %v5331 = vpack.c.b16 %v5327, %v5326
      %5332 = vrot.lane.b32.xlu0 %v5328, 32
      %v5333 = vpop.permute.xlu0 %5332
      %5334 = vrot.lane.b32.xlu0 %v5329, 32
      %v5335 = vpop.permute.xlu0 %5334
      %5336 = vrot.lane.b32.xlu0 %v5330, 32
      %v5337 = vpop.permute.xlu0 %5336
      %5338 = vrot.lane.b32.xlu0 %v5331, 32
      %v5339 = vpop.permute.xlu0 %5338
      %v5342 = vsel %vm503, %v5316, %v5333
      %v5345 = vsel %vm503, %v5317, %v5335
      %v5348 = vsel %vm503, %v5318, %v5337
      %v5351 = vsel %vm503, %v5319, %v5339
      %v5352 = vsel %vm516, %v5342, 0
      %v5353 = vsel %vm516, %v5345, 0
      %v5354 = vsel %vm516, %v5348, 0
      %v5355 = vsel %vm516, %v5351, 0
      %v5360 = vunpack.c.l.b16 %v5352
      %v5361 = vunpack.c.h.b16 %v5352
      %v5362 = vunpack.c.l.b16 %v5353
      %v5363 = vunpack.c.h.b16 %v5353
      %v5364 = vunpack.c.l.b16 %v5354
      %v5365 = vunpack.c.h.b16 %v5354
      %v5366 = vunpack.c.l.b16 %v5355
      %v5367 = vunpack.c.h.b16 %v5355
      %v5368 = vpack.c.b16 %v5360, %v5360
      %v5369 = vpack.c.b16 %v5361, %v5361
      %v5370 = vpack.c.b16 %v5362, %v5362
      %v5371 = vpack.c.b16 %v5363, %v5363
      %v5372 = vpack.c.b16 %v5364, %v5364
      %v5373 = vpack.c.b16 %v5365, %v5365
      %v5374 = vpack.c.b16 %v5366, %v5366
      %v5375 = vpack.c.b16 %v5367, %v5367
      %5384 = vst [vmem:[%s3618 + $0x20] sm:$0xf] %v5368
      %5385 = vst [vmem:[%s3618 + $0x44] sm:$0xf] %v5369
      %5386 = vst [vmem:[%s3618 + $0x68] sm:$0xf] %v5370
      %5387 = vst [vmem:[%s3618 + $0x8c] sm:$0xf] %v5371
      %5388 = vst [vmem:[%s3618 + $0xb0] sm:$0xf] %v5372
      %5389 = vst [vmem:[%s3618 + $0xd4] sm:$0xf] %v5373
      %5390 = vst [vmem:[%s3618 + $0xf8] sm:$0xf] %v5374
      %5391 = vst [vmem:[%s3618 + $0x11c] sm:$0xf] %v5375
      %v5392 = vld [vmem:[%s3618] sm:$0xff]
      %v5393 = vld [vmem:[%s3618 + $0x8] sm:$0xff]
      %v5394 = vld [vmem:[%s3618 + $0x10] sm:$0xff]
      %v5395 = vld [vmem:[%s3618 + $0x18] sm:$0xff]
      %v5396 = vld [vmem:[%s3618 + $0x20] sm:$0xf]
      %v5397 = vld [vmem:[%s3618 + $0x24] sm:$0xff]
      %v5398 = vld [vmem:[%s3618 + $0x2c] sm:$0xff]
      %v5399 = vld [vmem:[%s3618 + $0x34] sm:$0xff]
      %v5400 = vld [vmem:[%s3618 + $0x3c] sm:$0xff]
      %v5401 = vld [vmem:[%s3618 + $0x44] sm:$0xf]
      %v5402 = vld [vmem:[%s3618 + $0x48] sm:$0xff]
      %v5403 = vld [vmem:[%s3618 + $0x50] sm:$0xff]
      %v5404 = vld [vmem:[%s3618 + $0x58] sm:$0xff]
      %v5405 = vld [vmem:[%s3618 + $0x60] sm:$0xff]
      %v5406 = vld [vmem:[%s3618 + $0x68] sm:$0xf]
      %v5407 = vld [vmem:[%s3618 + $0x6c] sm:$0xff]
      %v5408 = vld [vmem:[%s3618 + $0x74] sm:$0xff]
      %v5409 = vld [vmem:[%s3618 + $0x7c] sm:$0xff]
      %v5410 = vld [vmem:[%s3618 + $0x84] sm:$0xff]
      %v5411 = vld [vmem:[%s3618 + $0x8c] sm:$0xf]
      %v5412 = vld [vmem:[%s3618 + $0x90] sm:$0xff]
      %v5413 = vld [vmem:[%s3618 + $0x98] sm:$0xff]
      %v5414 = vld [vmem:[%s3618 + $0xa0] sm:$0xff]
      %v5415 = vld [vmem:[%s3618 + $0xa8] sm:$0xff]
      %v5416 = vld [vmem:[%s3618 + $0xb0] sm:$0xf]
      %v5417 = vld [vmem:[%s3618 + $0xb4] sm:$0xff]
      %v5418 = vld [vmem:[%s3618 + $0xbc] sm:$0xff]
      %v5419 = vld [vmem:[%s3618 + $0xc4] sm:$0xff]
      %v5420 = vld [vmem:[%s3618 + $0xcc] sm:$0xff]
      %v5421 = vld [vmem:[%s3618 + $0xd4] sm:$0xf]
      %v5422 = vld [vmem:[%s3618 + $0xd8] sm:$0xff]
      %v5423 = vld [vmem:[%s3618 + $0xe0] sm:$0xff]
      %v5424 = vld [vmem:[%s3618 + $0xe8] sm:$0xff]
      %v5425 = vld [vmem:[%s3618 + $0xf0] sm:$0xff]
      %v5426 = vld [vmem:[%s3618 + $0xf8] sm:$0xf]
      %v5427 = vld [vmem:[%s3618 + $0xfc] sm:$0xff]
      %v5428 = vld [vmem:[%s3618 + $0x104] sm:$0xff]
      %v5429 = vld [vmem:[%s3618 + $0x10c] sm:$0xff]
      %v5430 = vld [vmem:[%s3618 + $0x114] sm:$0xff]
      %v5431 = vld [vmem:[%s3618 + $0x11c] sm:$0xf]
      %v5432 = vld [vmem:[%s2] sm:$0xf]
      %v5433 = vld [vmem:[%s2 + $0x4] sm:$0xf]
      %v5434 = vld [vmem:[%s2 + $0x8] sm:$0xf]
      %v5435 = vld [vmem:[%s2 + $0xc] sm:$0xf]
      %v5436 = vld [vmem:[%s2 + $0x10] sm:$0xf]
      %v5437 = vld [vmem:[%s2 + $0x14] sm:$0xf]
      %v5438 = vld [vmem:[%s2 + $0x18] sm:$0xf]
      %v5439 = vld [vmem:[%s2 + $0x1c] sm:$0xf]
      %v5440 = vld [vmem:[%s2 + $0x20] sm:$0xf]
      %v5441 = vld [vmem:[%s2 + $0x24] sm:$0xf]
      %v5442 = vld [vmem:[%s2 + $0x28] sm:$0xf]
      %v5443 = vld [vmem:[%s2 + $0x2c] sm:$0xf]
      %v5444 = vld [vmem:[%s2 + $0x30] sm:$0xf]
      %v5445 = vld [vmem:[%s2 + $0x34] sm:$0xf]
      %v5446 = vld [vmem:[%s2 + $0x38] sm:$0xf]
      %v5447 = vld [vmem:[%s2 + $0x3c] sm:$0xf]
      %v5448 = vld [vmem:[%s2 + $0x40] sm:$0xf]
      %v5449 = vld [vmem:[%s2 + $0x44] sm:$0xf]
      %v5450 = vld [vmem:[%s2 + $0x48] sm:$0xf]
      %v5451 = vld [vmem:[%s2 + $0x4c] sm:$0xf]
      %v5452 = vld [vmem:[%s2 + $0x50] sm:$0xf]
      %v5453 = vld [vmem:[%s2 + $0x54] sm:$0xf]
      %v5454 = vld [vmem:[%s2 + $0x58] sm:$0xf]
      %v5455 = vld [vmem:[%s2 + $0x5c] sm:$0xf]
      %v5456 = vld [vmem:[%s2 + $0x60] sm:$0xf]
      %v5457 = vld [vmem:[%s2 + $0x64] sm:$0xf]
      %v5458 = vld [vmem:[%s2 + $0x68] sm:$0xf]
      %v5459 = vld [vmem:[%s2 + $0x6c] sm:$0xf]
      %v5460 = vld [vmem:[%s2 + $0x70] sm:$0xf]
      %v5461 = vld [vmem:[%s2 + $0x74] sm:$0xf]
      %v5462 = vld [vmem:[%s2 + $0x78] sm:$0xf]
      %v5463 = vld [vmem:[%s2 + $0x7c] sm:$0xf]
      %v5464 = vld [vmem:[%s2 + $0x80] sm:$0xf]
      %v5465 = vld [vmem:[%s2 + $0x84] sm:$0xf]
      %v5466 = vld [vmem:[%s2 + $0x88] sm:$0xf]
      %v5467 = vld [vmem:[%s2 + $0x8c] sm:$0xf]
      %v5468 = vld [vmem:[%s2 + $0x90] sm:$0xf]
      %v5469 = vld [vmem:[%s2 + $0x94] sm:$0xf]
      %v5470 = vld [vmem:[%s2 + $0x98] sm:$0xf]
      %v5471 = vld [vmem:[%s2 + $0x9c] sm:$0xf]
      %v5472 = vld [vmem:[%s2 + $0xa0] sm:$0xf]
      %v5473 = vld [vmem:[%s2 + $0xa4] sm:$0xf]
      %v5474 = vld [vmem:[%s2 + $0xa8] sm:$0xf]
      %v5475 = vld [vmem:[%s2 + $0xac] sm:$0xf]
      %v5476 = vld [vmem:[%s2 + $0xb0] sm:$0xf]
      %v5477 = vld [vmem:[%s2 + $0xb4] sm:$0xf]
      %v5478 = vld [vmem:[%s2 + $0xb8] sm:$0xf]
      %v5479 = vld [vmem:[%s2 + $0xbc] sm:$0xf]
      %v5480 = vld [vmem:[%s2 + $0xc0] sm:$0xf]
      %v5481 = vld [vmem:[%s2 + $0xc4] sm:$0xf]
      %v5482 = vld [vmem:[%s2 + $0xc8] sm:$0xf]
      %v5483 = vld [vmem:[%s2 + $0xcc] sm:$0xf]
      %v5484 = vld [vmem:[%s2 + $0xd0] sm:$0xf]
      %v5485 = vld [vmem:[%s2 + $0xd4] sm:$0xf]
      %v5486 = vld [vmem:[%s2 + $0xd8] sm:$0xf]
      %v5487 = vld [vmem:[%s2 + $0xdc] sm:$0xf]
      %v5488 = vld [vmem:[%s2 + $0xe0] sm:$0xf]
      %v5489 = vld [vmem:[%s2 + $0xe4] sm:$0xf]
      %v5490 = vld [vmem:[%s2 + $0xe8] sm:$0xf]
      %v5491 = vld [vmem:[%s2 + $0xec] sm:$0xf]
      %v5492 = vld [vmem:[%s2 + $0xf0] sm:$0xf]
      %v5493 = vld [vmem:[%s2 + $0xf4] sm:$0xf]
      %v5494 = vld [vmem:[%s2 + $0xf8] sm:$0xf]
      %v5495 = vld [vmem:[%s2 + $0xfc] sm:$0xf]
      %v5496 = vld [vmem:[%s2 + $0x100] sm:$0xf]
      %v5497 = vld [vmem:[%s2 + $0x104] sm:$0xf]
      %v5498 = vld [vmem:[%s2 + $0x108] sm:$0xf]
      %v5499 = vld [vmem:[%s2 + $0x10c] sm:$0xf]
      %v5500 = vld [vmem:[%s2 + $0x110] sm:$0xf]
      %v5501 = vld [vmem:[%s2 + $0x114] sm:$0xf]
      %v5502 = vld [vmem:[%s2 + $0x118] sm:$0xf]
      %v5503 = vld [vmem:[%s2 + $0x11c] sm:$0xf]
      %v5504 = vld [vmem:[%s2 + $0x120] sm:$0xf]
      %v5505 = vld [vmem:[%s2 + $0x124] sm:$0xf]
      %v5506 = vld [vmem:[%s2 + $0x128] sm:$0xf]
      %v5507 = vld [vmem:[%s2 + $0x12c] sm:$0xf]
      %v5508 = vld [vmem:[%s2 + $0x130] sm:$0xf]
      %v5509 = vld [vmem:[%s2 + $0x134] sm:$0xf]
      %v5510 = vld [vmem:[%s2 + $0x138] sm:$0xf]
      %v5511 = vld [vmem:[%s2 + $0x13c] sm:$0xf]
      %v5512 = vld [vmem:[%s2 + $0x140] sm:$0xf]
      %v5513 = vld [vmem:[%s2 + $0x144] sm:$0xf]
      %v5514 = vld [vmem:[%s2 + $0x148] sm:$0xf]
      %v5515 = vld [vmem:[%s2 + $0x14c] sm:$0xf]
      %v5516 = vld [vmem:[%s2 + $0x150] sm:$0xf]
      %v5517 = vld [vmem:[%s2 + $0x154] sm:$0xf]
      %v5518 = vld [vmem:[%s2 + $0x158] sm:$0xf]
      %v5519 = vld [vmem:[%s2 + $0x15c] sm:$0xf]
      %v5520 = vld [vmem:[%s2 + $0x160] sm:$0xf]
      %v5521 = vld [vmem:[%s2 + $0x164] sm:$0xf]
      %v5522 = vld [vmem:[%s2 + $0x168] sm:$0xf]
      %v5523 = vld [vmem:[%s2 + $0x16c] sm:$0xf]
      %v5524 = vld [vmem:[%s2 + $0x170] sm:$0xf]
      %v5525 = vld [vmem:[%s2 + $0x174] sm:$0xf]
      %v5526 = vld [vmem:[%s2 + $0x178] sm:$0xf]
      %v5527 = vld [vmem:[%s2 + $0x17c] sm:$0xf]
      %v5528 = vld [vmem:[%s2 + $0x180] sm:$0xf]
      %v5529 = vld [vmem:[%s2 + $0x184] sm:$0xf]
      %v5530 = vld [vmem:[%s2 + $0x188] sm:$0xf]
      %v5531 = vld [vmem:[%s2 + $0x18c] sm:$0xf]
      %v5532 = vld [vmem:[%s2 + $0x190] sm:$0xf]
      %v5533 = vld [vmem:[%s2 + $0x194] sm:$0xf]
      %v5534 = vld [vmem:[%s2 + $0x198] sm:$0xf]
      %v5535 = vld [vmem:[%s2 + $0x19c] sm:$0xf]
      %v5536 = vld [vmem:[%s2 + $0x1a0] sm:$0xf]
      %v5537 = vld [vmem:[%s2 + $0x1a4] sm:$0xf]
      %v5538 = vld [vmem:[%s2 + $0x1a8] sm:$0xf]
      %v5539 = vld [vmem:[%s2 + $0x1ac] sm:$0xf]
      %v5540 = vld [vmem:[%s2 + $0x1b0] sm:$0xf]
      %v5541 = vld [vmem:[%s2 + $0x1b4] sm:$0xf]
      %v5542 = vld [vmem:[%s2 + $0x1b8] sm:$0xf]
      %v5543 = vld [vmem:[%s2 + $0x1bc] sm:$0xf]
      %v5544 = vld [vmem:[%s2 + $0x1c0] sm:$0xf]
      %v5545 = vld [vmem:[%s2 + $0x1c4] sm:$0xf]
      %v5546 = vld [vmem:[%s2 + $0x1c8] sm:$0xf]
      %v5547 = vld [vmem:[%s2 + $0x1cc] sm:$0xf]
      %v5548 = vld [vmem:[%s2 + $0x1d0] sm:$0xf]
      %v5549 = vld [vmem:[%s2 + $0x1d4] sm:$0xf]
      %v5550 = vld [vmem:[%s2 + $0x1d8] sm:$0xf]
      %v5551 = vld [vmem:[%s2 + $0x1dc] sm:$0xf]
      %v5552 = vld [vmem:[%s2 + $0x1e0] sm:$0xf]
      %v5553 = vld [vmem:[%s2 + $0x1e4] sm:$0xf]
      %v5554 = vld [vmem:[%s2 + $0x1e8] sm:$0xf]
      %v5555 = vld [vmem:[%s2 + $0x1ec] sm:$0xf]
      %v5556 = vld [vmem:[%s2 + $0x1f0] sm:$0xf]
      %v5557 = vld [vmem:[%s2 + $0x1f4] sm:$0xf]
      %v5558 = vld [vmem:[%s2 + $0x1f8] sm:$0xf]
      %v5559 = vld [vmem:[%s2 + $0x1fc] sm:$0xf]
      %v5560 = vld [vmem:[%s2 + $0x200] sm:$0xf]
      %v5561 = vld [vmem:[%s2 + $0x204] sm:$0xf]
      %v5562 = vld [vmem:[%s2 + $0x208] sm:$0xf]
      %v5563 = vld [vmem:[%s2 + $0x20c] sm:$0xf]
      %v5564 = vld [vmem:[%s2 + $0x210] sm:$0xf]
      %v5565 = vld [vmem:[%s2 + $0x214] sm:$0xf]
      %v5566 = vld [vmem:[%s2 + $0x218] sm:$0xf]
      %v5567 = vld [vmem:[%s2 + $0x21c] sm:$0xf]
      %v5568 = vld [vmem:[%s2 + $0x220] sm:$0xf]
      %v5569 = vld [vmem:[%s2 + $0x224] sm:$0xf]
      %v5570 = vld [vmem:[%s2 + $0x228] sm:$0xf]
      %v5571 = vld [vmem:[%s2 + $0x22c] sm:$0xf]
      %v5572 = vld [vmem:[%s2 + $0x230] sm:$0xf]
      %v5573 = vld [vmem:[%s2 + $0x234] sm:$0xf]
      %v5574 = vld [vmem:[%s2 + $0x238] sm:$0xf]
      %v5575 = vld [vmem:[%s2 + $0x23c] sm:$0xf]
      %v5616 = vunpack.c.l.b16 %v5392
      %v5617 = vunpack.c.h.b16 %v5392
      %v5618 = vunpack.c.l.b16 %v5393
      %v5619 = vunpack.c.h.b16 %v5393
      %v5620 = vunpack.c.l.b16 %v5394
      %v5621 = vunpack.c.h.b16 %v5394
      %v5622 = vunpack.c.l.b16 %v5395
      %v5623 = vunpack.c.h.b16 %v5395
      %v5624 = vunpack.c.l.b16 %v5396
      %v5625 = vunpack.c.l.b16 %v5397
      %v5626 = vunpack.c.h.b16 %v5397
      %v5627 = vunpack.c.l.b16 %v5398
      %v5628 = vunpack.c.h.b16 %v5398
      %v5629 = vunpack.c.l.b16 %v5399
      %v5630 = vunpack.c.h.b16 %v5399
      %v5631 = vunpack.c.l.b16 %v5400
      %v5632 = vunpack.c.h.b16 %v5400
      %v5633 = vunpack.c.l.b16 %v5401
      %v5634 = vunpack.c.l.b16 %v5402
      %v5635 = vunpack.c.h.b16 %v5402
      %v5636 = vunpack.c.l.b16 %v5403
      %v5637 = vunpack.c.h.b16 %v5403
      %v5638 = vunpack.c.l.b16 %v5404
      %v5639 = vunpack.c.h.b16 %v5404
      %v5640 = vunpack.c.l.b16 %v5405
      %v5641 = vunpack.c.h.b16 %v5405
      %v5642 = vunpack.c.l.b16 %v5406
      %v5643 = vunpack.c.l.b16 %v5407
      %v5644 = vunpack.c.h.b16 %v5407
      %v5645 = vunpack.c.l.b16 %v5408
      %v5646 = vunpack.c.h.b16 %v5408
      %v5647 = vunpack.c.l.b16 %v5409
      %v5648 = vunpack.c.h.b16 %v5409
      %v5649 = vunpack.c.l.b16 %v5410
      %v5650 = vunpack.c.h.b16 %v5410
      %v5651 = vunpack.c.l.b16 %v5411
      %v5652 = vunpack.c.l.b16 %v5412
      %v5653 = vunpack.c.h.b16 %v5412
      %v5654 = vunpack.c.l.b16 %v5413
      %v5655 = vunpack.c.h.b16 %v5413
      %v5656 = vunpack.c.l.b16 %v5414
      %v5657 = vunpack.c.h.b16 %v5414
      %v5658 = vunpack.c.l.b16 %v5415
      %v5659 = vunpack.c.h.b16 %v5415
      %v5660 = vunpack.c.l.b16 %v5416
      %v5661 = vunpack.c.l.b16 %v5417
      %v5662 = vunpack.c.h.b16 %v5417
      %v5663 = vunpack.c.l.b16 %v5418
      %v5664 = vunpack.c.h.b16 %v5418
      %v5665 = vunpack.c.l.b16 %v5419
      %v5666 = vunpack.c.h.b16 %v5419
      %v5667 = vunpack.c.l.b16 %v5420
      %v5668 = vunpack.c.h.b16 %v5420
      %v5669 = vunpack.c.l.b16 %v5421
      %v5670 = vunpack.c.l.b16 %v5422
      %v5671 = vunpack.c.h.b16 %v5422
      %v5672 = vunpack.c.l.b16 %v5423
      %v5673 = vunpack.c.h.b16 %v5423
      %v5674 = vunpack.c.l.b16 %v5424
      %v5675 = vunpack.c.h.b16 %v5424
      %v5676 = vunpack.c.l.b16 %v5425
      %v5677 = vunpack.c.h.b16 %v5425
      %v5678 = vunpack.c.l.b16 %v5426
      %v5679 = vunpack.c.l.b16 %v5427
      %v5680 = vunpack.c.h.b16 %v5427
      %v5681 = vunpack.c.l.b16 %v5428
      %v5682 = vunpack.c.h.b16 %v5428
      %v5683 = vunpack.c.l.b16 %v5429
      %v5684 = vunpack.c.h.b16 %v5429
      %v5685 = vunpack.c.l.b16 %v5430
      %v5686 = vunpack.c.h.b16 %v5430
      %v5687 = vunpack.c.l.b16 %v5431
      %v5688 = vpack.c.b16 %v5625, %v5616
      %v5689 = vpack.c.b16 %v5626, %v5617
      %v5690 = vpack.c.b16 %v5627, %v5618
      %v5691 = vpack.c.b16 %v5628, %v5619
      %v5692 = vpack.c.b16 %v5629, %v5620
      %v5693 = vpack.c.b16 %v5630, %v5621
      %v5694 = vpack.c.b16 %v5631, %v5622
      %v5695 = vpack.c.b16 %v5632, %v5623
      %v5696 = vpack.c.b16 %v5633, %v5624
      %v5697 = vpack.c.b16 %v5643, %v5634
      %v5698 = vpack.c.b16 %v5644, %v5635
      %v5699 = vpack.c.b16 %v5645, %v5636
      %v5700 = vpack.c.b16 %v5646, %v5637
      %v5701 = vpack.c.b16 %v5647, %v5638
      %v5702 = vpack.c.b16 %v5648, %v5639
      %v5703 = vpack.c.b16 %v5649, %v5640
      %v5704 = vpack.c.b16 %v5650, %v5641
      %v5705 = vpack.c.b16 %v5651, %v5642
      %v5706 = vpack.c.b16 %v5661, %v5652
      %v5707 = vpack.c.b16 %v5662, %v5653
      %v5708 = vpack.c.b16 %v5663, %v5654
      %v5709 = vpack.c.b16 %v5664, %v5655
      %v5710 = vpack.c.b16 %v5665, %v5656
      %v5711 = vpack.c.b16 %v5666, %v5657
      %v5712 = vpack.c.b16 %v5667, %v5658
      %v5713 = vpack.c.b16 %v5668, %v5659
      %v5714 = vpack.c.b16 %v5669, %v5660
      %v5715 = vpack.c.b16 %v5679, %v5670
      %v5716 = vpack.c.b16 %v5680, %v5671
      %v5717 = vpack.c.b16 %v5681, %v5672
      %v5718 = vpack.c.b16 %v5682, %v5673
      %v5719 = vpack.c.b16 %v5683, %v5674
      %v5720 = vpack.c.b16 %v5684, %v5675
      %v5721 = vpack.c.b16 %v5685, %v5676
      %v5722 = vpack.c.b16 %v5686, %v5677
      %v5723 = vpack.c.b16 %v5687, %v5678
      %v5904 = vunpack.c.l.b16 %v5432
      %v5905 = vunpack.c.l.b16 %v5433
      %v5906 = vunpack.c.l.b16 %v5434
      %v5907 = vunpack.c.l.b16 %v5435
      %v5908 = vunpack.c.l.b16 %v5436
      %v5909 = vunpack.c.l.b16 %v5437
      %v5910 = vunpack.c.l.b16 %v5438
      %v5911 = vunpack.c.l.b16 %v5439
      %v5912 = vunpack.c.l.b16 %v5440
      %v5913 = vunpack.c.l.b16 %v5441
      %v5914 = vunpack.c.l.b16 %v5442
      %v5915 = vunpack.c.l.b16 %v5443
      %v5916 = vunpack.c.l.b16 %v5444
      %v5917 = vunpack.c.l.b16 %v5445
      %v5918 = vunpack.c.l.b16 %v5446
      %v5919 = vunpack.c.l.b16 %v5447
      %v5920 = vunpack.c.l.b16 %v5448
      %v5921 = vunpack.c.l.b16 %v5449
      %v5922 = vunpack.c.l.b16 %v5450
      %v5923 = vunpack.c.l.b16 %v5451
      %v5924 = vunpack.c.l.b16 %v5452
      %v5925 = vunpack.c.l.b16 %v5453
      %v5926 = vunpack.c.l.b16 %v5454
      %v5927 = vunpack.c.l.b16 %v5455
      %v5928 = vunpack.c.l.b16 %v5456
      %v5929 = vunpack.c.l.b16 %v5457
      %v5930 = vunpack.c.l.b16 %v5458
      %v5931 = vunpack.c.l.b16 %v5459
      %v5932 = vunpack.c.l.b16 %v5460
      %v5933 = vunpack.c.l.b16 %v5461
      %v5934 = vunpack.c.l.b16 %v5462
      %v5935 = vunpack.c.l.b16 %v5463
      %v5936 = vunpack.c.l.b16 %v5464
      %v5937 = vunpack.c.l.b16 %v5465
      %v5938 = vunpack.c.l.b16 %v5466
      %v5939 = vunpack.c.l.b16 %v5467
      %v5940 = vunpack.c.l.b16 %v5468
      %v5941 = vunpack.c.l.b16 %v5469
      %v5942 = vunpack.c.l.b16 %v5470
      %v5943 = vunpack.c.l.b16 %v5471
      %v5944 = vunpack.c.l.b16 %v5472
      %v5945 = vunpack.c.l.b16 %v5473
      %v5946 = vunpack.c.l.b16 %v5474
      %v5947 = vunpack.c.l.b16 %v5475
      %v5948 = vunpack.c.l.b16 %v5476
      %v5949 = vunpack.c.l.b16 %v5477
      %v5950 = vunpack.c.l.b16 %v5478
      %v5951 = vunpack.c.l.b16 %v5479
      %v5952 = vunpack.c.l.b16 %v5480
      %v5953 = vunpack.c.l.b16 %v5481
      %v5954 = vunpack.c.l.b16 %v5482
      %v5955 = vunpack.c.l.b16 %v5483
      %v5956 = vunpack.c.l.b16 %v5484
      %v5957 = vunpack.c.l.b16 %v5485
      %v5958 = vunpack.c.l.b16 %v5486
      %v5959 = vunpack.c.l.b16 %v5487
      %v5960 = vunpack.c.l.b16 %v5488
      %v5961 = vunpack.c.l.b16 %v5489
      %v5962 = vunpack.c.l.b16 %v5490
      %v5963 = vunpack.c.l.b16 %v5491
      %v5964 = vunpack.c.l.b16 %v5492
      %v5965 = vunpack.c.l.b16 %v5493
      %v5966 = vunpack.c.l.b16 %v5494
      %v5967 = vunpack.c.l.b16 %v5495
      %v5968 = vunpack.c.l.b16 %v5496
      %v5969 = vunpack.c.l.b16 %v5497
      %v5970 = vunpack.c.l.b16 %v5498
      %v5971 = vunpack.c.l.b16 %v5499
      %v5972 = vunpack.c.l.b16 %v5500
      %v5973 = vunpack.c.l.b16 %v5501
      %v5974 = vunpack.c.l.b16 %v5502
      %v5975 = vunpack.c.l.b16 %v5503
      %v5976 = vunpack.c.l.b16 %v5504
      %v5977 = vunpack.c.l.b16 %v5505
      %v5978 = vunpack.c.l.b16 %v5506
      %v5979 = vunpack.c.l.b16 %v5507
      %v5980 = vunpack.c.l.b16 %v5508
      %v5981 = vunpack.c.l.b16 %v5509
      %v5982 = vunpack.c.l.b16 %v5510
      %v5983 = vunpack.c.l.b16 %v5511
      %v5984 = vunpack.c.l.b16 %v5512
      %v5985 = vunpack.c.l.b16 %v5513
      %v5986 = vunpack.c.l.b16 %v5514
      %v5987 = vunpack.c.l.b16 %v5515
      %v5988 = vunpack.c.l.b16 %v5516
      %v5989 = vunpack.c.l.b16 %v5517
      %v5990 = vunpack.c.l.b16 %v5518
      %v5991 = vunpack.c.l.b16 %v5519
      %v5992 = vunpack.c.l.b16 %v5520
      %v5993 = vunpack.c.l.b16 %v5521
      %v5994 = vunpack.c.l.b16 %v5522
      %v5995 = vunpack.c.l.b16 %v5523
      %v5996 = vunpack.c.l.b16 %v5524
      %v5997 = vunpack.c.l.b16 %v5525
      %v5998 = vunpack.c.l.b16 %v5526
      %v5999 = vunpack.c.l.b16 %v5527
      %v6000 = vunpack.c.l.b16 %v5528
      %v6001 = vunpack.c.l.b16 %v5529
      %v6002 = vunpack.c.l.b16 %v5530
      %v6003 = vunpack.c.l.b16 %v5531
      %v6004 = vunpack.c.l.b16 %v5532
      %v6005 = vunpack.c.l.b16 %v5533
      %v6006 = vunpack.c.l.b16 %v5534
      %v6007 = vunpack.c.l.b16 %v5535
      %v6008 = vunpack.c.l.b16 %v5536
      %v6009 = vunpack.c.l.b16 %v5537
      %v6010 = vunpack.c.l.b16 %v5538
      %v6011 = vunpack.c.l.b16 %v5539
      %v6012 = vunpack.c.l.b16 %v5540
      %v6013 = vunpack.c.l.b16 %v5541
      %v6014 = vunpack.c.l.b16 %v5542
      %v6015 = vunpack.c.l.b16 %v5543
      %v6016 = vunpack.c.l.b16 %v5544
      %v6017 = vunpack.c.l.b16 %v5545
      %v6018 = vunpack.c.l.b16 %v5546
      %v6019 = vunpack.c.l.b16 %v5547
      %v6020 = vunpack.c.l.b16 %v5548
      %v6021 = vunpack.c.l.b16 %v5549
      %v6022 = vunpack.c.l.b16 %v5550
      %v6023 = vunpack.c.l.b16 %v5551
      %v6024 = vunpack.c.l.b16 %v5552
      %v6025 = vunpack.c.l.b16 %v5553
      %v6026 = vunpack.c.l.b16 %v5554
      %v6027 = vunpack.c.l.b16 %v5555
      %v6028 = vunpack.c.l.b16 %v5556
      %v6029 = vunpack.c.l.b16 %v5557
      %v6030 = vunpack.c.l.b16 %v5558
      %v6031 = vunpack.c.l.b16 %v5559
      %v6032 = vunpack.c.l.b16 %v5560
      %v6033 = vunpack.c.l.b16 %v5561
      %v6034 = vunpack.c.l.b16 %v5562
      %v6035 = vunpack.c.l.b16 %v5563
      %v6036 = vunpack.c.l.b16 %v5564
      %v6037 = vunpack.c.l.b16 %v5565
      %v6038 = vunpack.c.l.b16 %v5566
      %v6039 = vunpack.c.l.b16 %v5567
      %v6040 = vunpack.c.l.b16 %v5568
      %v6041 = vunpack.c.l.b16 %v5569
      %v6042 = vunpack.c.l.b16 %v5570
      %v6043 = vunpack.c.l.b16 %v5571
      %v6044 = vunpack.c.l.b16 %v5572
      %v6045 = vunpack.c.l.b16 %v5573
      %v6046 = vunpack.c.l.b16 %v5574
      %v6047 = vunpack.c.l.b16 %v5575
      %v6048 = vpack.c.b16 %v5905, %v5904
      %v6049 = vpack.c.b16 %v5907, %v5906
      %v6050 = vpack.c.b16 %v5909, %v5908
      %v6051 = vpack.c.b16 %v5911, %v5910
      %v6052 = vpack.c.b16 %v5913, %v5912
      %v6053 = vpack.c.b16 %v5915, %v5914
      %v6054 = vpack.c.b16 %v5917, %v5916
      %v6055 = vpack.c.b16 %v5919, %v5918
      %v6056 = vpack.c.b16 %v5921, %v5920
      %v6057 = vpack.c.b16 %v5923, %v5922
      %v6058 = vpack.c.b16 %v5925, %v5924
      %v6059 = vpack.c.b16 %v5927, %v5926
      %v6060 = vpack.c.b16 %v5929, %v5928
      %v6061 = vpack.c.b16 %v5931, %v5930
      %v6062 = vpack.c.b16 %v5933, %v5932
      %v6063 = vpack.c.b16 %v5935, %v5934
      %v6064 = vpack.c.b16 %v5937, %v5936
      %v6065 = vpack.c.b16 %v5939, %v5938
      %v6066 = vpack.c.b16 %v5941, %v5940
      %v6067 = vpack.c.b16 %v5943, %v5942
      %v6068 = vpack.c.b16 %v5945, %v5944
      %v6069 = vpack.c.b16 %v5947, %v5946
      %v6070 = vpack.c.b16 %v5949, %v5948
      %v6071 = vpack.c.b16 %v5951, %v5950
      %v6072 = vpack.c.b16 %v5953, %v5952
      %v6073 = vpack.c.b16 %v5955, %v5954
      %v6074 = vpack.c.b16 %v5957, %v5956
      %v6075 = vpack.c.b16 %v5959, %v5958
      %v6076 = vpack.c.b16 %v5961, %v5960
      %v6077 = vpack.c.b16 %v5963, %v5962
      %v6078 = vpack.c.b16 %v5965, %v5964
      %v6079 = vpack.c.b16 %v5967, %v5966
      %v6080 = vpack.c.b16 %v5969, %v5968
      %v6081 = vpack.c.b16 %v5971, %v5970
      %v6082 = vpack.c.b16 %v5973, %v5972
      %v6083 = vpack.c.b16 %v5975, %v5974
      %v6084 = vpack.c.b16 %v5977, %v5976
      %v6085 = vpack.c.b16 %v5979, %v5978
      %v6086 = vpack.c.b16 %v5981, %v5980
      %v6087 = vpack.c.b16 %v5983, %v5982
      %v6088 = vpack.c.b16 %v5985, %v5984
      %v6089 = vpack.c.b16 %v5987, %v5986
      %v6090 = vpack.c.b16 %v5989, %v5988
      %v6091 = vpack.c.b16 %v5991, %v5990
      %v6092 = vpack.c.b16 %v5993, %v5992
      %v6093 = vpack.c.b16 %v5995, %v5994
      %v6094 = vpack.c.b16 %v5997, %v5996
      %v6095 = vpack.c.b16 %v5999, %v5998
      %v6096 = vpack.c.b16 %v6001, %v6000
      %v6097 = vpack.c.b16 %v6003, %v6002
      %v6098 = vpack.c.b16 %v6005, %v6004
      %v6099 = vpack.c.b16 %v6007, %v6006
      %v6100 = vpack.c.b16 %v6009, %v6008
      %v6101 = vpack.c.b16 %v6011, %v6010
      %v6102 = vpack.c.b16 %v6013, %v6012
      %v6103 = vpack.c.b16 %v6015, %v6014
      %v6104 = vpack.c.b16 %v6017, %v6016
      %v6105 = vpack.c.b16 %v6019, %v6018
      %v6106 = vpack.c.b16 %v6021, %v6020
      %v6107 = vpack.c.b16 %v6023, %v6022
      %v6108 = vpack.c.b16 %v6025, %v6024
      %v6109 = vpack.c.b16 %v6027, %v6026
      %v6110 = vpack.c.b16 %v6029, %v6028
      %v6111 = vpack.c.b16 %v6031, %v6030
      %v6112 = vpack.c.b16 %v6033, %v6032
      %v6113 = vpack.c.b16 %v6035, %v6034
      %v6114 = vpack.c.b16 %v6037, %v6036
      %v6115 = vpack.c.b16 %v6039, %v6038
      %v6116 = vpack.c.b16 %v6041, %v6040
      %v6117 = vpack.c.b16 %v6043, %v6042
      %v6118 = vpack.c.b16 %v6045, %v6044
      %v6119 = vpack.c.b16 %v6047, %v6046
      %6192 = vmatpush.bf16.msra.mxu0 %v6055
      %6193 = vmatpush.bf16.msra.mxu0 %v6054
      %6194 = vmatpush.bf16.msra.mxu0 %v6053
      %6195 = vmatpush.bf16.msra.mxu0 %v6052
      %6196 = vmatpush.bf16.msra.mxu0 %v6051
      %6197 = vmatpush.bf16.msra.mxu0 %v6050
      %6198 = vmatpush.bf16.msra.mxu0 %v6049
      %6199 = vmatpush.bf16.msra.mxu0 %v6048
      %6200 = vmatmul.bf16.gmra.mxu0 %v5688
      %v6201 = vpop.f32.mrf.mxu0
      %v6202 = vadd.f32 %v2511, %v6201
      %v6203 = vpop.f32.mrf.mxu0
      %v6204 = vadd.f32 %v2511, %v6203
      %6205 = vmatmul.bf16.gmra.mxu0 %v5697
      %v6206 = vpop.f32.mrf.mxu0
      %v6207 = vadd.f32 %v2511, %v6206
      %v6208 = vpop.f32.mrf.mxu0
      %v6209 = vadd.f32 %v2511, %v6208
      %6210 = vmatmul.bf16.gmra.mxu0 %v5706
      %v6211 = vpop.f32.mrf.mxu0
      %v6212 = vadd.f32 %v2511, %v6211
      %v6213 = vpop.f32.mrf.mxu0
      %v6214 = vadd.f32 %v2511, %v6213
      %6215 = vmatmul.bf16.gmra.mxu0 %v5715
      %v6216 = vpop.f32.mrf.mxu0
      %v6217 = vadd.f32 %v2511, %v6216
      %v6218 = vpop.f32.mrf.mxu0
      %v6219 = vadd.f32 %v2511, %v6218
      %6220 = vdwg.mxu0
      %6221 = vmatpush.bf16.msra.mxu0 %v6063
      %6222 = vmatpush.bf16.msra.mxu0 %v6062
      %6223 = vmatpush.bf16.msra.mxu0 %v6061
      %6224 = vmatpush.bf16.msra.mxu0 %v6060
      %6225 = vmatpush.bf16.msra.mxu0 %v6059
      %6226 = vmatpush.bf16.msra.mxu0 %v6058
      %6227 = vmatpush.bf16.msra.mxu0 %v6057
      %6228 = vmatpush.bf16.msra.mxu0 %v6056
      %6229 = vmatmul.bf16.gmra.mxu0 %v5689
      %v6230 = vpop.f32.mrf.mxu0
      %v6231 = vadd.f32 %v6202, %v6230
      %v6232 = vpop.f32.mrf.mxu0
      %v6233 = vadd.f32 %v6204, %v6232
      %6234 = vmatmul.bf16.gmra.mxu0 %v5698
      %v6235 = vpop.f32.mrf.mxu0
      %v6236 = vadd.f32 %v6207, %v6235
      %v6237 = vpop.f32.mrf.mxu0
      %v6238 = vadd.f32 %v6209, %v6237
      %6239 = vmatmul.bf16.gmra.mxu0 %v5707
      %v6240 = vpop.f32.mrf.mxu0
      %v6241 = vadd.f32 %v6212, %v6240
      %v6242 = vpop.f32.mrf.mxu0
      %v6243 = vadd.f32 %v6214, %v6242
      %6244 = vmatmul.bf16.gmra.mxu0 %v5716
      %v6245 = vpop.f32.mrf.mxu0
      %v6246 = vadd.f32 %v6217, %v6245
      %v6247 = vpop.f32.mrf.mxu0
      %v6248 = vadd.f32 %v6219, %v6247
      %6249 = vdwg.mxu0
      %6250 = vmatpush.bf16.msra.mxu0 %v6071
      %6251 = vmatpush.bf16.msra.mxu0 %v6070
      %6252 = vmatpush.bf16.msra.mxu0 %v6069
      %6253 = vmatpush.bf16.msra.mxu0 %v6068
      %6254 = vmatpush.bf16.msra.mxu0 %v6067
      %6255 = vmatpush.bf16.msra.mxu0 %v6066
      %6256 = vmatpush.bf16.msra.mxu0 %v6065
      %6257 = vmatpush.bf16.msra.mxu0 %v6064
      %6258 = vmatmul.bf16.gmra.mxu0 %v5690
      %v6259 = vpop.f32.mrf.mxu0
      %v6260 = vadd.f32 %v6231, %v6259
      %v6261 = vpop.f32.mrf.mxu0
      %v6262 = vadd.f32 %v6233, %v6261
      %6263 = vmatmul.bf16.gmra.mxu0 %v5699
      %v6264 = vpop.f32.mrf.mxu0
      %v6265 = vadd.f32 %v6236, %v6264
      %v6266 = vpop.f32.mrf.mxu0
      %v6267 = vadd.f32 %v6238, %v6266
      %6268 = vmatmul.bf16.gmra.mxu0 %v5708
      %v6269 = vpop.f32.mrf.mxu0
      %v6270 = vadd.f32 %v6241, %v6269
      %v6271 = vpop.f32.mrf.mxu0
      %v6272 = vadd.f32 %v6243, %v6271
      %6273 = vmatmul.bf16.gmra.mxu0 %v5717
      %v6274 = vpop.f32.mrf.mxu0
      %v6275 = vadd.f32 %v6246, %v6274
      %v6276 = vpop.f32.mrf.mxu0
      %v6277 = vadd.f32 %v6248, %v6276
      %6278 = vdwg.mxu0
      %6279 = vmatpush.bf16.msra.mxu0 %v6079
      %6280 = vmatpush.bf16.msra.mxu0 %v6078
      %6281 = vmatpush.bf16.msra.mxu0 %v6077
      %6282 = vmatpush.bf16.msra.mxu0 %v6076
      %6283 = vmatpush.bf16.msra.mxu0 %v6075
      %6284 = vmatpush.bf16.msra.mxu0 %v6074
      %6285 = vmatpush.bf16.msra.mxu0 %v6073
      %6286 = vmatpush.bf16.msra.mxu0 %v6072
      %6287 = vmatmul.bf16.gmra.mxu0 %v5691
      %v6288 = vpop.f32.mrf.mxu0
      %v6289 = vadd.f32 %v6260, %v6288
      %v6290 = vpop.f32.mrf.mxu0
      %v6291 = vadd.f32 %v6262, %v6290
      %6292 = vmatmul.bf16.gmra.mxu0 %v5700
      %v6293 = vpop.f32.mrf.mxu0
      %v6294 = vadd.f32 %v6265, %v6293
      %v6295 = vpop.f32.mrf.mxu0
      %v6296 = vadd.f32 %v6267, %v6295
      %6297 = vmatmul.bf16.gmra.mxu0 %v5709
      %v6298 = vpop.f32.mrf.mxu0
      %v6299 = vadd.f32 %v6270, %v6298
      %v6300 = vpop.f32.mrf.mxu0
      %v6301 = vadd.f32 %v6272, %v6300
      %6302 = vmatmul.bf16.gmra.mxu0 %v5718
      %v6303 = vpop.f32.mrf.mxu0
      %v6304 = vadd.f32 %v6275, %v6303
      %v6305 = vpop.f32.mrf.mxu0
      %v6306 = vadd.f32 %v6277, %v6305
      %6307 = vdwg.mxu0
      %6308 = vmatpush.bf16.msra.mxu0 %v6087
      %6309 = vmatpush.bf16.msra.mxu0 %v6086
      %6310 = vmatpush.bf16.msra.mxu0 %v6085
      %6311 = vmatpush.bf16.msra.mxu0 %v6084
      %6312 = vmatpush.bf16.msra.mxu0 %v6083
      %6313 = vmatpush.bf16.msra.mxu0 %v6082
      %6314 = vmatpush.bf16.msra.mxu0 %v6081
      %6315 = vmatpush.bf16.msra.mxu0 %v6080
      %6316 = vmatmul.bf16.gmra.mxu0 %v5692
      %v6317 = vpop.f32.mrf.mxu0
      %v6318 = vadd.f32 %v6289, %v6317
      %v6319 = vpop.f32.mrf.mxu0
      %v6320 = vadd.f32 %v6291, %v6319
      %6321 = vmatmul.bf16.gmra.mxu0 %v5701
      %v6322 = vpop.f32.mrf.mxu0
      %v6323 = vadd.f32 %v6294, %v6322
      %v6324 = vpop.f32.mrf.mxu0
      %v6325 = vadd.f32 %v6296, %v6324
      %6326 = vmatmul.bf16.gmra.mxu0 %v5710
      %v6327 = vpop.f32.mrf.mxu0
      %v6328 = vadd.f32 %v6299, %v6327
      %v6329 = vpop.f32.mrf.mxu0
      %v6330 = vadd.f32 %v6301, %v6329
      %6331 = vmatmul.bf16.gmra.mxu0 %v5719
      %v6332 = vpop.f32.mrf.mxu0
      %v6333 = vadd.f32 %v6304, %v6332
      %v6334 = vpop.f32.mrf.mxu0
      %v6335 = vadd.f32 %v6306, %v6334
      %6336 = vdwg.mxu0
      %6337 = vmatpush.bf16.msra.mxu0 %v6095
      %6338 = vmatpush.bf16.msra.mxu0 %v6094
      %6339 = vmatpush.bf16.msra.mxu0 %v6093
      %6340 = vmatpush.bf16.msra.mxu0 %v6092
      %6341 = vmatpush.bf16.msra.mxu0 %v6091
      %6342 = vmatpush.bf16.msra.mxu0 %v6090
      %6343 = vmatpush.bf16.msra.mxu0 %v6089
      %6344 = vmatpush.bf16.msra.mxu0 %v6088
      %6345 = vmatmul.bf16.gmra.mxu0 %v5693
      %v6346 = vpop.f32.mrf.mxu0
      %v6347 = vadd.f32 %v6318, %v6346
      %v6348 = vpop.f32.mrf.mxu0
      %v6349 = vadd.f32 %v6320, %v6348
      %6350 = vmatmul.bf16.gmra.mxu0 %v5702
      %v6351 = vpop.f32.mrf.mxu0
      %v6352 = vadd.f32 %v6323, %v6351
      %v6353 = vpop.f32.mrf.mxu0
      %v6354 = vadd.f32 %v6325, %v6353
      %6355 = vmatmul.bf16.gmra.mxu0 %v5711
      %v6356 = vpop.f32.mrf.mxu0
      %v6357 = vadd.f32 %v6328, %v6356
      %v6358 = vpop.f32.mrf.mxu0
      %v6359 = vadd.f32 %v6330, %v6358
      %6360 = vmatmul.bf16.gmra.mxu0 %v5720
      %v6361 = vpop.f32.mrf.mxu0
      %v6362 = vadd.f32 %v6333, %v6361
      %v6363 = vpop.f32.mrf.mxu0
      %v6364 = vadd.f32 %v6335, %v6363
      %6365 = vdwg.mxu0
      %6366 = vmatpush.bf16.msra.mxu0 %v6103
      %6367 = vmatpush.bf16.msra.mxu0 %v6102
      %6368 = vmatpush.bf16.msra.mxu0 %v6101
      %6369 = vmatpush.bf16.msra.mxu0 %v6100
      %6370 = vmatpush.bf16.msra.mxu0 %v6099
      %6371 = vmatpush.bf16.msra.mxu0 %v6098
      %6372 = vmatpush.bf16.msra.mxu0 %v6097
      %6373 = vmatpush.bf16.msra.mxu0 %v6096
      %6374 = vmatmul.bf16.gmra.mxu0 %v5694
      %v6375 = vpop.f32.mrf.mxu0
      %v6376 = vadd.f32 %v6347, %v6375
      %v6377 = vpop.f32.mrf.mxu0
      %v6378 = vadd.f32 %v6349, %v6377
      %6379 = vmatmul.bf16.gmra.mxu0 %v5703
      %v6380 = vpop.f32.mrf.mxu0
      %v6381 = vadd.f32 %v6352, %v6380
      %v6382 = vpop.f32.mrf.mxu0
      %v6383 = vadd.f32 %v6354, %v6382
      %6384 = vmatmul.bf16.gmra.mxu0 %v5712
      %v6385 = vpop.f32.mrf.mxu0
      %v6386 = vadd.f32 %v6357, %v6385
      %v6387 = vpop.f32.mrf.mxu0
      %v6388 = vadd.f32 %v6359, %v6387
      %6389 = vmatmul.bf16.gmra.mxu0 %v5721
      %v6390 = vpop.f32.mrf.mxu0
      %v6391 = vadd.f32 %v6362, %v6390
      %v6392 = vpop.f32.mrf.mxu0
      %v6393 = vadd.f32 %v6364, %v6392
      %6394 = vdwg.mxu0
      %6395 = vmatpush.bf16.msra.mxu0 %v6111
      %6396 = vmatpush.bf16.msra.mxu0 %v6110
      %6397 = vmatpush.bf16.msra.mxu0 %v6109
      %6398 = vmatpush.bf16.msra.mxu0 %v6108
      %6399 = vmatpush.bf16.msra.mxu0 %v6107
      %6400 = vmatpush.bf16.msra.mxu0 %v6106
      %6401 = vmatpush.bf16.msra.mxu0 %v6105
      %6402 = vmatpush.bf16.msra.mxu0 %v6104
      %6403 = vmatmul.bf16.gmra.mxu0 %v5695
      %v6404 = vpop.f32.mrf.mxu0
      %v6405 = vadd.f32 %v6376, %v6404
      %v6406 = vpop.f32.mrf.mxu0
      %v6407 = vadd.f32 %v6378, %v6406
      %6408 = vmatmul.bf16.gmra.mxu0 %v5704
      %v6409 = vpop.f32.mrf.mxu0
      %v6410 = vadd.f32 %v6381, %v6409
      %v6411 = vpop.f32.mrf.mxu0
      %v6412 = vadd.f32 %v6383, %v6411
      %6413 = vmatmul.bf16.gmra.mxu0 %v5713
      %v6414 = vpop.f32.mrf.mxu0
      %v6415 = vadd.f32 %v6386, %v6414
      %v6416 = vpop.f32.mrf.mxu0
      %v6417 = vadd.f32 %v6388, %v6416
      %6418 = vmatmul.bf16.gmra.mxu0 %v5722
      %v6419 = vpop.f32.mrf.mxu0
      %v6420 = vadd.f32 %v6391, %v6419
      %v6421 = vpop.f32.mrf.mxu0
      %v6422 = vadd.f32 %v6393, %v6421
      %6423 = vdwg.mxu0
      %6424 = vmatpush.bf16.msra.mxu0 %v6119
      %6425 = vmatpush.bf16.msra.mxu0 %v6118
      %6426 = vmatpush.bf16.msra.mxu0 %v6117
      %6427 = vmatpush.bf16.msra.mxu0 %v6116
      %6428 = vmatpush.bf16.msra.mxu0 %v6115
      %6429 = vmatpush.bf16.msra.mxu0 %v6114
      %6430 = vmatpush.bf16.msra.mxu0 %v6113
      %6431 = vmatpush.bf16.msra.mxu0 %v6112
      %6432 = vmatmul.bf16.gmra.mxu0 %v5696
      %v6433 = vpop.f32.mrf.mxu0
      %v6434 = vadd.f32 %v6405, %v6433
      %v6435 = vpop.f32.mrf.mxu0
      %v6436 = vadd.f32 %v6407, %v6435
      %6437 = vmatmul.bf16.gmra.mxu0 %v5705
      %v6438 = vpop.f32.mrf.mxu0
      %v6439 = vadd.f32 %v6410, %v6438
      %v6440 = vpop.f32.mrf.mxu0
      %v6441 = vadd.f32 %v6412, %v6440
      %6442 = vmatmul.bf16.gmra.mxu0 %v5714
      %v6443 = vpop.f32.mrf.mxu0
      %v6444 = vadd.f32 %v6415, %v6443
      %v6445 = vpop.f32.mrf.mxu0
      %v6446 = vadd.f32 %v6417, %v6445
      %6447 = vmatmul.bf16.gmra.mxu0 %v5723
      %v6448 = vpop.f32.mrf.mxu0
      %v6449 = vadd.f32 %v6420, %v6448
      %v6450 = vpop.f32.mrf.mxu0
      %v6451 = vadd.f32 %v6422, %v6450
      %6452 = vdwg.mxu0
      %v6453 = vpack.c.bf16 %v6434, %v6434
      %v6454 = vpack.c.bf16 %v6436, %v6436
      %v6455 = vpack.c.bf16 %v6439, %v6439
      %v6456 = vpack.c.bf16 %v6441, %v6441
      %v6457 = vpack.c.bf16 %v6444, %v6444
      %v6458 = vpack.c.bf16 %v6446, %v6446
      %v6459 = vpack.c.bf16 %v6449, %v6449
      %v6460 = vpack.c.bf16 %v6451, %v6451
      %s6461 = scalar_lea.vmem %s328, 32
      %6462 = vst [vmem:[%s6461] sm:$0xf] %v6453
      %6463 = vst [vmem:[%s6461 + $0x4] sm:$0xf] %v6454
      %6464 = vst [vmem:[%s6461 + $0x8] sm:$0xf] %v6455
      %6465 = vst [vmem:[%s6461 + $0xc] sm:$0xf] %v6456
      %6466 = vst [vmem:[%s6461 + $0x10] sm:$0xf] %v6457
      %6467 = vst [vmem:[%s6461 + $0x14] sm:$0xf] %v6458
      %6468 = vst [vmem:[%s6461 + $0x18] sm:$0xf] %v6459
      %6469 = vst [vmem:[%s6461 + $0x1c] sm:$0xf] %v6460
      %s6470 = smul.u32 2, %s20
      %p6471 = scmp.lt.s32.totalorder %s19, 1
      %s6472 = scalar_select %p6471, %s19, 1
      %p6473 = scmp.lt.s32.totalorder %s6470, 7
      %s6474 = scalar_select %p6473, %s6470, 7
      %s6475 = smul.addr %s6474, 8
      %s6476 = smul.addr %s6472, 64
      %s6477 = sadd.s32 %s6475, %s6476
      %s6478 = smul.addr %s6477, 4
      %s6479 = scalar_lea.vmem %s4, %s6478
      // Predicated region
      $region37: #{td_forward_ncdhw.1} parent=35 // pred_check
        %p6480 = pneg %p149
      $region38: #{td_forward_ncdhw.1} parent=35 // pred_check_branch
        %6482 = sbr.rel (%p6480) target = $region40
      $region39: #{td_forward_ncdhw.1} parent=35 // pred_region
        %s6483 = smul.u32 2, %s20
      $region40: #{td_forward_ncdhw.1} parent=35 // pred_fallthru
        _
    $region36: #{td_forward_ncdhw.1} parent=5 // pred_fallthru
      _
    %p6484 = scmp.le.s32.totalorder 2, %s10
    // Predicated region
    $region41: #{td_forward_ncdhw.1} parent=5 // pred_check
      %p6485 = pneg %p6484
    $region42: #{td_forward_ncdhw.1} parent=5 // pred_check_branch
      %6487 = sbr.rel (%p6485) target = $region44
    $region43: #{td_forward_ncdhw.1} parent=5 // pred_region
      %s6488 = ssub.s32 %s10, 2
      // Predicated region
      $region45: #{td_forward_ncdhw.1} parent=43 // pred_check
        %p6489 = pneg %p155
      $region46: #{td_forward_ncdhw.1} parent=43 // pred_check_branch
        %6491 = sbr.rel (%p6489) target = $region48
      $region47: #{td_forward_ncdhw.1} parent=43 // pred_region
        %s6492 = smul.u32 2, %s22
        %p6493 = scmp.lt.s32.totalorder %s21, 1
        %s6494 = scalar_select %p6493, %s21, 1
        %p6495 = scmp.lt.s32.totalorder %s6492, 7
        %s6496 = scalar_select %p6495, %s6492, 7
        %s6497 = smul.addr %s6496, 8
        %s6498 = smul.addr %s6494, 64
        %s6499 = sadd.s32 %s6497, %s6498
        %s6500 = smul.addr %s6499, 4
        %s6501 = scalar_lea.vmem %s4, %s6500
      $region48: #{td_forward_ncdhw.1} parent=43 // pred_fallthru
        _
    $region44: #{td_forward_ncdhw.1} parent=5 // pred_fallthru
      _
  $region6: #{td_forward_ncdhw.1} parent=0 // loop_footer
    %s14 = sadd.s32 1, %s10
  $region7: #{td_forward_ncdhw.1} parent=0 // loop_footer_branch
    %9 = sbr.rel target = $region3
  $region8: #{td_forward_ncdhw.1} parent=0 // loop_exit
    _

</llo_original>
